<compile_context>
chip_gen: v6e
topology: v6e:2x2x1
jax: 0.10.0
libtpu: 0.0.40
codegen_flags: <defaults>
</compile_context>

<pallas_src>
import math

import jax
import jax.numpy as jnp
from jax.experimental import pallas as pl
from jax.experimental.pallas import tpu as pltpu


# MXU operand dtype: bf16 is native on v5e/v6e/v7x MXUs (f32 operands cost
# multiple passes).  Accumulation is always f32.  Flip to jnp.float32 for a
# strict (1e-3) parity check against the XLA reference.
MXU_DTYPE = jnp.bfloat16
_PARITY_TOL = 1e-3 if MXU_DTYPE == jnp.float32 else 3e-2


# --------------------------------------------------------------------------
# In-kernel building blocks
# --------------------------------------------------------------------------
def _zero_halo(slab_ref):
    """Zero only the 1-pixel halo ring of a padded (H+2, W+2, C) VMEM slab.

    The interior is fully overwritten every image, so zeroing just the ring
    (a few tiny stores) replaces the old full-slab fill.  Re-zeroing it every
    grid step keeps iterations independent (no cross-step invariant), which
    is required for the batch axis to be safely core-sharded."""
    Hp, Wp, C = slab_ref.shape
    zrow = jnp.zeros((1, Wp, C), slab_ref.dtype)
    zcol = jnp.zeros((Hp, 1, C), slab_ref.dtype)
    slab_ref[pl.ds(0, 1), :, :] = zrow
    slab_ref[pl.ds(Hp - 1, 1), :, :] = zrow
    slab_ref[:, pl.ds(0, 1), :] = zcol
    slab_ref[:, pl.ds(Wp - 1, 1), :] = zcol


def _conv3x3_relu(slab_ref, wm_ref, b_ref, H, W):
    """3x3 'SAME' conv + ReLU as ONE im2col MXU matmul (K = 9*Cin).

    slab_ref: (H+2, W+2, Cin) zero-halo padded activation slab (VMEM, f32)
    wm_ref:   (9*Cin, Cout)   weights, row order (dy, dx, cin), MXU_DTYPE
    b_ref:    (1, Cout)       f32 bias
    Returns the (H*W, Cout) f32 post-ReLU activation.
    """
    Cin = slab_ref.shape[-1]
    taps = []
    for dy in range(3):
        for dx in range(3):
            t = slab_ref[pl.ds(dy, H), pl.ds(dx, W), :]          # (H, W, Cin)
            taps.append(t.reshape(H * W, Cin).astype(MXU_DTYPE))
    # TODO(synk): replace the per-tap slice+reshape copies with pltpu.roll
    # shifts on a lane-fused (W*C) layout (XLU work, overlaps the MXU).
    patches = jnp.concatenate(taps, axis=-1)                     # (H*W, 9*Cin)
    y = jnp.dot(patches, wm_ref[...], preferred_element_type=jnp.float32)
    return jnp.maximum(y + b_ref[...], 0.0)                      # (H*W, Cout)


def _maxpool2x2_into(y, H, W, dst_ref):
    """2x2 / stride-2 max pool of the (H*W, C) conv output; the pooled
    (H/2, W/2, C) result is written into the interior of the next stage's
    padded slab (halo stays zero)."""
    C = y.shape[-1]
    y = y.reshape(H // 2, 2, W, C)
    y = jnp.maximum(y[:, 0], y[:, 1])                 # pool rows (leading dim)
    y = y.reshape(H // 2, W // 2, 2, C)
    y = jnp.maximum(y[:, :, 0, :], y[:, :, 1, :])     # pool columns
    dst_ref[pl.ds(1, H // 2), pl.ds(1, W // 2), :] = y.astype(dst_ref.dtype)


# --------------------------------------------------------------------------
# Fused whole-network kernel (one image per grid step)
# --------------------------------------------------------------------------
def street_aid_fused_kernel(x_ref,
                            w1_ref, b1_ref, w2_ref, b2_ref,
                            w3_ref, b3_ref, w4_ref, b4_ref,
                            feat_ref,
                            slab1, slab2, slab3, slab4):
    H1, W1, _ = x_ref.shape
    H2, W2 = H1 // 2, W1 // 2
    H3, W3 = H2 // 2, W2 // 2
    H4, W4 = H3 // 2, W3 // 2

    # Re-zero only the halo rings (interiors are fully overwritten below).
    _zero_halo(slab1)
    _zero_halo(slab2)
    _zero_halo(slab3)
    _zero_halo(slab4)

    # Stage 0: drop the unpadded image into slab1's interior (this replaces
    # the wrapper-side jnp.pad HBM round trip of the input).
    slab1[pl.ds(1, H1), pl.ds(1, W1), :] = x_ref[...].astype(slab1.dtype)

    # conv1 (3 -> 16) + ReLU + maxpool
    y = _conv3x3_relu(slab1, w1_ref, b1_ref, H1, W1)
    _maxpool2x2_into(y, H1, W1, slab2)

    # conv2 (16 -> 32) + ReLU + maxpool
    y = _conv3x3_relu(slab2, w2_ref, b2_ref, H2, W2)
    _maxpool2x2_into(y, H2, W2, slab3)

    # conv3 (32 -> 64) + ReLU + maxpool
    y = _conv3x3_relu(slab3, w3_ref, b3_ref, H3, W3)
    _maxpool2x2_into(y, H3, W3, slab4)

    # conv4 (64 -> 128) + ReLU, then AdaptiveAvgPool2d(1).
    y = _conv3x3_relu(slab4, w4_ref, b4_ref, H4, W4)           # (H4*W4, 128)
    feat_ref[...] = (jnp.sum(y, axis=0, keepdims=True)
                     * (1.0 / float(H4 * W4))).astype(feat_ref.dtype)


# --------------------------------------------------------------------------
# Wrapper: layout prep + single pallas_call + tiny batched heads in XLA
# --------------------------------------------------------------------------
def street_aid_cnn_forward(x_nchw, params):
    """x_nchw: (N, 3, H, W) float, H and W divisible by 8.

    Returns (class_out (N, num_classes), coord_out (N, 4))."""
    # NCHW -> NHWC so channels sit on the lane axis (no HBM-side padding).
    # TODO(synk): for >=224x224 inputs, feed a lane-fused (N, H, W*3) view and
    # row-tile with a 1-row halo to keep whole-image VMEM blocks within v7x's
    # 64 MiB; at the small resolutions this module targets, whole-image
    # blocks are the right choice.
    x = jnp.transpose(x_nchw, (0, 2, 3, 1)).astype(jnp.float32)
    N, H, W, Cin = x.shape
    assert Cin == 3 and H % 8 == 0 and W % 8 == 0

    # im2col weight matrices, rows ordered (dy, dx, cin); bf16 MXU operands.
    w1 = params["w1"].reshape(27, 16).astype(MXU_DTYPE)
    w2 = params["w2"].reshape(144, 32).astype(MXU_DTYPE)
    w3 = params["w3"].reshape(288, 64).astype(MXU_DTYPE)
    w4 = params["w4"].reshape(576, 128).astype(MXU_DTYPE)
    b1 = params["b1"].reshape(1, 16).astype(jnp.float32)
    b2 = params["b2"].reshape(1, 32).astype(jnp.float32)
    b3 = params["b3"].reshape(1, 64).astype(jnp.float32)
    b4 = params["b4"].reshape(1, 128).astype(jnp.float32)

    H2, W2 = H // 2, W // 2
    H3, W3 = H // 4, W // 4
    H4, W4 = H // 8, W // 8

    def full_spec(a):
        nd = a.ndim
        return pl.BlockSpec(a.shape, lambda n, _nd=nd: (0,) * _nd)

    feat = pl.pallas_call(
        street_aid_fused_kernel,
        grid=(N,),
        in_specs=[
            pl.BlockSpec((None, H, W, 3), lambda n: (n, 0, 0, 0)),
            full_spec(w1), full_spec(b1),
            full_spec(w2), full_spec(b2),
            full_spec(w3), full_spec(b3),
            full_spec(w4), full_spec(b4),
        ],
        out_specs=pl.BlockSpec((None, 1, 128), lambda n: (n, 0, 0)),
        out_shape=jax.ShapeDtypeStruct((N, 1, 128), jnp.float32),
        scratch_shapes=[
            pltpu.VMEM((H + 2, W + 2, 3), jnp.float32),       # padded stage-1 input
            pltpu.VMEM((H2 + 2, W2 + 2, 16), jnp.float32),    # padded stage-2 input
            pltpu.VMEM((H3 + 2, W3 + 2, 32), jnp.float32),    # padded stage-3 input
            pltpu.VMEM((H4 + 2, W4 + 2, 64), jnp.float32),    # padded stage-4 input
        ],
        compiler_params=pltpu.CompilerParams(
            dimension_semantics=("parallel",),       # batch axis -> both TCs
            vmem_limit_bytes=64 * 1024 * 1024,       # v5e default is only 16 MiB
        ),
    )(x, w1, b1, w2, b2, w3, b3, w4, b4)

    feat = feat[:, 0, :]                                        # (N, 128) f32
    # Tiny heads: one batched matmul each in XLA beats per-image M=1 matmuls
    # and keeps the kernel's only output lane-dense (128 wide).
    class_out = feat @ params["wc"] + params["bc"]
    coord_out = feat @ params["wr"] + params["br"]
    return class_out, coord_out


# --------------------------------------------------------------------------
# Pure-JAX reference (mirrors PyTorch semantics) for a numerical check
# --------------------------------------------------------------------------
def reference_forward(x_nchw, p):
    x = jnp.transpose(x_nchw, (0, 2, 3, 1)).astype(jnp.float32)

    def conv(x, w, b):
        y = jax.lax.conv_general_dilated(
            x, w, (1, 1), "SAME",
            dimension_numbers=("NHWC", "HWIO", "NHWC"))
        return jax.nn.relu(y + b)

    def pool(x):
        N, H, W, C = x.shape
        return jnp.max(x.reshape(N, H // 2, 2, W // 2, 2, C), axis=(2, 4))

    x = pool(conv(x, p["w1"], p["b1"]))
    x = pool(conv(x, p["w2"], p["b2"]))
    x = pool(conv(x, p["w3"], p["b3"]))
    x = conv(x, p["w4"], p["b4"])
    feat = jnp.mean(x, axis=(1, 2))
    return feat @ p["wc"] + p["bc"], feat @ p["wr"] + p["br"]


# --------------------------------------------------------------------------
# Deterministic parameter init (PyTorch-style uniform, shapes from __init__)
# --------------------------------------------------------------------------
def init_params(key, num_classes=5):
    p = {}

    def uinit(k, shape, fan_in):
        bound = 1.0 / math.sqrt(fan_in)
        return jax.random.uniform(k, shape, jnp.float32, -bound, bound)

    keys = jax.random.split(key, 12)
    conv_shapes = [(3, 16), (16, 32), (32, 64), (64, 128)]
    for i, (cin, cout) in enumerate(conv_shapes, start=1):
        fan_in = 3 * 3 * cin
        p[f"w{i}"] = uinit(keys[2 * (i - 1)], (3, 3, cin, cout), fan_in)
        p[f"b{i}"] = uinit(keys[2 * (i - 1) + 1], (cout,), fan_in)
    p["wc"] = uinit(keys[8], (128, num_classes), 128)
    p["bc"] = uinit(keys[9], (num_classes,), 128)
    p["wr"] = uinit(keys[10], (128, 4), 128)
    p["br"] = uinit(keys[11], (4,), 128)
    return p


if __name__ == "__main__":
    key = jax.random.PRNGKey(0)
    kx, kp = jax.random.split(key)

    # Small input consistent with the module: NCHW, 3 channels, 16x16 spatial.
    x = jax.random.normal(kx, (2, 3, 16, 16), jnp.float32)
    params = init_params(kp, num_classes=5)

    fwd = jax.jit(street_aid_cnn_forward)
    class_out, coord_out = fwd(x, params)
    jax.block_until_ready((class_out, coord_out))

    assert class_out.shape == (2, 5) and coord_out.shape == (2, 4)

    cls_ref, reg_ref = reference_forward(x, params)
    assert jnp.allclose(class_out, cls_ref, atol=_PARITY_TOL, rtol=_PARITY_TOL)
    assert jnp.allclose(coord_out, reg_ref, atol=_PARITY_TOL, rtol=_PARITY_TOL)

    print("KERNEL_OK")
</pallas_src>

<mosaic_0001>
module attributes {stable_mosaic.version = 11 : i64} {
  func.func @street_aid_fused_kernel(%arg0: i32, %arg1: memref<1x16x16x3xf32, #tpu.memory_space<vmem>>, %arg2: memref<27x16xbf16, #tpu.memory_space<vmem>>, %arg3: memref<1x16xf32, #tpu.memory_space<vmem>>, %arg4: memref<144x32xbf16, #tpu.memory_space<vmem>>, %arg5: memref<1x32xf32, #tpu.memory_space<vmem>>, %arg6: memref<288x64xbf16, #tpu.memory_space<vmem>>, %arg7: memref<1x64xf32, #tpu.memory_space<vmem>>, %arg8: memref<576x128xbf16, #tpu.memory_space<vmem>>, %arg9: memref<1x128xf32, #tpu.memory_space<vmem>>, %arg10: memref<1x1x128xf32, #tpu.memory_space<vmem>>, %arg11: memref<18x18x3xf32, #tpu.memory_space<vmem>>, %arg12: memref<10x10x16xf32, #tpu.memory_space<vmem>>, %arg13: memref<6x6x32xf32, #tpu.memory_space<vmem>>, %arg14: memref<4x4x64xf32, #tpu.memory_space<vmem>>) attributes {dimension_semantics = [#tpu.dimension_semantics<parallel>], iteration_bounds = array<i64: 2>, scalar_prefetch = 0 : i64, scratch_operands = 4 : i64, tpu.core_type = #tpu.core_type<tc>, window_params = [{transform_indices = @transform_0, window_bounds = array<i64: 1, 16, 16, 3>}, {pipeline_mode = #tpu.pipeline_mode<synchronous>, transform_indices = @transform_1, window_bounds = array<i64: 27, 16>}, {pipeline_mode = #tpu.pipeline_mode<synchronous>, transform_indices = @transform_2, window_bounds = array<i64: 1, 16>}, {pipeline_mode = #tpu.pipeline_mode<synchronous>, transform_indices = @transform_3, window_bounds = array<i64: 144, 32>}, {pipeline_mode = #tpu.pipeline_mode<synchronous>, transform_indices = @transform_4, window_bounds = array<i64: 1, 32>}, {pipeline_mode = #tpu.pipeline_mode<synchronous>, transform_indices = @transform_5, window_bounds = array<i64: 288, 64>}, {pipeline_mode = #tpu.pipeline_mode<synchronous>, transform_indices = @transform_6, window_bounds = array<i64: 1, 64>}, {pipeline_mode = #tpu.pipeline_mode<synchronous>, transform_indices = @transform_7, window_bounds = array<i64: 576, 128>}, {pipeline_mode = #tpu.pipeline_mode<synchronous>, transform_indices = @transform_8, window_bounds = array<i64: 1, 128>}, {transform_indices = @transform_9, window_bounds = array<i64: 1, 1, 128>}]} {
    %cst = arith.constant 0.000000e+00 : f32
    %0 = vector.broadcast %cst : f32 to vector<1x18x3xf32>
    %cst_0 = arith.constant 0.000000e+00 : f32
    %1 = vector.broadcast %cst_0 : f32 to vector<18x1x3xf32>
    %c0 = arith.constant 0 : index
    %c0_1 = arith.constant 0 : index
    %c0_2 = arith.constant 0 : index
    %2 = vector.load %arg11[%c0, %c0_1, %c0_2] : memref<18x18x3xf32, #tpu.memory_space<vmem>>, vector<1x18x3xf32>
    tpu.vector_store %arg11[%c0, %c0_1, %c0_2], %0 {strides = array<i32>} : memref<18x18x3xf32, #tpu.memory_space<vmem>>, vector<1x18x3xf32>,
    %c17 = arith.constant 17 : index
    %c0_3 = arith.constant 0 : index
    %c0_4 = arith.constant 0 : index
    %3 = vector.load %arg11[%c17, %c0_3, %c0_4] : memref<18x18x3xf32, #tpu.memory_space<vmem>>, vector<1x18x3xf32>
    tpu.vector_store %arg11[%c17, %c0_3, %c0_4], %0 {strides = array<i32>} : memref<18x18x3xf32, #tpu.memory_space<vmem>>, vector<1x18x3xf32>,
    %c0_5 = arith.constant 0 : index
    %c0_6 = arith.constant 0 : index
    %c0_7 = arith.constant 0 : index
    %4 = vector.load %arg11[%c0_5, %c0_6, %c0_7] : memref<18x18x3xf32, #tpu.memory_space<vmem>>, vector<18x1x3xf32>
    tpu.vector_store %arg11[%c0_5, %c0_6, %c0_7], %1 {strides = array<i32>} : memref<18x18x3xf32, #tpu.memory_space<vmem>>, vector<18x1x3xf32>,
    %c0_8 = arith.constant 0 : index
    %c17_9 = arith.constant 17 : index
    %c0_10 = arith.constant 0 : index
    %5 = vector.load %arg11[%c0_8, %c17_9, %c0_10] : memref<18x18x3xf32, #tpu.memory_space<vmem>>, vector<18x1x3xf32>
    tpu.vector_store %arg11[%c0_8, %c17_9, %c0_10], %1 {strides = array<i32>} : memref<18x18x3xf32, #tpu.memory_space<vmem>>, vector<18x1x3xf32>,
    %cst_11 = arith.constant 0.000000e+00 : f32
    %6 = vector.broadcast %cst_11 : f32 to vector<1x10x16xf32>
    %cst_12 = arith.constant 0.000000e+00 : f32
    %7 = vector.broadcast %cst_12 : f32 to vector<10x1x16xf32>
    %c0_13 = arith.constant 0 : index
    %c0_14 = arith.constant 0 : index
    %c0_15 = arith.constant 0 : index
    %8 = vector.load %arg12[%c0_13, %c0_14, %c0_15] : memref<10x10x16xf32, #tpu.memory_space<vmem>>, vector<1x10x16xf32>
    tpu.vector_store %arg12[%c0_13, %c0_14, %c0_15], %6 {strides = array<i32>} : memref<10x10x16xf32, #tpu.memory_space<vmem>>, vector<1x10x16xf32>,
    %c9 = arith.constant 9 : index
    %c0_16 = arith.constant 0 : index
    %c0_17 = arith.constant 0 : index
    %9 = vector.load %arg12[%c9, %c0_16, %c0_17] : memref<10x10x16xf32, #tpu.memory_space<vmem>>, vector<1x10x16xf32>
    tpu.vector_store %arg12[%c9, %c0_16, %c0_17], %6 {strides = array<i32>} : memref<10x10x16xf32, #tpu.memory_space<vmem>>, vector<1x10x16xf32>,
    %c0_18 = arith.constant 0 : index
    %c0_19 = arith.constant 0 : index
    %c0_20 = arith.constant 0 : index
    %10 = vector.load %arg12[%c0_18, %c0_19, %c0_20] : memref<10x10x16xf32, #tpu.memory_space<vmem>>, vector<10x1x16xf32>
    tpu.vector_store %arg12[%c0_18, %c0_19, %c0_20], %7 {strides = array<i32>} : memref<10x10x16xf32, #tpu.memory_space<vmem>>, vector<10x1x16xf32>,
    %c0_21 = arith.constant 0 : index
    %c9_22 = arith.constant 9 : index
    %c0_23 = arith.constant 0 : index
    %11 = vector.load %arg12[%c0_21, %c9_22, %c0_23] : memref<10x10x16xf32, #tpu.memory_space<vmem>>, vector<10x1x16xf32>
    tpu.vector_store %arg12[%c0_21, %c9_22, %c0_23], %7 {strides = array<i32>} : memref<10x10x16xf32, #tpu.memory_space<vmem>>, vector<10x1x16xf32>,
    %cst_24 = arith.constant 0.000000e+00 : f32
    %12 = vector.broadcast %cst_24 : f32 to vector<1x6x32xf32>
    %cst_25 = arith.constant 0.000000e+00 : f32
    %13 = vector.broadcast %cst_25 : f32 to vector<6x1x32xf32>
    %c0_26 = arith.constant 0 : index
    %c0_27 = arith.constant 0 : index
    %c0_28 = arith.constant 0 : index
    %14 = vector.load %arg13[%c0_26, %c0_27, %c0_28] : memref<6x6x32xf32, #tpu.memory_space<vmem>>, vector<1x6x32xf32>
    tpu.vector_store %arg13[%c0_26, %c0_27, %c0_28], %12 {strides = array<i32>} : memref<6x6x32xf32, #tpu.memory_space<vmem>>, vector<1x6x32xf32>,
    %c5 = arith.constant 5 : index
    %c0_29 = arith.constant 0 : index
    %c0_30 = arith.constant 0 : index
    %15 = vector.load %arg13[%c5, %c0_29, %c0_30] : memref<6x6x32xf32, #tpu.memory_space<vmem>>, vector<1x6x32xf32>
    tpu.vector_store %arg13[%c5, %c0_29, %c0_30], %12 {strides = array<i32>} : memref<6x6x32xf32, #tpu.memory_space<vmem>>, vector<1x6x32xf32>,
    %c0_31 = arith.constant 0 : index
    %c0_32 = arith.constant 0 : index
    %c0_33 = arith.constant 0 : index
    %16 = vector.load %arg13[%c0_31, %c0_32, %c0_33] : memref<6x6x32xf32, #tpu.memory_space<vmem>>, vector<6x1x32xf32>
    tpu.vector_store %arg13[%c0_31, %c0_32, %c0_33], %13 {strides = array<i32>} : memref<6x6x32xf32, #tpu.memory_space<vmem>>, vector<6x1x32xf32>,
    %c0_34 = arith.constant 0 : index
    %c5_35 = arith.constant 5 : index
    %c0_36 = arith.constant 0 : index
    %17 = vector.load %arg13[%c0_34, %c5_35, %c0_36] : memref<6x6x32xf32, #tpu.memory_space<vmem>>, vector<6x1x32xf32>
    tpu.vector_store %arg13[%c0_34, %c5_35, %c0_36], %13 {strides = array<i32>} : memref<6x6x32xf32, #tpu.memory_space<vmem>>, vector<6x1x32xf32>,
    %cst_37 = arith.constant 0.000000e+00 : f32
    %18 = vector.broadcast %cst_37 : f32 to vector<1x4x64xf32>
    %cst_38 = arith.constant 0.000000e+00 : f32
    %19 = vector.broadcast %cst_38 : f32 to vector<4x1x64xf32>
    %c0_39 = arith.constant 0 : index
    %c0_40 = arith.constant 0 : index
    %c0_41 = arith.constant 0 : index
    %20 = vector.load %arg14[%c0_39, %c0_40, %c0_41] : memref<4x4x64xf32, #tpu.memory_space<vmem>>, vector<1x4x64xf32>
    tpu.vector_store %arg14[%c0_39, %c0_40, %c0_41], %18 {strides = array<i32>} : memref<4x4x64xf32, #tpu.memory_space<vmem>>, vector<1x4x64xf32>,
    %c3 = arith.constant 3 : index
    %c0_42 = arith.constant 0 : index
    %c0_43 = arith.constant 0 : index
    %21 = vector.load %arg14[%c3, %c0_42, %c0_43] : memref<4x4x64xf32, #tpu.memory_space<vmem>>, vector<1x4x64xf32>
    tpu.vector_store %arg14[%c3, %c0_42, %c0_43], %18 {strides = array<i32>} : memref<4x4x64xf32, #tpu.memory_space<vmem>>, vector<1x4x64xf32>,
    %c0_44 = arith.constant 0 : index
    %c0_45 = arith.constant 0 : index
    %c0_46 = arith.constant 0 : index
    %22 = vector.load %arg14[%c0_44, %c0_45, %c0_46] : memref<4x4x64xf32, #tpu.memory_space<vmem>>, vector<4x1x64xf32>
    tpu.vector_store %arg14[%c0_44, %c0_45, %c0_46], %19 {strides = array<i32>} : memref<4x4x64xf32, #tpu.memory_space<vmem>>, vector<4x1x64xf32>,
    %c0_47 = arith.constant 0 : index
    %c3_48 = arith.constant 3 : index
    %c0_49 = arith.constant 0 : index
    %23 = vector.load %arg14[%c0_47, %c3_48, %c0_49] : memref<4x4x64xf32, #tpu.memory_space<vmem>>, vector<4x1x64xf32>
    tpu.vector_store %arg14[%c0_47, %c3_48, %c0_49], %19 {strides = array<i32>} : memref<4x4x64xf32, #tpu.memory_space<vmem>>, vector<4x1x64xf32>,
    %c0_50 = arith.constant 0 : index
    %c0_51 = arith.constant 0 : index
    %c0_52 = arith.constant 0 : index
    %c0_53 = arith.constant 0 : index
    %24 = vector.load %arg1[%c0_50, %c0_51, %c0_52, %c0_53] : memref<1x16x16x3xf32, #tpu.memory_space<vmem>>, vector<1x16x16x3xf32>
    %25 = vector.shape_cast %24 : vector<1x16x16x3xf32> to vector<16x16x3xf32>
    %c1 = arith.constant 1 : index
    %c1_54 = arith.constant 1 : index
    %c0_55 = arith.constant 0 : index
    %26 = vector.load %arg11[%c1, %c1_54, %c0_55] : memref<18x18x3xf32, #tpu.memory_space<vmem>>, vector<16x16x3xf32>
    tpu.vector_store %arg11[%c1, %c1_54, %c0_55], %25 {strides = array<i32>} : memref<18x18x3xf32, #tpu.memory_space<vmem>>, vector<16x16x3xf32>,
    %c0_56 = arith.constant 0 : index
    %c0_57 = arith.constant 0 : index
    %c0_58 = arith.constant 0 : index
    %27 = vector.load %arg11[%c0_56, %c0_57, %c0_58] : memref<18x18x3xf32, #tpu.memory_space<vmem>>, vector<16x16x3xf32>
    %28 = vector.shape_cast %27 : vector<16x16x3xf32> to vector<256x3xf32>
    %29 = arith.truncf %28 : vector<256x3xf32> to vector<256x3xbf16>
    %c0_59 = arith.constant 0 : index
    %c1_60 = arith.constant 1 : index
    %c0_61 = arith.constant 0 : index
    %30 = vector.load %arg11[%c0_59, %c1_60, %c0_61] : memref<18x18x3xf32, #tpu.memory_space<vmem>>, vector<16x16x3xf32>
    %31 = vector.shape_cast %30 : vector<16x16x3xf32> to vector<256x3xf32>
    %32 = arith.truncf %31 : vector<256x3xf32> to vector<256x3xbf16>
    %c0_62 = arith.constant 0 : index
    %c2 = arith.constant 2 : index
    %c0_63 = arith.constant 0 : index
    %33 = vector.load %arg11[%c0_62, %c2, %c0_63] : memref<18x18x3xf32, #tpu.memory_space<vmem>>, vector<16x16x3xf32>
    %34 = vector.shape_cast %33 : vector<16x16x3xf32> to vector<256x3xf32>
    %35 = arith.truncf %34 : vector<256x3xf32> to vector<256x3xbf16>
    %c1_64 = arith.constant 1 : index
    %c0_65 = arith.constant 0 : index
    %c0_66 = arith.constant 0 : index
    %36 = vector.load %arg11[%c1_64, %c0_65, %c0_66] : memref<18x18x3xf32, #tpu.memory_space<vmem>>, vector<16x16x3xf32>
    %37 = vector.shape_cast %36 : vector<16x16x3xf32> to vector<256x3xf32>
    %38 = arith.truncf %37 : vector<256x3xf32> to vector<256x3xbf16>
    %c1_67 = arith.constant 1 : index
    %c1_68 = arith.constant 1 : index
    %c0_69 = arith.constant 0 : index
    %39 = vector.load %arg11[%c1_67, %c1_68, %c0_69] : memref<18x18x3xf32, #tpu.memory_space<vmem>>, vector<16x16x3xf32>
    %40 = vector.shape_cast %39 : vector<16x16x3xf32> to vector<256x3xf32>
    %41 = arith.truncf %40 : vector<256x3xf32> to vector<256x3xbf16>
    %c1_70 = arith.constant 1 : index
    %c2_71 = arith.constant 2 : index
    %c0_72 = arith.constant 0 : index
    %42 = vector.load %arg11[%c1_70, %c2_71, %c0_72] : memref<18x18x3xf32, #tpu.memory_space<vmem>>, vector<16x16x3xf32>
    %43 = vector.shape_cast %42 : vector<16x16x3xf32> to vector<256x3xf32>
    %44 = arith.truncf %43 : vector<256x3xf32> to vector<256x3xbf16>
    %c2_73 = arith.constant 2 : index
    %c0_74 = arith.constant 0 : index
    %c0_75 = arith.constant 0 : index
    %45 = vector.load %arg11[%c2_73, %c0_74, %c0_75] : memref<18x18x3xf32, #tpu.memory_space<vmem>>, vector<16x16x3xf32>
    %46 = vector.shape_cast %45 : vector<16x16x3xf32> to vector<256x3xf32>
    %47 = arith.truncf %46 : vector<256x3xf32> to vector<256x3xbf16>
    %c2_76 = arith.constant 2 : index
    %c1_77 = arith.constant 1 : index
    %c0_78 = arith.constant 0 : index
    %48 = vector.load %arg11[%c2_76, %c1_77, %c0_78] : memref<18x18x3xf32, #tpu.memory_space<vmem>>, vector<16x16x3xf32>
    %49 = vector.shape_cast %48 : vector<16x16x3xf32> to vector<256x3xf32>
    %50 = arith.truncf %49 : vector<256x3xf32> to vector<256x3xbf16>
    %c2_79 = arith.constant 2 : index
    %c2_80 = arith.constant 2 : index
    %c0_81 = arith.constant 0 : index
    %51 = vector.load %arg11[%c2_79, %c2_80, %c0_81] : memref<18x18x3xf32, #tpu.memory_space<vmem>>, vector<16x16x3xf32>
    %52 = vector.shape_cast %51 : vector<16x16x3xf32> to vector<256x3xf32>
    %53 = arith.truncf %52 : vector<256x3xf32> to vector<256x3xbf16>
    %54 = tpu.concatenate %29, %32, %35, %38, %41, %44, %47, %50, %53 in 1 : vector<256x3xbf16>, vector<256x3xbf16>, vector<256x3xbf16>, vector<256x3xbf16>, vector<256x3xbf16>, vector<256x3xbf16>, vector<256x3xbf16>, vector<256x3xbf16>, vector<256x3xbf16> -> vector<256x27xbf16>
    %c0_82 = arith.constant 0 : index
    %c0_83 = arith.constant 0 : index
    %55 = vector.load %arg2[%c0_82, %c0_83] : memref<27x16xbf16, #tpu.memory_space<vmem>>, vector<27x16xbf16>
    %cst_84 = arith.constant dense<0.000000e+00> : vector<256x16xf32>
    %56 = tpu.matmul %54, %55, %cst_84 {dimension_numbers = #tpu.dot_dimension_numbers<[1], [0], [0], [1], [0, 0, 1, 1], [], []>} : vector<256x27xbf16>, vector<27x16xbf16>, vector<256x16xf32> -> vector<256x16xf32>
    %c0_85 = arith.constant 0 : index
    %c0_86 = arith.constant 0 : index
    %57 = vector.load %arg3[%c0_85, %c0_86] : memref<1x16xf32, #tpu.memory_space<vmem>>, vector<1x16xf32>
    %58 = vector.broadcast %57 : vector<1x16xf32> to vector<256x16xf32>
    %59 = arith.addf %56, %58 : vector<256x16xf32>
    %cst_87 = arith.constant 0.000000e+00 : f32
    %60 = vector.broadcast %cst_87 : f32 to vector<256x16xf32>
    %61 = arith.maximumf %59, %60 : vector<256x16xf32>
    %62 = vector.shape_cast %61 : vector<256x16xf32> to vector<8x2x16x16xf32>
    %63 = vector.extract_strided_slice %62 {offsets = [0, 0, 0, 0], sizes = [8, 1, 16, 16], strides = [1, 1, 1, 1]} : vector<8x2x16x16xf32> to vector<8x1x16x16xf32>
    %64 = vector.shape_cast %63 : vector<8x1x16x16xf32> to vector<8x16x16xf32>
    %65 = vector.extract_strided_slice %62 {offsets = [0, 1, 0, 0], sizes = [8, 1, 16, 16], strides = [1, 1, 1, 1]} : vector<8x2x16x16xf32> to vector<8x1x16x16xf32>
    %66 = vector.shape_cast %65 : vector<8x1x16x16xf32> to vector<8x16x16xf32>
    %67 = arith.maximumf %64, %66 : vector<8x16x16xf32>
    %68 = vector.shape_cast %67 : vector<8x16x16xf32> to vector<8x8x2x16xf32>
    %69 = vector.extract_strided_slice %68 {offsets = [0, 0, 0, 0], sizes = [8, 8, 1, 16], strides = [1, 1, 1, 1]} : vector<8x8x2x16xf32> to vector<8x8x1x16xf32>
    %70 = vector.shape_cast %69 : vector<8x8x1x16xf32> to vector<8x8x16xf32>
    %71 = vector.extract_strided_slice %68 {offsets = [0, 0, 1, 0], sizes = [8, 8, 1, 16], strides = [1, 1, 1, 1]} : vector<8x8x2x16xf32> to vector<8x8x1x16xf32>
    %72 = vector.shape_cast %71 : vector<8x8x1x16xf32> to vector<8x8x16xf32>
    %73 = arith.maximumf %70, %72 : vector<8x8x16xf32>
    %c1_88 = arith.constant 1 : index
    %c1_89 = arith.constant 1 : index
    %c0_90 = arith.constant 0 : index
    %74 = vector.load %arg12[%c1_88, %c1_89, %c0_90] : memref<10x10x16xf32, #tpu.memory_space<vmem>>, vector<8x8x16xf32>
    tpu.vector_store %arg12[%c1_88, %c1_89, %c0_90], %73 {strides = array<i32>} : memref<10x10x16xf32, #tpu.memory_space<vmem>>, vector<8x8x16xf32>,
    %c0_91 = arith.constant 0 : index
    %c0_92 = arith.constant 0 : index
    %c0_93 = arith.constant 0 : index
    %75 = vector.load %arg12[%c0_91, %c0_92, %c0_93] : memref<10x10x16xf32, #tpu.memory_space<vmem>>, vector<8x8x16xf32>
    %76 = vector.shape_cast %75 : vector<8x8x16xf32> to vector<64x16xf32>
    %77 = arith.truncf %76 : vector<64x16xf32> to vector<64x16xbf16>
    %c0_94 = arith.constant 0 : index
    %c1_95 = arith.constant 1 : index
    %c0_96 = arith.constant 0 : index
    %78 = vector.load %arg12[%c0_94, %c1_95, %c0_96] : memref<10x10x16xf32, #tpu.memory_space<vmem>>, vector<8x8x16xf32>
    %79 = vector.shape_cast %78 : vector<8x8x16xf32> to vector<64x16xf32>
    %80 = arith.truncf %79 : vector<64x16xf32> to vector<64x16xbf16>
    %c0_97 = arith.constant 0 : index
    %c2_98 = arith.constant 2 : index
    %c0_99 = arith.constant 0 : index
    %81 = vector.load %arg12[%c0_97, %c2_98, %c0_99] : memref<10x10x16xf32, #tpu.memory_space<vmem>>, vector<8x8x16xf32>
    %82 = vector.shape_cast %81 : vector<8x8x16xf32> to vector<64x16xf32>
    %83 = arith.truncf %82 : vector<64x16xf32> to vector<64x16xbf16>
    %c1_100 = arith.constant 1 : index
    %c0_101 = arith.constant 0 : index
    %c0_102 = arith.constant 0 : index
    %84 = vector.load %arg12[%c1_100, %c0_101, %c0_102] : memref<10x10x16xf32, #tpu.memory_space<vmem>>, vector<8x8x16xf32>
    %85 = vector.shape_cast %84 : vector<8x8x16xf32> to vector<64x16xf32>
    %86 = arith.truncf %85 : vector<64x16xf32> to vector<64x16xbf16>
    %c1_103 = arith.constant 1 : index
    %c1_104 = arith.constant 1 : index
    %c0_105 = arith.constant 0 : index
    %87 = vector.load %arg12[%c1_103, %c1_104, %c0_105] : memref<10x10x16xf32, #tpu.memory_space<vmem>>, vector<8x8x16xf32>
    %88 = vector.shape_cast %87 : vector<8x8x16xf32> to vector<64x16xf32>
    %89 = arith.truncf %88 : vector<64x16xf32> to vector<64x16xbf16>
    %c1_106 = arith.constant 1 : index
    %c2_107 = arith.constant 2 : index
    %c0_108 = arith.constant 0 : index
    %90 = vector.load %arg12[%c1_106, %c2_107, %c0_108] : memref<10x10x16xf32, #tpu.memory_space<vmem>>, vector<8x8x16xf32>
    %91 = vector.shape_cast %90 : vector<8x8x16xf32> to vector<64x16xf32>
    %92 = arith.truncf %91 : vector<64x16xf32> to vector<64x16xbf16>
    %c2_109 = arith.constant 2 : index
    %c0_110 = arith.constant 0 : index
    %c0_111 = arith.constant 0 : index
    %93 = vector.load %arg12[%c2_109, %c0_110, %c0_111] : memref<10x10x16xf32, #tpu.memory_space<vmem>>, vector<8x8x16xf32>
    %94 = vector.shape_cast %93 : vector<8x8x16xf32> to vector<64x16xf32>
    %95 = arith.truncf %94 : vector<64x16xf32> to vector<64x16xbf16>
    %c2_112 = arith.constant 2 : index
    %c1_113 = arith.constant 1 : index
    %c0_114 = arith.constant 0 : index
    %96 = vector.load %arg12[%c2_112, %c1_113, %c0_114] : memref<10x10x16xf32, #tpu.memory_space<vmem>>, vector<8x8x16xf32>
    %97 = vector.shape_cast %96 : vector<8x8x16xf32> to vector<64x16xf32>
    %98 = arith.truncf %97 : vector<64x16xf32> to vector<64x16xbf16>
    %c2_115 = arith.constant 2 : index
    %c2_116 = arith.constant 2 : index
    %c0_117 = arith.constant 0 : index
    %99 = vector.load %arg12[%c2_115, %c2_116, %c0_117] : memref<10x10x16xf32, #tpu.memory_space<vmem>>, vector<8x8x16xf32>
    %100 = vector.shape_cast %99 : vector<8x8x16xf32> to vector<64x16xf32>
    %101 = arith.truncf %100 : vector<64x16xf32> to vector<64x16xbf16>
    %102 = tpu.concatenate %77, %80, %83, %86, %89, %92, %95, %98, %101 in 1 : vector<64x16xbf16>, vector<64x16xbf16>, vector<64x16xbf16>, vector<64x16xbf16>, vector<64x16xbf16>, vector<64x16xbf16>, vector<64x16xbf16>, vector<64x16xbf16>, vector<64x16xbf16> -> vector<64x144xbf16>
    %c0_118 = arith.constant 0 : index
    %c0_119 = arith.constant 0 : index
    %103 = vector.load %arg4[%c0_118, %c0_119] : memref<144x32xbf16, #tpu.memory_space<vmem>>, vector<144x32xbf16>
    %cst_120 = arith.constant dense<0.000000e+00> : vector<64x32xf32>
    %104 = tpu.matmul %102, %103, %cst_120 {dimension_numbers = #tpu.dot_dimension_numbers<[1], [0], [0], [1], [0, 0, 1, 1], [], []>} : vector<64x144xbf16>, vector<144x32xbf16>, vector<64x32xf32> -> vector<64x32xf32>
    %c0_121 = arith.constant 0 : index
    %c0_122 = arith.constant 0 : index
    %105 = vector.load %arg5[%c0_121, %c0_122] : memref<1x32xf32, #tpu.memory_space<vmem>>, vector<1x32xf32>
    %106 = vector.broadcast %105 : vector<1x32xf32> to vector<64x32xf32>
    %107 = arith.addf %104, %106 : vector<64x32xf32>
    %cst_123 = arith.constant 0.000000e+00 : f32
    %108 = vector.broadcast %cst_123 : f32 to vector<64x32xf32>
    %109 = arith.maximumf %107, %108 : vector<64x32xf32>
    %110 = vector.shape_cast %109 : vector<64x32xf32> to vector<4x2x8x32xf32>
    %111 = vector.extract_strided_slice %110 {offsets = [0, 0, 0, 0], sizes = [4, 1, 8, 32], strides = [1, 1, 1, 1]} : vector<4x2x8x32xf32> to vector<4x1x8x32xf32>
    %112 = vector.shape_cast %111 : vector<4x1x8x32xf32> to vector<4x8x32xf32>
    %113 = vector.extract_strided_slice %110 {offsets = [0, 1, 0, 0], sizes = [4, 1, 8, 32], strides = [1, 1, 1, 1]} : vector<4x2x8x32xf32> to vector<4x1x8x32xf32>
    %114 = vector.shape_cast %113 : vector<4x1x8x32xf32> to vector<4x8x32xf32>
    %115 = arith.maximumf %112, %114 : vector<4x8x32xf32>
    %116 = vector.shape_cast %115 : vector<4x8x32xf32> to vector<4x4x2x32xf32>
    %117 = vector.extract_strided_slice %116 {offsets = [0, 0, 0, 0], sizes = [4, 4, 1, 32], strides = [1, 1, 1, 1]} : vector<4x4x2x32xf32> to vector<4x4x1x32xf32>
    %118 = vector.shape_cast %117 : vector<4x4x1x32xf32> to vector<4x4x32xf32>
    %119 = vector.extract_strided_slice %116 {offsets = [0, 0, 1, 0], sizes = [4, 4, 1, 32], strides = [1, 1, 1, 1]} : vector<4x4x2x32xf32> to vector<4x4x1x32xf32>
    %120 = vector.shape_cast %119 : vector<4x4x1x32xf32> to vector<4x4x32xf32>
    %121 = arith.maximumf %118, %120 : vector<4x4x32xf32>
    %c1_124 = arith.constant 1 : index
    %c1_125 = arith.constant 1 : index
    %c0_126 = arith.constant 0 : index
    %122 = vector.load %arg13[%c1_124, %c1_125, %c0_126] : memref<6x6x32xf32, #tpu.memory_space<vmem>>, vector<4x4x32xf32>
    tpu.vector_store %arg13[%c1_124, %c1_125, %c0_126], %121 {strides = array<i32>} : memref<6x6x32xf32, #tpu.memory_space<vmem>>, vector<4x4x32xf32>,
    %c0_127 = arith.constant 0 : index
    %c0_128 = arith.constant 0 : index
    %c0_129 = arith.constant 0 : index
    %123 = vector.load %arg13[%c0_127, %c0_128, %c0_129] : memref<6x6x32xf32, #tpu.memory_space<vmem>>, vector<4x4x32xf32>
    %124 = vector.shape_cast %123 : vector<4x4x32xf32> to vector<16x32xf32>
    %125 = arith.truncf %124 : vector<16x32xf32> to vector<16x32xbf16>
    %c0_130 = arith.constant 0 : index
    %c1_131 = arith.constant 1 : index
    %c0_132 = arith.constant 0 : index
    %126 = vector.load %arg13[%c0_130, %c1_131, %c0_132] : memref<6x6x32xf32, #tpu.memory_space<vmem>>, vector<4x4x32xf32>
    %127 = vector.shape_cast %126 : vector<4x4x32xf32> to vector<16x32xf32>
    %128 = arith.truncf %127 : vector<16x32xf32> to vector<16x32xbf16>
    %c0_133 = arith.constant 0 : index
    %c2_134 = arith.constant 2 : index
    %c0_135 = arith.constant 0 : index
    %129 = vector.load %arg13[%c0_133, %c2_134, %c0_135] : memref<6x6x32xf32, #tpu.memory_space<vmem>>, vector<4x4x32xf32>
    %130 = vector.shape_cast %129 : vector<4x4x32xf32> to vector<16x32xf32>
    %131 = arith.truncf %130 : vector<16x32xf32> to vector<16x32xbf16>
    %c1_136 = arith.constant 1 : index
    %c0_137 = arith.constant 0 : index
    %c0_138 = arith.constant 0 : index
    %132 = vector.load %arg13[%c1_136, %c0_137, %c0_138] : memref<6x6x32xf32, #tpu.memory_space<vmem>>, vector<4x4x32xf32>
    %133 = vector.shape_cast %132 : vector<4x4x32xf32> to vector<16x32xf32>
    %134 = arith.truncf %133 : vector<16x32xf32> to vector<16x32xbf16>
    %c1_139 = arith.constant 1 : index
    %c1_140 = arith.constant 1 : index
    %c0_141 = arith.constant 0 : index
    %135 = vector.load %arg13[%c1_139, %c1_140, %c0_141] : memref<6x6x32xf32, #tpu.memory_space<vmem>>, vector<4x4x32xf32>
    %136 = vector.shape_cast %135 : vector<4x4x32xf32> to vector<16x32xf32>
    %137 = arith.truncf %136 : vector<16x32xf32> to vector<16x32xbf16>
    %c1_142 = arith.constant 1 : index
    %c2_143 = arith.constant 2 : index
    %c0_144 = arith.constant 0 : index
    %138 = vector.load %arg13[%c1_142, %c2_143, %c0_144] : memref<6x6x32xf32, #tpu.memory_space<vmem>>, vector<4x4x32xf32>
    %139 = vector.shape_cast %138 : vector<4x4x32xf32> to vector<16x32xf32>
    %140 = arith.truncf %139 : vector<16x32xf32> to vector<16x32xbf16>
    %c2_145 = arith.constant 2 : index
    %c0_146 = arith.constant 0 : index
    %c0_147 = arith.constant 0 : index
    %141 = vector.load %arg13[%c2_145, %c0_146, %c0_147] : memref<6x6x32xf32, #tpu.memory_space<vmem>>, vector<4x4x32xf32>
    %142 = vector.shape_cast %141 : vector<4x4x32xf32> to vector<16x32xf32>
    %143 = arith.truncf %142 : vector<16x32xf32> to vector<16x32xbf16>
    %c2_148 = arith.constant 2 : index
    %c1_149 = arith.constant 1 : index
    %c0_150 = arith.constant 0 : index
    %144 = vector.load %arg13[%c2_148, %c1_149, %c0_150] : memref<6x6x32xf32, #tpu.memory_space<vmem>>, vector<4x4x32xf32>
    %145 = vector.shape_cast %144 : vector<4x4x32xf32> to vector<16x32xf32>
    %146 = arith.truncf %145 : vector<16x32xf32> to vector<16x32xbf16>
    %c2_151 = arith.constant 2 : index
    %c2_152 = arith.constant 2 : index
    %c0_153 = arith.constant 0 : index
    %147 = vector.load %arg13[%c2_151, %c2_152, %c0_153] : memref<6x6x32xf32, #tpu.memory_space<vmem>>, vector<4x4x32xf32>
    %148 = vector.shape_cast %147 : vector<4x4x32xf32> to vector<16x32xf32>
    %149 = arith.truncf %148 : vector<16x32xf32> to vector<16x32xbf16>
    %150 = tpu.concatenate %125, %128, %131, %134, %137, %140, %143, %146, %149 in 1 : vector<16x32xbf16>, vector<16x32xbf16>, vector<16x32xbf16>, vector<16x32xbf16>, vector<16x32xbf16>, vector<16x32xbf16>, vector<16x32xbf16>, vector<16x32xbf16>, vector<16x32xbf16> -> vector<16x288xbf16>
    %c0_154 = arith.constant 0 : index
    %c0_155 = arith.constant 0 : index
    %151 = vector.load %arg6[%c0_154, %c0_155] : memref<288x64xbf16, #tpu.memory_space<vmem>>, vector<288x64xbf16>
    %cst_156 = arith.constant dense<0.000000e+00> : vector<16x64xf32>
    %152 = tpu.matmul %150, %151, %cst_156 {dimension_numbers = #tpu.dot_dimension_numbers<[1], [0], [0], [1], [0, 0, 1, 1], [], []>} : vector<16x288xbf16>, vector<288x64xbf16>, vector<16x64xf32> -> vector<16x64xf32>
    %c0_157 = arith.constant 0 : index
    %c0_158 = arith.constant 0 : index
    %153 = vector.load %arg7[%c0_157, %c0_158] : memref<1x64xf32, #tpu.memory_space<vmem>>, vector<1x64xf32>
    %154 = vector.broadcast %153 : vector<1x64xf32> to vector<16x64xf32>
    %155 = arith.addf %152, %154 : vector<16x64xf32>
    %cst_159 = arith.constant 0.000000e+00 : f32
    %156 = vector.broadcast %cst_159 : f32 to vector<16x64xf32>
    %157 = arith.maximumf %155, %156 : vector<16x64xf32>
    %158 = vector.shape_cast %157 : vector<16x64xf32> to vector<2x2x4x64xf32>
    %159 = vector.extract_strided_slice %158 {offsets = [0, 0, 0, 0], sizes = [2, 1, 4, 64], strides = [1, 1, 1, 1]} : vector<2x2x4x64xf32> to vector<2x1x4x64xf32>
    %160 = vector.shape_cast %159 : vector<2x1x4x64xf32> to vector<2x4x64xf32>
    %161 = vector.extract_strided_slice %158 {offsets = [0, 1, 0, 0], sizes = [2, 1, 4, 64], strides = [1, 1, 1, 1]} : vector<2x2x4x64xf32> to vector<2x1x4x64xf32>
    %162 = vector.shape_cast %161 : vector<2x1x4x64xf32> to vector<2x4x64xf32>
    %163 = arith.maximumf %160, %162 : vector<2x4x64xf32>
    %164 = vector.shape_cast %163 : vector<2x4x64xf32> to vector<2x2x2x64xf32>
    %165 = vector.extract_strided_slice %164 {offsets = [0, 0, 0, 0], sizes = [2, 2, 1, 64], strides = [1, 1, 1, 1]} : vector<2x2x2x64xf32> to vector<2x2x1x64xf32>
    %166 = vector.shape_cast %165 : vector<2x2x1x64xf32> to vector<2x2x64xf32>
    %167 = vector.extract_strided_slice %164 {offsets = [0, 0, 1, 0], sizes = [2, 2, 1, 64], strides = [1, 1, 1, 1]} : vector<2x2x2x64xf32> to vector<2x2x1x64xf32>
    %168 = vector.shape_cast %167 : vector<2x2x1x64xf32> to vector<2x2x64xf32>
    %169 = arith.maximumf %166, %168 : vector<2x2x64xf32>
    %c1_160 = arith.constant 1 : index
    %c1_161 = arith.constant 1 : index
    %c0_162 = arith.constant 0 : index
    %170 = vector.load %arg14[%c1_160, %c1_161, %c0_162] : memref<4x4x64xf32, #tpu.memory_space<vmem>>, vector<2x2x64xf32>
    tpu.vector_store %arg14[%c1_160, %c1_161, %c0_162], %169 {strides = array<i32>} : memref<4x4x64xf32, #tpu.memory_space<vmem>>, vector<2x2x64xf32>,
    %c0_163 = arith.constant 0 : index
    %c0_164 = arith.constant 0 : index
    %c0_165 = arith.constant 0 : index
    %171 = vector.load %arg14[%c0_163, %c0_164, %c0_165] : memref<4x4x64xf32, #tpu.memory_space<vmem>>, vector<2x2x64xf32>
    %172 = vector.shape_cast %171 : vector<2x2x64xf32> to vector<4x64xf32>
    %173 = arith.truncf %172 : vector<4x64xf32> to vector<4x64xbf16>
    %c0_166 = arith.constant 0 : index
    %c1_167 = arith.constant 1 : index
    %c0_168 = arith.constant 0 : index
    %174 = vector.load %arg14[%c0_166, %c1_167, %c0_168] : memref<4x4x64xf32, #tpu.memory_space<vmem>>, vector<2x2x64xf32>
    %175 = vector.shape_cast %174 : vector<2x2x64xf32> to vector<4x64xf32>
    %176 = arith.truncf %175 : vector<4x64xf32> to vector<4x64xbf16>
    %c0_169 = arith.constant 0 : index
    %c2_170 = arith.constant 2 : index
    %c0_171 = arith.constant 0 : index
    %177 = vector.load %arg14[%c0_169, %c2_170, %c0_171] : memref<4x4x64xf32, #tpu.memory_space<vmem>>, vector<2x2x64xf32>
    %178 = vector.shape_cast %177 : vector<2x2x64xf32> to vector<4x64xf32>
    %179 = arith.truncf %178 : vector<4x64xf32> to vector<4x64xbf16>
    %c1_172 = arith.constant 1 : index
    %c0_173 = arith.constant 0 : index
    %c0_174 = arith.constant 0 : index
    %180 = vector.load %arg14[%c1_172, %c0_173, %c0_174] : memref<4x4x64xf32, #tpu.memory_space<vmem>>, vector<2x2x64xf32>
    %181 = vector.shape_cast %180 : vector<2x2x64xf32> to vector<4x64xf32>
    %182 = arith.truncf %181 : vector<4x64xf32> to vector<4x64xbf16>
    %c1_175 = arith.constant 1 : index
    %c1_176 = arith.constant 1 : index
    %c0_177 = arith.constant 0 : index
    %183 = vector.load %arg14[%c1_175, %c1_176, %c0_177] : memref<4x4x64xf32, #tpu.memory_space<vmem>>, vector<2x2x64xf32>
    %184 = vector.shape_cast %183 : vector<2x2x64xf32> to vector<4x64xf32>
    %185 = arith.truncf %184 : vector<4x64xf32> to vector<4x64xbf16>
    %c1_178 = arith.constant 1 : index
    %c2_179 = arith.constant 2 : index
    %c0_180 = arith.constant 0 : index
    %186 = vector.load %arg14[%c1_178, %c2_179, %c0_180] : memref<4x4x64xf32, #tpu.memory_space<vmem>>, vector<2x2x64xf32>
    %187 = vector.shape_cast %186 : vector<2x2x64xf32> to vector<4x64xf32>
    %188 = arith.truncf %187 : vector<4x64xf32> to vector<4x64xbf16>
    %c2_181 = arith.constant 2 : index
    %c0_182 = arith.constant 0 : index
    %c0_183 = arith.constant 0 : index
    %189 = vector.load %arg14[%c2_181, %c0_182, %c0_183] : memref<4x4x64xf32, #tpu.memory_space<vmem>>, vector<2x2x64xf32>
    %190 = vector.shape_cast %189 : vector<2x2x64xf32> to vector<4x64xf32>
    %191 = arith.truncf %190 : vector<4x64xf32> to vector<4x64xbf16>
    %c2_184 = arith.constant 2 : index
    %c1_185 = arith.constant 1 : index
    %c0_186 = arith.constant 0 : index
    %192 = vector.load %arg14[%c2_184, %c1_185, %c0_186] : memref<4x4x64xf32, #tpu.memory_space<vmem>>, vector<2x2x64xf32>
    %193 = vector.shape_cast %192 : vector<2x2x64xf32> to vector<4x64xf32>
    %194 = arith.truncf %193 : vector<4x64xf32> to vector<4x64xbf16>
    %c2_187 = arith.constant 2 : index
    %c2_188 = arith.constant 2 : index
    %c0_189 = arith.constant 0 : index
    %195 = vector.load %arg14[%c2_187, %c2_188, %c0_189] : memref<4x4x64xf32, #tpu.memory_space<vmem>>, vector<2x2x64xf32>
    %196 = vector.shape_cast %195 : vector<2x2x64xf32> to vector<4x64xf32>
    %197 = arith.truncf %196 : vector<4x64xf32> to vector<4x64xbf16>
    %198 = tpu.concatenate %173, %176, %179, %182, %185, %188, %191, %194, %197 in 1 : vector<4x64xbf16>, vector<4x64xbf16>, vector<4x64xbf16>, vector<4x64xbf16>, vector<4x64xbf16>, vector<4x64xbf16>, vector<4x64xbf16>, vector<4x64xbf16>, vector<4x64xbf16> -> vector<4x576xbf16>
    %c0_190 = arith.constant 0 : index
    %c0_191 = arith.constant 0 : index
    %199 = vector.load %arg8[%c0_190, %c0_191] : memref<576x128xbf16, #tpu.memory_space<vmem>>, vector<576x128xbf16>
    %cst_192 = arith.constant dense<0.000000e+00> : vector<4x128xf32>
    %200 = tpu.matmul %198, %199, %cst_192 {dimension_numbers = #tpu.dot_dimension_numbers<[1], [0], [0], [1], [0, 0, 1, 1], [], []>} : vector<4x576xbf16>, vector<576x128xbf16>, vector<4x128xf32> -> vector<4x128xf32>
    %c0_193 = arith.constant 0 : index
    %c0_194 = arith.constant 0 : index
    %201 = vector.load %arg9[%c0_193, %c0_194] : memref<1x128xf32, #tpu.memory_space<vmem>>, vector<1x128xf32>
    %202 = vector.broadcast %201 : vector<1x128xf32> to vector<4x128xf32>
    %203 = arith.addf %200, %202 : vector<4x128xf32>
    %cst_195 = arith.constant 0.000000e+00 : f32
    %204 = vector.broadcast %cst_195 : f32 to vector<4x128xf32>
    %205 = arith.maximumf %203, %204 : vector<4x128xf32>
    %cst_196 = arith.constant dense<0.000000e+00> : vector<128xf32>
    %206 = vector.multi_reduction <add>, %205, %cst_196 [0] : vector<4x128xf32> to vector<128xf32>
    %207 = vector.shape_cast %206 : vector<128xf32> to vector<1x128xf32>
    %cst_197 = arith.constant 2.500000e-01 : f32
    %208 = vector.broadcast %cst_197 : f32 to vector<1x128xf32>
    %209 = arith.mulf %207, %208 : vector<1x128xf32>
    %c0_198 = arith.constant 0 : index
    %c0_199 = arith.constant 0 : index
    %c0_200 = arith.constant 0 : index
    %210 = vector.load %arg10[%c0_198, %c0_199, %c0_200] : memref<1x1x128xf32, #tpu.memory_space<vmem>>, vector<1x1x128xf32>
    %211 = vector.shape_cast %210 : vector<1x1x128xf32> to vector<1x128xf32>
    %212 = vector.shape_cast %209 : vector<1x128xf32> to vector<1x1x128xf32>
    tpu.vector_store %arg10[%c0_198, %c0_199, %c0_200], %212 {strides = array<i32>} : memref<1x1x128xf32, #tpu.memory_space<vmem>>, vector<1x1x128xf32>,
    return
  }
  func.func @transform_0(%arg0: i32) -> (i32, i32, i32, i32) {
    %c0_i32 = arith.constant 0 : i32
    %c0_i32_0 = arith.constant 0 : i32
    %c0_i32_1 = arith.constant 0 : i32
    %c0_i32_2 = arith.constant 0 : i32
    return %arg0, %c0_i32, %c0_i32_0, %c0_i32_1 : i32, i32, i32, i32
  }
  func.func @transform_1(%arg0: i32) -> (i32, i32) {
    %c0_i32 = arith.constant 0 : i32
    %c0_i32_0 = arith.constant 0 : i32
    %c0_i32_1 = arith.constant 0 : i32
    return %c0_i32, %c0_i32_0 : i32, i32
  }
  func.func @transform_2(%arg0: i32) -> (i32, i32) {
    %c0_i32 = arith.constant 0 : i32
    %c0_i32_0 = arith.constant 0 : i32
    %c0_i32_1 = arith.constant 0 : i32
    return %c0_i32, %c0_i32_0 : i32, i32
  }
  func.func @transform_3(%arg0: i32) -> (i32, i32) {
    %c0_i32 = arith.constant 0 : i32
    %c0_i32_0 = arith.constant 0 : i32
    %c0_i32_1 = arith.constant 0 : i32
    return %c0_i32, %c0_i32_0 : i32, i32
  }
  func.func @transform_4(%arg0: i32) -> (i32, i32) {
    %c0_i32 = arith.constant 0 : i32
    %c0_i32_0 = arith.constant 0 : i32
    %c0_i32_1 = arith.constant 0 : i32
    return %c0_i32, %c0_i32_0 : i32, i32
  }
  func.func @transform_5(%arg0: i32) -> (i32, i32) {
    %c0_i32 = arith.constant 0 : i32
    %c0_i32_0 = arith.constant 0 : i32
    %c0_i32_1 = arith.constant 0 : i32
    return %c0_i32, %c0_i32_0 : i32, i32
  }
  func.func @transform_6(%arg0: i32) -> (i32, i32) {
    %c0_i32 = arith.constant 0 : i32
    %c0_i32_0 = arith.constant 0 : i32
    %c0_i32_1 = arith.constant 0 : i32
    return %c0_i32, %c0_i32_0 : i32, i32
  }
  func.func @transform_7(%arg0: i32) -> (i32, i32) {
    %c0_i32 = arith.constant 0 : i32
    %c0_i32_0 = arith.constant 0 : i32
    %c0_i32_1 = arith.constant 0 : i32
    return %c0_i32, %c0_i32_0 : i32, i32
  }
  func.func @transform_8(%arg0: i32) -> (i32, i32) {
    %c0_i32 = arith.constant 0 : i32
    %c0_i32_0 = arith.constant 0 : i32
    %c0_i32_1 = arith.constant 0 : i32
    return %c0_i32, %c0_i32_0 : i32, i32
  }
  func.func @transform_9(%arg0: i32) -> (i32, i32, i32) {
    %c0_i32 = arith.constant 0 : i32
    %c0_i32_0 = arith.constant 0 : i32
    %c0_i32_1 = arith.constant 0 : i32
    return %arg0, %c0_i32, %c0_i32_0 : i32, i32, i32
  }
}

</mosaic_0001>

<llo_original>
// kernel: street_aid_cnn_forward.1
$region0: #{street_aid_cnn_forward.1}
  #allocation0 [shape = 'u32[]', space=smem, size = 0x4, offset = 0x4, fixed_abs, tag = 'smem constant byte address 0x4 - core index']
  #allocation1 [shape = 'u32[144,128]{1,0:T(1,128)}', space=vmem, size = 0x12000, scoped, tag = 'internal scratch']
  #allocation2 [shape = 'f32[18,18,3]{2,1,0:T(8,128)}', space=vmem, size = 0x36000, scoped, tag = 'scratch operand']
  #allocation3 [shape = 'f32[10,10,16]{2,1,0:T(8,128)}', space=vmem, size = 0x14000, scoped, tag = 'scratch operand']
  #allocation4 [shape = 'f32[6,6,32]{2,1,0:T(8,128)}', space=vmem, size = 0x6000, scoped, tag = 'scratch operand']
  #allocation5 [shape = 'f32[4,4,64]{2,1,0:T(4,128)}', space=vmem, size = 0x2000, scoped, tag = 'scratch operand']
  %s0 = inlined_call_operand.vmem [shape: f32[2,16,16,3], index: 0, kind: input, shape index: {}]
  %s1 = inlined_call_operand.vmem [shape: bf16[27,16], index: 1, kind: input, shape index: {}]
  %s2 = inlined_call_operand.vmem [shape: f32[1,16], index: 2, kind: input, shape index: {}]
  %s3 = inlined_call_operand.vmem [shape: bf16[144,32], index: 3, kind: input, shape index: {}]
  %s4 = inlined_call_operand.vmem [shape: f32[1,32], index: 4, kind: input, shape index: {}]
  %s5 = inlined_call_operand.vmem [shape: bf16[288,64], index: 5, kind: input, shape index: {}]
  %s6 = inlined_call_operand.vmem [shape: f32[1,64], index: 6, kind: input, shape index: {}]
  %s7 = inlined_call_operand.vmem [shape: bf16[576,128], index: 7, kind: input, shape index: {}]
  %s8 = inlined_call_operand.vmem [shape: f32[1,128], index: 8, kind: input, shape index: {}]
  %s9 = inlined_call_operand.vmem [shape: f32[2,1,128], index: 9, kind: output, shape index: {}]
  %s10 = sld [smem:[#allocation0]]
  $region69: #{street_aid_cnn_forward.1} parent=0
    _
  %s12 = ssub.s32 1, %s10
  %s13 = scalar_select 0, %s12, %s10
  loop: start=0, step=1, limit=4
  $region2: #{street_aid_cnn_forward.1} parent=0 // loop_pre_header
    _
  $region3: #{street_aid_cnn_forward.1} parent=0 // loop_header
    %s15 = sphi 0, %s19
    %p16 = scmp.ge.s32.totalorder %s15, 4
    %s25 = sphi 0, %s27
    %s28 = sphi 0, %s25
    %s29 = sphi 0, %s28
    %s45 = sphi 0, %s29
    %s49 = sphi 0, %s49
    %s51 = sphi 0, %s49
    %s52 = sphi 0, %s51
    %s66 = sphi 0, %s52
    %s70 = sphi 0, %s70
    %s72 = sphi 0, %s70
    %s73 = sphi 0, %s72
    %s87 = sphi 0, %s73
    %s91 = sphi 0, %s91
    %s93 = sphi 0, %s91
    %s94 = sphi 0, %s93
    %s108 = sphi 0, %s94
    %s112 = sphi 0, %s112
    %s114 = sphi 0, %s112
    %s115 = sphi 0, %s114
    %s129 = sphi 0, %s115
    %s133 = sphi 0, %s133
    %s135 = sphi 0, %s133
    %s136 = sphi 0, %s135
    %s150 = sphi 0, %s136
    %s154 = sphi 0, %s154
    %s156 = sphi 0, %s154
    %s157 = sphi 0, %s156
    %s171 = sphi 0, %s157
    %s175 = sphi 0, %s175
    %s177 = sphi 0, %s175
    %s178 = sphi 0, %s177
    %s192 = sphi 0, %s178
    %s196 = sphi 0, %s196
    %s198 = sphi 0, %s196
    %s199 = sphi 0, %s198
    %s213 = sphi 0, %s199
    %s219 = sphi 0, %s221
    %s222 = sphi 0, %s219
    %s223 = sphi 0, %s222
    %s239 = sphi 0, %s223
  $region4: #{street_aid_cnn_forward.1} parent=0 // loop_header_branch
    %18 = sbr.rel (%p16) target = $region8
  $region5: #{street_aid_cnn_forward.1} parent=0 // loop_body
    %s20 = ssub.s32 %s15, 1
    %s21 = ssub.s32 %s15, 2
    %s22 = sadd.s32 %s15, 1
    %s23 = ssub.s32 %s15, %s22
    %p24 = scmp.eq.s32.totalorder %s23, 0
    %s26 = sadd.s32 %s25, 1
    %s27 = scalar_select %p24, %s25, %s26
    %p30 = pneg %p24
    %p31 = scmp.eq.s32.totalorder %s15, 1
    %p32 = por %p30, %p31
    %p33 = scmp.ne.s32.totalorder %s25, %s28
    %p34 = scmp.eq.s32.totalorder %s15, 0
    %p35 = por %p33, %p34
    %p36 = scmp.ne.s32.totalorder %s25, %s28
    %p37 = scmp.eq.s32.totalorder %s20, 1
    %p38 = por %p36, %p37
    %p39 = scmp.ne.s32.totalorder %s28, %s29
    %p40 = scmp.eq.s32.totalorder %s20, 0
    %p41 = por %p39, %p40
    %p42 = scmp.ne.s32.totalorder %s28, %s29
    %p43 = scmp.eq.s32.totalorder %s21, 1
    %p44 = por %p42, %p43
    %p46 = scmp.ne.s32.totalorder %s29, %s45
    %p47 = scmp.eq.s32.totalorder %s21, 0
    %p48 = por %p46, %p47
    %s50 = sadd.s32 %s49, 1
    %p53 = scmp.eq.s32.totalorder %s15, 1
    %p54 = scmp.ne.s32.totalorder %s49, %s51
    %p55 = scmp.eq.s32.totalorder %s15, 0
    %p56 = por %p54, %p55
    %p57 = scmp.ne.s32.totalorder %s49, %s51
    %p58 = scmp.eq.s32.totalorder %s20, 1
    %p59 = por %p57, %p58
    %p60 = scmp.ne.s32.totalorder %s51, %s52
    %p61 = scmp.eq.s32.totalorder %s20, 0
    %p62 = por %p60, %p61
    %p63 = scmp.ne.s32.totalorder %s51, %s52
    %p64 = scmp.eq.s32.totalorder %s21, 1
    %p65 = por %p63, %p64
    %p67 = scmp.ne.s32.totalorder %s52, %s66
    %p68 = scmp.eq.s32.totalorder %s21, 0
    %p69 = por %p67, %p68
    %s71 = sadd.s32 %s70, 1
    %p74 = scmp.eq.s32.totalorder %s15, 1
    %p75 = scmp.ne.s32.totalorder %s70, %s72
    %p76 = scmp.eq.s32.totalorder %s15, 0
    %p77 = por %p75, %p76
    %p78 = scmp.ne.s32.totalorder %s70, %s72
    %p79 = scmp.eq.s32.totalorder %s20, 1
    %p80 = por %p78, %p79
    %p81 = scmp.ne.s32.totalorder %s72, %s73
    %p82 = scmp.eq.s32.totalorder %s20, 0
    %p83 = por %p81, %p82
    %p84 = scmp.ne.s32.totalorder %s72, %s73
    %p85 = scmp.eq.s32.totalorder %s21, 1
    %p86 = por %p84, %p85
    %p88 = scmp.ne.s32.totalorder %s73, %s87
    %p89 = scmp.eq.s32.totalorder %s21, 0
    %p90 = por %p88, %p89
    %s92 = sadd.s32 %s91, 1
    %p95 = scmp.eq.s32.totalorder %s15, 1
    %p96 = scmp.ne.s32.totalorder %s91, %s93
    %p97 = scmp.eq.s32.totalorder %s15, 0
    %p98 = por %p96, %p97
    %p99 = scmp.ne.s32.totalorder %s91, %s93
    %p100 = scmp.eq.s32.totalorder %s20, 1
    %p101 = por %p99, %p100
    %p102 = scmp.ne.s32.totalorder %s93, %s94
    %p103 = scmp.eq.s32.totalorder %s20, 0
    %p104 = por %p102, %p103
    %p105 = scmp.ne.s32.totalorder %s93, %s94
    %p106 = scmp.eq.s32.totalorder %s21, 1
    %p107 = por %p105, %p106
    %p109 = scmp.ne.s32.totalorder %s94, %s108
    %p110 = scmp.eq.s32.totalorder %s21, 0
    %p111 = por %p109, %p110
    %s113 = sadd.s32 %s112, 1
    %p116 = scmp.eq.s32.totalorder %s15, 1
    %p117 = scmp.ne.s32.totalorder %s112, %s114
    %p118 = scmp.eq.s32.totalorder %s15, 0
    %p119 = por %p117, %p118
    %p120 = scmp.ne.s32.totalorder %s112, %s114
    %p121 = scmp.eq.s32.totalorder %s20, 1
    %p122 = por %p120, %p121
    %p123 = scmp.ne.s32.totalorder %s114, %s115
    %p124 = scmp.eq.s32.totalorder %s20, 0
    %p125 = por %p123, %p124
    %p126 = scmp.ne.s32.totalorder %s114, %s115
    %p127 = scmp.eq.s32.totalorder %s21, 1
    %p128 = por %p126, %p127
    %p130 = scmp.ne.s32.totalorder %s115, %s129
    %p131 = scmp.eq.s32.totalorder %s21, 0
    %p132 = por %p130, %p131
    %s134 = sadd.s32 %s133, 1
    %p137 = scmp.eq.s32.totalorder %s15, 1
    %p138 = scmp.ne.s32.totalorder %s133, %s135
    %p139 = scmp.eq.s32.totalorder %s15, 0
    %p140 = por %p138, %p139
    %p141 = scmp.ne.s32.totalorder %s133, %s135
    %p142 = scmp.eq.s32.totalorder %s20, 1
    %p143 = por %p141, %p142
    %p144 = scmp.ne.s32.totalorder %s135, %s136
    %p145 = scmp.eq.s32.totalorder %s20, 0
    %p146 = por %p144, %p145
    %p147 = scmp.ne.s32.totalorder %s135, %s136
    %p148 = scmp.eq.s32.totalorder %s21, 1
    %p149 = por %p147, %p148
    %p151 = scmp.ne.s32.totalorder %s136, %s150
    %p152 = scmp.eq.s32.totalorder %s21, 0
    %p153 = por %p151, %p152
    %s155 = sadd.s32 %s154, 1
    %p158 = scmp.eq.s32.totalorder %s15, 1
    %p159 = scmp.ne.s32.totalorder %s154, %s156
    %p160 = scmp.eq.s32.totalorder %s15, 0
    %p161 = por %p159, %p160
    %p162 = scmp.ne.s32.totalorder %s154, %s156
    %p163 = scmp.eq.s32.totalorder %s20, 1
    %p164 = por %p162, %p163
    %p165 = scmp.ne.s32.totalorder %s156, %s157
    %p166 = scmp.eq.s32.totalorder %s20, 0
    %p167 = por %p165, %p166
    %p168 = scmp.ne.s32.totalorder %s156, %s157
    %p169 = scmp.eq.s32.totalorder %s21, 1
    %p170 = por %p168, %p169
    %p172 = scmp.ne.s32.totalorder %s157, %s171
    %p173 = scmp.eq.s32.totalorder %s21, 0
    %p174 = por %p172, %p173
    %s176 = sadd.s32 %s175, 1
    %p179 = scmp.eq.s32.totalorder %s15, 1
    %p180 = scmp.ne.s32.totalorder %s175, %s177
    %p181 = scmp.eq.s32.totalorder %s15, 0
    %p182 = por %p180, %p181
    %p183 = scmp.ne.s32.totalorder %s175, %s177
    %p184 = scmp.eq.s32.totalorder %s20, 1
    %p185 = por %p183, %p184
    %p186 = scmp.ne.s32.totalorder %s177, %s178
    %p187 = scmp.eq.s32.totalorder %s20, 0
    %p188 = por %p186, %p187
    %p189 = scmp.ne.s32.totalorder %s177, %s178
    %p190 = scmp.eq.s32.totalorder %s21, 1
    %p191 = por %p189, %p190
    %p193 = scmp.ne.s32.totalorder %s178, %s192
    %p194 = scmp.eq.s32.totalorder %s21, 0
    %p195 = por %p193, %p194
    %s197 = sadd.s32 %s196, 1
    %p200 = scmp.eq.s32.totalorder %s15, 1
    %p201 = scmp.ne.s32.totalorder %s196, %s198
    %p202 = scmp.eq.s32.totalorder %s15, 0
    %p203 = por %p201, %p202
    %p204 = scmp.ne.s32.totalorder %s196, %s198
    %p205 = scmp.eq.s32.totalorder %s20, 1
    %p206 = por %p204, %p205
    %p207 = scmp.ne.s32.totalorder %s198, %s199
    %p208 = scmp.eq.s32.totalorder %s20, 0
    %p209 = por %p207, %p208
    %p210 = scmp.ne.s32.totalorder %s198, %s199
    %p211 = scmp.eq.s32.totalorder %s21, 1
    %p212 = por %p210, %p211
    %p214 = scmp.ne.s32.totalorder %s199, %s213
    %p215 = scmp.eq.s32.totalorder %s21, 0
    %p216 = por %p214, %p215
    %s217 = ssub.s32 %s15, %s22
    %p218 = scmp.eq.s32.totalorder %s217, 0
    %s220 = sadd.s32 %s219, 1
    %s221 = scalar_select %p218, %s219, %s220
    %p224 = pneg %p218
    %p225 = scmp.eq.s32.totalorder %s15, 1
    %p226 = por %p224, %p225
    %p227 = scmp.ne.s32.totalorder %s219, %s222
    %p228 = scmp.eq.s32.totalorder %s15, 0
    %p229 = por %p227, %p228
    %p230 = scmp.ne.s32.totalorder %s219, %s222
    %p231 = scmp.eq.s32.totalorder %s20, 1
    %p232 = por %p230, %p231
    %p233 = scmp.ne.s32.totalorder %s222, %s223
    %p234 = scmp.eq.s32.totalorder %s20, 0
    %p235 = por %p233, %p234
    %p236 = scmp.ne.s32.totalorder %s222, %s223
    %p237 = scmp.eq.s32.totalorder %s21, 1
    %p238 = por %p236, %p237
    %p240 = scmp.ne.s32.totalorder %s223, %s239
    %p241 = scmp.eq.s32.totalorder %s21, 0
    %p242 = por %p240, %p241
    %p243 = scmp.le.s32.totalorder 1, %s15
    %p244 = scmp.lt.s32.totalorder %s15, 3
    %p245 = pnand %p243, %p244
    %p246 = pneg %p245
    // Predicated region
    $region9: #{street_aid_cnn_forward.1} parent=5 // pred_check
      _
    $region10: #{street_aid_cnn_forward.1} parent=5 // pred_check_branch
      %248 = sbr.rel (%p245) target = $region12
    $region11: #{street_aid_cnn_forward.1} parent=5 // pred_region
      %s249 = ssub.s32 %s15, 1
      // Predicated region
      $region13: #{street_aid_cnn_forward.1} parent=11 // pred_check
        %p250 = pneg %p62
      $region14: #{street_aid_cnn_forward.1} parent=11 // pred_check_branch
        %252 = sbr.rel (%p250) target = $region16
      $region15: #{street_aid_cnn_forward.1} parent=11 // pred_region
        _
      $region16: #{street_aid_cnn_forward.1} parent=11 // pred_fallthru
        _
      // Predicated region
      $region17: #{street_aid_cnn_forward.1} parent=11 // pred_check
        %p253 = pneg %p83
      $region18: #{street_aid_cnn_forward.1} parent=11 // pred_check_branch
        %255 = sbr.rel (%p253) target = $region20
      $region19: #{street_aid_cnn_forward.1} parent=11 // pred_region
        _
      $region20: #{street_aid_cnn_forward.1} parent=11 // pred_fallthru
        _
      // Predicated region
      $region21: #{street_aid_cnn_forward.1} parent=11 // pred_check
        %p256 = pneg %p104
      $region22: #{street_aid_cnn_forward.1} parent=11 // pred_check_branch
        %258 = sbr.rel (%p256) target = $region24
      $region23: #{street_aid_cnn_forward.1} parent=11 // pred_region
        _
      $region24: #{street_aid_cnn_forward.1} parent=11 // pred_fallthru
        _
      // Predicated region
      $region25: #{street_aid_cnn_forward.1} parent=11 // pred_check
        %p259 = pneg %p125
      $region26: #{street_aid_cnn_forward.1} parent=11 // pred_check_branch
        %261 = sbr.rel (%p259) target = $region28
      $region27: #{street_aid_cnn_forward.1} parent=11 // pred_region
        _
      $region28: #{street_aid_cnn_forward.1} parent=11 // pred_fallthru
        _
      // Predicated region
      $region29: #{street_aid_cnn_forward.1} parent=11 // pred_check
        %p262 = pneg %p146
      $region30: #{street_aid_cnn_forward.1} parent=11 // pred_check_branch
        %264 = sbr.rel (%p262) target = $region32
      $region31: #{street_aid_cnn_forward.1} parent=11 // pred_region
        _
      $region32: #{street_aid_cnn_forward.1} parent=11 // pred_fallthru
        _
      // Predicated region
      $region33: #{street_aid_cnn_forward.1} parent=11 // pred_check
        %p265 = pneg %p167
      $region34: #{street_aid_cnn_forward.1} parent=11 // pred_check_branch
        %267 = sbr.rel (%p265) target = $region36
      $region35: #{street_aid_cnn_forward.1} parent=11 // pred_region
        _
      $region36: #{street_aid_cnn_forward.1} parent=11 // pred_fallthru
        _
      // Predicated region
      $region37: #{street_aid_cnn_forward.1} parent=11 // pred_check
        %p268 = pneg %p188
      $region38: #{street_aid_cnn_forward.1} parent=11 // pred_check_branch
        %270 = sbr.rel (%p268) target = $region40
      $region39: #{street_aid_cnn_forward.1} parent=11 // pred_region
        _
      $region40: #{street_aid_cnn_forward.1} parent=11 // pred_fallthru
        _
      // Predicated region
      $region41: #{street_aid_cnn_forward.1} parent=11 // pred_check
        %p271 = pneg %p209
      $region42: #{street_aid_cnn_forward.1} parent=11 // pred_check_branch
        %273 = sbr.rel (%p271) target = $region44
      $region43: #{street_aid_cnn_forward.1} parent=11 // pred_region
        _
      $region44: #{street_aid_cnn_forward.1} parent=11 // pred_fallthru
        _
    $region12: #{street_aid_cnn_forward.1} parent=5 // pred_fallthru
      _
    %p274 = scmp.lt.s32.totalorder %s15, 2
    // Predicated region
    $region45: #{street_aid_cnn_forward.1} parent=5 // pred_check
      %p275 = pneg %p274
    $region46: #{street_aid_cnn_forward.1} parent=5 // pred_check_branch
      %277 = sbr.rel (%p275) target = $region48
    $region47: #{street_aid_cnn_forward.1} parent=5 // pred_region
      // Predicated region
      $region49: #{street_aid_cnn_forward.1} parent=47 // pred_check
        %p278 = pneg %p35
      $region50: #{street_aid_cnn_forward.1} parent=47 // pred_check_branch
        %280 = sbr.rel (%p278) target = $region52
      $region51: #{street_aid_cnn_forward.1} parent=47 // pred_region
        %p281 = scmp.lt.s32.totalorder %s15, 1
        %s282 = scalar_select %p281, %s15, 1
        %s283 = smul.addr %s282, 32
        %s284 = smul.addr %s283, 8
        %s285 = scalar_lea.vmem %s0, %s284
      $region52: #{street_aid_cnn_forward.1} parent=47 // pred_fallthru
        _
    $region48: #{street_aid_cnn_forward.1} parent=5 // pred_fallthru
      _
    %p286 = scmp.le.s32.totalorder 1, %s15
    %p287 = scmp.lt.s32.totalorder %s15, 3
    %p288 = pnand %p286, %p287
    %p289 = pneg %p288
    // Predicated region
    $region53: #{street_aid_cnn_forward.1} parent=5 // pred_check
      _
    $region54: #{street_aid_cnn_forward.1} parent=5 // pred_check_branch
      %291 = sbr.rel (%p288) target = $region56
    $region55: #{street_aid_cnn_forward.1} parent=5 // pred_region
      %s292 = ssub.s32 %s15, 1
      %p293 = scmp.lt.s32.totalorder %s20, 1
      %s294 = scalar_select %p293, %s20, 1
      %s295 = smul.addr %s294, 32
      %s296 = smul.addr %s295, 8
      %s297 = scalar_lea.vmem %s0, %s296
      %p298 = pneg %p41
      %p299 = pneg %p38
      %p300 = pneg %p62
      %p301 = pneg %p59
      %p302 = pneg %p83
      %p303 = pneg %p80
      %p304 = pneg %p104
      %p305 = pneg %p101
      %p306 = pneg %p125
      %p307 = pneg %p122
      %p308 = pneg %p146
      %p309 = pneg %p143
      %p310 = pneg %p167
      %p311 = pneg %p164
      %p312 = pneg %p188
      %p313 = pneg %p185
      %p314 = pneg %p209
      %p315 = pneg %p206
      %p316 = pneg %p235
      %p317 = pneg %p232
      %p318 = scmp.lt.s32.totalorder %s20, 1
      %s319 = scalar_select %p318, %s20, 1
      %s320 = scalar_lea.vmem %s9, %s319
      %p321 = scmp.lt.s32.totalorder %s20, 1
      %s322 = scalar_select %p321, %s20, 1
      %s323 = smul.addr %s322, 32
      %s324 = smul.addr %s323, 8
      %s325 = scalar_lea.vmem %s0, %s324
      %p326 = scmp.lt.s32.totalorder %s20, 1
      %s327 = scalar_select %p326, %s20, 1
      %s328 = scalar_lea.vmem %s9, %s327
      %vm330 = vcmask 23552
      %331 = vst.msk [vmem:[#allocation2] sm:$0xff] %vm330, 0.0
      %332 = vst.msk [vmem:[#allocation2 + $0x8] sm:$0xff] %vm330, 0.0
      %vm333 = vcmask 17408
      %334 = vst.msk [vmem:[#allocation2 + $0x10] sm:$0x3] %vm333, 0.0
      %s335 = scalar_lea.vmem [#allocation2], 408
      %336 = vst.msk [vmem:[%s335] sm:$0xff] %vm330, 0.0
      %337 = vst.msk [vmem:[%s335 + $0x8] sm:$0xff] %vm330, 0.0
      %338 = vst.msk [vmem:[%s335 + $0x10] sm:$0x3] %vm333, 0.0
      %vm339 = vcmask 16384
      %340 = vst.msk [vmem:[#allocation2] sm:$0x1] %vm339, 0.0
      %341 = vst.msk [vmem:[#allocation2 + $0x18] sm:$0x1] %vm339, 0.0
      %342 = vst.msk [vmem:[#allocation2 + $0x30] sm:$0x1] %vm339, 0.0
      %343 = vst.msk [vmem:[#allocation2 + $0x48] sm:$0x1] %vm339, 0.0
      %344 = vst.msk [vmem:[#allocation2 + $0x60] sm:$0x1] %vm339, 0.0
      %345 = vst.msk [vmem:[#allocation2 + $0x78] sm:$0x1] %vm339, 0.0
      %346 = vst.msk [vmem:[#allocation2 + $0x90] sm:$0x1] %vm339, 0.0
      %347 = vst.msk [vmem:[#allocation2 + $0xa8] sm:$0x1] %vm339, 0.0
      %348 = vst.msk [vmem:[#allocation2 + $0xc0] sm:$0x1] %vm339, 0.0
      %349 = vst.msk [vmem:[#allocation2 + $0xd8] sm:$0x1] %vm339, 0.0
      %350 = vst.msk [vmem:[#allocation2 + $0xf0] sm:$0x1] %vm339, 0.0
      %351 = vst.msk [vmem:[#allocation2 + $0x108] sm:$0x1] %vm339, 0.0
      %352 = vst.msk [vmem:[#allocation2 + $0x120] sm:$0x1] %vm339, 0.0
      %353 = vst.msk [vmem:[#allocation2 + $0x138] sm:$0x1] %vm339, 0.0
      %354 = vst.msk [vmem:[#allocation2 + $0x150] sm:$0x1] %vm339, 0.0
      %355 = vst.msk [vmem:[#allocation2 + $0x168] sm:$0x1] %vm339, 0.0
      %356 = vst.msk [vmem:[#allocation2 + $0x180] sm:$0x1] %vm339, 0.0
      %357 = vst.msk [vmem:[#allocation2 + $0x198] sm:$0x1] %vm339, 0.0
      %358 = vst.msk [vmem:[#allocation2 + $0x11] sm:$0x1] %vm339, 0.0
      %359 = vst.msk [vmem:[#allocation2 + $0x29] sm:$0x1] %vm339, 0.0
      %360 = vst.msk [vmem:[#allocation2 + $0x41] sm:$0x1] %vm339, 0.0
      %361 = vst.msk [vmem:[#allocation2 + $0x59] sm:$0x1] %vm339, 0.0
      %362 = vst.msk [vmem:[#allocation2 + $0x71] sm:$0x1] %vm339, 0.0
      %363 = vst.msk [vmem:[#allocation2 + $0x89] sm:$0x1] %vm339, 0.0
      %364 = vst.msk [vmem:[#allocation2 + $0xa1] sm:$0x1] %vm339, 0.0
      %365 = vst.msk [vmem:[#allocation2 + $0xb9] sm:$0x1] %vm339, 0.0
      %366 = vst.msk [vmem:[#allocation2 + $0xd1] sm:$0x1] %vm339, 0.0
      %367 = vst.msk [vmem:[#allocation2 + $0xe9] sm:$0x1] %vm339, 0.0
      %368 = vst.msk [vmem:[#allocation2 + $0x101] sm:$0x1] %vm339, 0.0
      %369 = vst.msk [vmem:[#allocation2 + $0x119] sm:$0x1] %vm339, 0.0
      %370 = vst.msk [vmem:[#allocation2 + $0x131] sm:$0x1] %vm339, 0.0
      %371 = vst.msk [vmem:[#allocation2 + $0x149] sm:$0x1] %vm339, 0.0
      %372 = vst.msk [vmem:[#allocation2 + $0x161] sm:$0x1] %vm339, 0.0
      %373 = vst.msk [vmem:[#allocation2 + $0x179] sm:$0x1] %vm339, 0.0
      %374 = vst.msk [vmem:[#allocation2 + $0x191] sm:$0x1] %vm339, 0.0
      %375 = vst.msk [vmem:[#allocation2 + $0x1a9] sm:$0x1] %vm339, 0.0
      %vm376 = vcmask 130048
      %377 = vst.msk [vmem:[#allocation3] sm:$0xff] %vm376, 0.0
      %vm378 = vcmask 123904
      %379 = vst.msk [vmem:[#allocation3 + $0x8] sm:$0x3] %vm378, 0.0
      %s380 = scalar_lea.vmem [#allocation3], 144
      %381 = vst.msk [vmem:[%s380] sm:$0xff] %vm376, 0.0
      %382 = vst.msk [vmem:[%s380 + $0x8] sm:$0x3] %vm378, 0.0
      %vm383 = vcmask 122880
      %384 = vst.msk [vmem:[#allocation3] sm:$0x1] %vm383, 0.0
      %385 = vst.msk [vmem:[#allocation3 + $0x10] sm:$0x1] %vm383, 0.0
      %386 = vst.msk [vmem:[#allocation3 + $0x20] sm:$0x1] %vm383, 0.0
      %387 = vst.msk [vmem:[#allocation3 + $0x30] sm:$0x1] %vm383, 0.0
      %388 = vst.msk [vmem:[#allocation3 + $0x40] sm:$0x1] %vm383, 0.0
      %389 = vst.msk [vmem:[#allocation3 + $0x50] sm:$0x1] %vm383, 0.0
      %390 = vst.msk [vmem:[#allocation3 + $0x60] sm:$0x1] %vm383, 0.0
      %391 = vst.msk [vmem:[#allocation3 + $0x70] sm:$0x1] %vm383, 0.0
      %392 = vst.msk [vmem:[#allocation3 + $0x80] sm:$0x1] %vm383, 0.0
      %393 = vst.msk [vmem:[#allocation3 + $0x90] sm:$0x1] %vm383, 0.0
      %394 = vst.msk [vmem:[#allocation3 + $0x9] sm:$0x1] %vm383, 0.0
      %395 = vst.msk [vmem:[#allocation3 + $0x19] sm:$0x1] %vm383, 0.0
      %396 = vst.msk [vmem:[#allocation3 + $0x29] sm:$0x1] %vm383, 0.0
      %397 = vst.msk [vmem:[#allocation3 + $0x39] sm:$0x1] %vm383, 0.0
      %398 = vst.msk [vmem:[#allocation3 + $0x49] sm:$0x1] %vm383, 0.0
      %399 = vst.msk [vmem:[#allocation3 + $0x59] sm:$0x1] %vm383, 0.0
      %400 = vst.msk [vmem:[#allocation3 + $0x69] sm:$0x1] %vm383, 0.0
      %401 = vst.msk [vmem:[#allocation3 + $0x79] sm:$0x1] %vm383, 0.0
      %402 = vst.msk [vmem:[#allocation3 + $0x89] sm:$0x1] %vm383, 0.0
      %403 = vst.msk [vmem:[#allocation3 + $0x99] sm:$0x1] %vm383, 0.0
      %vm404 = vcmask 259072
      %405 = vst.msk [vmem:[#allocation4] sm:$0x3f] %vm404, 0.0
      %s406 = scalar_lea.vmem [#allocation4], 40
      %407 = vst.msk [vmem:[%s406] sm:$0x3f] %vm404, 0.0
      %vm408 = vcmask 253952
      %409 = vst.msk [vmem:[#allocation4] sm:$0x1] %vm408, 0.0
      %410 = vst.msk [vmem:[#allocation4 + $0x8] sm:$0x1] %vm408, 0.0
      %411 = vst.msk [vmem:[#allocation4 + $0x10] sm:$0x1] %vm408, 0.0
      %412 = vst.msk [vmem:[#allocation4 + $0x18] sm:$0x1] %vm408, 0.0
      %413 = vst.msk [vmem:[#allocation4 + $0x20] sm:$0x1] %vm408, 0.0
      %414 = vst.msk [vmem:[#allocation4 + $0x28] sm:$0x1] %vm408, 0.0
      %415 = vst.msk [vmem:[#allocation4 + $0x5] sm:$0x1] %vm408, 0.0
      %416 = vst.msk [vmem:[#allocation4 + $0xd] sm:$0x1] %vm408, 0.0
      %417 = vst.msk [vmem:[#allocation4 + $0x15] sm:$0x1] %vm408, 0.0
      %418 = vst.msk [vmem:[#allocation4 + $0x1d] sm:$0x1] %vm408, 0.0
      %419 = vst.msk [vmem:[#allocation4 + $0x25] sm:$0x1] %vm408, 0.0
      %420 = vst.msk [vmem:[#allocation4 + $0x2d] sm:$0x1] %vm408, 0.0
      %vm421 = vcmask 519168
      %422 = vst.msk [vmem:[#allocation5] sm:$0xf] %vm421, 0.0
      %s423 = scalar_lea.vmem [#allocation5], 12
      %424 = vst.msk [vmem:[%s423] sm:$0xf] %vm421, 0.0
      %vm425 = vcmask 516096
      %426 = vst.msk [vmem:[#allocation5] sm:$0x1] %vm425, 0.0
      %427 = vst.msk [vmem:[#allocation5 + $0x4] sm:$0x1] %vm425, 0.0
      %428 = vst.msk [vmem:[#allocation5 + $0x8] sm:$0x1] %vm425, 0.0
      %429 = vst.msk [vmem:[#allocation5 + $0xc] sm:$0x1] %vm425, 0.0
      %430 = vst.msk [vmem:[#allocation5 + $0x3] sm:$0x1] %vm425, 0.0
      %431 = vst.msk [vmem:[#allocation5 + $0x7] sm:$0x1] %vm425, 0.0
      %432 = vst.msk [vmem:[#allocation5 + $0xb] sm:$0x1] %vm425, 0.0
      %433 = vst.msk [vmem:[#allocation5 + $0xf] sm:$0x1] %vm425, 0.0
      %v434 = vld [vmem:[%s325] sm:$0xff]
      %v435 = vld [vmem:[%s325 + $0x8] sm:$0xff]
      %v436 = vld [vmem:[%s325 + $0x10] sm:$0xff]
      %v437 = vld [vmem:[%s325 + $0x18] sm:$0xff]
      %v438 = vld [vmem:[%s325 + $0x20] sm:$0xff]
      %v439 = vld [vmem:[%s325 + $0x28] sm:$0xff]
      %v440 = vld [vmem:[%s325 + $0x30] sm:$0xff]
      %v441 = vld [vmem:[%s325 + $0x38] sm:$0xff]
      %v442 = vld [vmem:[%s325 + $0x40] sm:$0xff]
      %v443 = vld [vmem:[%s325 + $0x48] sm:$0xff]
      %v444 = vld [vmem:[%s325 + $0x50] sm:$0xff]
      %v445 = vld [vmem:[%s325 + $0x58] sm:$0xff]
      %v446 = vld [vmem:[%s325 + $0x60] sm:$0xff]
      %v447 = vld [vmem:[%s325 + $0x68] sm:$0xff]
      %v448 = vld [vmem:[%s325 + $0x70] sm:$0xff]
      %v449 = vld [vmem:[%s325 + $0x78] sm:$0xff]
      %v450 = vld [vmem:[%s325 + $0x80] sm:$0xff]
      %v451 = vld [vmem:[%s325 + $0x88] sm:$0xff]
      %v452 = vld [vmem:[%s325 + $0x90] sm:$0xff]
      %v453 = vld [vmem:[%s325 + $0x98] sm:$0xff]
      %v454 = vld [vmem:[%s325 + $0xa0] sm:$0xff]
      %v455 = vld [vmem:[%s325 + $0xa8] sm:$0xff]
      %v456 = vld [vmem:[%s325 + $0xb0] sm:$0xff]
      %v457 = vld [vmem:[%s325 + $0xb8] sm:$0xff]
      %v458 = vld [vmem:[%s325 + $0xc0] sm:$0xff]
      %v459 = vld [vmem:[%s325 + $0xc8] sm:$0xff]
      %v460 = vld [vmem:[%s325 + $0xd0] sm:$0xff]
      %v461 = vld [vmem:[%s325 + $0xd8] sm:$0xff]
      %v462 = vld [vmem:[%s325 + $0xe0] sm:$0xff]
      %v463 = vld [vmem:[%s325 + $0xe8] sm:$0xff]
      %v464 = vld [vmem:[%s325 + $0xf0] sm:$0xff]
      %v465 = vld [vmem:[%s325 + $0xf8] sm:$0xff]
      %s466 = scalar_lea.vmem [#allocation2], 24
      %467 = vst.msk [vmem:[%s466 + $0x1] sm:$0xff] %vm330, %v434
      %468 = vst.msk [vmem:[%s466 + $0x9] sm:$0xff] %vm330, %v435
      %469 = vst.msk [vmem:[%s466 + $0x19] sm:$0xff] %vm330, %v436
      %470 = vst.msk [vmem:[%s466 + $0x21] sm:$0xff] %vm330, %v437
      %471 = vst.msk [vmem:[%s466 + $0x31] sm:$0xff] %vm330, %v438
      %472 = vst.msk [vmem:[%s466 + $0x39] sm:$0xff] %vm330, %v439
      %473 = vst.msk [vmem:[%s466 + $0x49] sm:$0xff] %vm330, %v440
      %474 = vst.msk [vmem:[%s466 + $0x51] sm:$0xff] %vm330, %v441
      %475 = vst.msk [vmem:[%s466 + $0x61] sm:$0xff] %vm330, %v442
      %476 = vst.msk [vmem:[%s466 + $0x69] sm:$0xff] %vm330, %v443
      %477 = vst.msk [vmem:[%s466 + $0x79] sm:$0xff] %vm330, %v444
      %478 = vst.msk [vmem:[%s466 + $0x81] sm:$0xff] %vm330, %v445
      %479 = vst.msk [vmem:[%s466 + $0x91] sm:$0xff] %vm330, %v446
      %480 = vst.msk [vmem:[%s466 + $0x99] sm:$0xff] %vm330, %v447
      %481 = vst.msk [vmem:[%s466 + $0xa9] sm:$0xff] %vm330, %v448
      %482 = vst.msk [vmem:[%s466 + $0xb1] sm:$0xff] %vm330, %v449
      %483 = vst.msk [vmem:[%s466 + $0xc1] sm:$0xff] %vm330, %v450
      %484 = vst.msk [vmem:[%s466 + $0xc9] sm:$0xff] %vm330, %v451
      %485 = vst.msk [vmem:[%s466 + $0xd9] sm:$0xff] %vm330, %v452
      %486 = vst.msk [vmem:[%s466 + $0xe1] sm:$0xff] %vm330, %v453
      %487 = vst.msk [vmem:[%s466 + $0xf1] sm:$0xff] %vm330, %v454
      %488 = vst.msk [vmem:[%s466 + $0xf9] sm:$0xff] %vm330, %v455
      %489 = vst.msk [vmem:[%s466 + $0x109] sm:$0xff] %vm330, %v456
      %490 = vst.msk [vmem:[%s466 + $0x111] sm:$0xff] %vm330, %v457
      %491 = vst.msk [vmem:[%s466 + $0x121] sm:$0xff] %vm330, %v458
      %492 = vst.msk [vmem:[%s466 + $0x129] sm:$0xff] %vm330, %v459
      %493 = vst.msk [vmem:[%s466 + $0x139] sm:$0xff] %vm330, %v460
      %494 = vst.msk [vmem:[%s466 + $0x141] sm:$0xff] %vm330, %v461
      %495 = vst.msk [vmem:[%s466 + $0x151] sm:$0xff] %vm330, %v462
      %496 = vst.msk [vmem:[%s466 + $0x159] sm:$0xff] %vm330, %v463
      %497 = vst.msk [vmem:[%s466 + $0x169] sm:$0xff] %vm330, %v464
      %498 = vst.msk [vmem:[%s466 + $0x171] sm:$0xff] %vm330, %v465
      %v499 = vld [vmem:[#allocation2] sm:$0xff]
      %v500 = vld [vmem:[#allocation2 + $0x8] sm:$0xff]
      %v501 = vld [vmem:[#allocation2 + $0x18] sm:$0xff]
      %v502 = vld [vmem:[#allocation2 + $0x20] sm:$0xff]
      %v503 = vld [vmem:[#allocation2 + $0x30] sm:$0xff]
      %v504 = vld [vmem:[#allocation2 + $0x38] sm:$0xff]
      %v505 = vld [vmem:[#allocation2 + $0x48] sm:$0xff]
      %v506 = vld [vmem:[#allocation2 + $0x50] sm:$0xff]
      %v507 = vld [vmem:[#allocation2 + $0x60] sm:$0xff]
      %v508 = vld [vmem:[#allocation2 + $0x68] sm:$0xff]
      %v509 = vld [vmem:[#allocation2 + $0x78] sm:$0xff]
      %v510 = vld [vmem:[#allocation2 + $0x80] sm:$0xff]
      %v511 = vld [vmem:[#allocation2 + $0x90] sm:$0xff]
      %v512 = vld [vmem:[#allocation2 + $0x98] sm:$0xff]
      %v513 = vld [vmem:[#allocation2 + $0xa8] sm:$0xff]
      %v514 = vld [vmem:[#allocation2 + $0xb0] sm:$0xff]
      %v515 = vld [vmem:[#allocation2 + $0xc0] sm:$0xff]
      %v516 = vld [vmem:[#allocation2 + $0xc8] sm:$0xff]
      %v517 = vld [vmem:[#allocation2 + $0xd8] sm:$0xff]
      %v518 = vld [vmem:[#allocation2 + $0xe0] sm:$0xff]
      %v519 = vld [vmem:[#allocation2 + $0xf0] sm:$0xff]
      %v520 = vld [vmem:[#allocation2 + $0xf8] sm:$0xff]
      %v521 = vld [vmem:[#allocation2 + $0x108] sm:$0xff]
      %v522 = vld [vmem:[#allocation2 + $0x110] sm:$0xff]
      %v523 = vld [vmem:[#allocation2 + $0x120] sm:$0xff]
      %v524 = vld [vmem:[#allocation2 + $0x128] sm:$0xff]
      %v525 = vld [vmem:[#allocation2 + $0x138] sm:$0xff]
      %v526 = vld [vmem:[#allocation2 + $0x140] sm:$0xff]
      %v527 = vld [vmem:[#allocation2 + $0x150] sm:$0xff]
      %v528 = vld [vmem:[#allocation2 + $0x158] sm:$0xff]
      %v529 = vld [vmem:[#allocation2 + $0x168] sm:$0xff]
      %v530 = vld [vmem:[#allocation2 + $0x170] sm:$0xff]
      %v531 = vpack.c.bf16 %v500, %v499
      %v532 = vpack.c.bf16 %v502, %v501
      %v533 = vpack.c.bf16 %v504, %v503
      %v534 = vpack.c.bf16 %v506, %v505
      %v535 = vpack.c.bf16 %v508, %v507
      %v536 = vpack.c.bf16 %v510, %v509
      %v537 = vpack.c.bf16 %v512, %v511
      %v538 = vpack.c.bf16 %v514, %v513
      %v539 = vpack.c.bf16 %v516, %v515
      %v540 = vpack.c.bf16 %v518, %v517
      %v541 = vpack.c.bf16 %v520, %v519
      %v542 = vpack.c.bf16 %v522, %v521
      %v543 = vpack.c.bf16 %v524, %v523
      %v544 = vpack.c.bf16 %v526, %v525
      %v545 = vpack.c.bf16 %v528, %v527
      %v546 = vpack.c.bf16 %v530, %v529
      %v547 = vld [vmem:[#allocation2 + $0x1] sm:$0xff]
      %v548 = vld [vmem:[#allocation2 + $0x9] sm:$0xff]
      %v549 = vld [vmem:[#allocation2 + $0x19] sm:$0xff]
      %v550 = vld [vmem:[#allocation2 + $0x21] sm:$0xff]
      %v551 = vld [vmem:[#allocation2 + $0x31] sm:$0xff]
      %v552 = vld [vmem:[#allocation2 + $0x39] sm:$0xff]
      %v553 = vld [vmem:[#allocation2 + $0x49] sm:$0xff]
      %v554 = vld [vmem:[#allocation2 + $0x51] sm:$0xff]
      %v555 = vld [vmem:[#allocation2 + $0x61] sm:$0xff]
      %v556 = vld [vmem:[#allocation2 + $0x69] sm:$0xff]
      %v557 = vld [vmem:[#allocation2 + $0x79] sm:$0xff]
      %v558 = vld [vmem:[#allocation2 + $0x81] sm:$0xff]
      %v559 = vld [vmem:[#allocation2 + $0x91] sm:$0xff]
      %v560 = vld [vmem:[#allocation2 + $0x99] sm:$0xff]
      %v561 = vld [vmem:[#allocation2 + $0xa9] sm:$0xff]
      %v562 = vld [vmem:[#allocation2 + $0xb1] sm:$0xff]
      %v563 = vld [vmem:[#allocation2 + $0xc1] sm:$0xff]
      %v564 = vld [vmem:[#allocation2 + $0xc9] sm:$0xff]
      %v565 = vld [vmem:[#allocation2 + $0xd9] sm:$0xff]
      %v566 = vld [vmem:[#allocation2 + $0xe1] sm:$0xff]
      %v567 = vld [vmem:[#allocation2 + $0xf1] sm:$0xff]
      %v568 = vld [vmem:[#allocation2 + $0xf9] sm:$0xff]
      %v569 = vld [vmem:[#allocation2 + $0x109] sm:$0xff]
      %v570 = vld [vmem:[#allocation2 + $0x111] sm:$0xff]
      %v571 = vld [vmem:[#allocation2 + $0x121] sm:$0xff]
      %v572 = vld [vmem:[#allocation2 + $0x129] sm:$0xff]
      %v573 = vld [vmem:[#allocation2 + $0x139] sm:$0xff]
      %v574 = vld [vmem:[#allocation2 + $0x141] sm:$0xff]
      %v575 = vld [vmem:[#allocation2 + $0x151] sm:$0xff]
      %v576 = vld [vmem:[#allocation2 + $0x159] sm:$0xff]
      %v577 = vld [vmem:[#allocation2 + $0x169] sm:$0xff]
      %v578 = vld [vmem:[#allocation2 + $0x171] sm:$0xff]
      %v579 = vpack.c.bf16 %v548, %v547
      %v580 = vpack.c.bf16 %v550, %v549
      %v581 = vpack.c.bf16 %v552, %v551
      %v582 = vpack.c.bf16 %v554, %v553
      %v583 = vpack.c.bf16 %v556, %v555
      %v584 = vpack.c.bf16 %v558, %v557
      %v585 = vpack.c.bf16 %v560, %v559
      %v586 = vpack.c.bf16 %v562, %v561
      %v587 = vpack.c.bf16 %v564, %v563
      %v588 = vpack.c.bf16 %v566, %v565
      %v589 = vpack.c.bf16 %v568, %v567
      %v590 = vpack.c.bf16 %v570, %v569
      %v591 = vpack.c.bf16 %v572, %v571
      %v592 = vpack.c.bf16 %v574, %v573
      %v593 = vpack.c.bf16 %v576, %v575
      %v594 = vpack.c.bf16 %v578, %v577
      %v595 = vld [vmem:[#allocation2 + $0x2] sm:$0xff]
      %v596 = vld [vmem:[#allocation2 + $0xa] sm:$0xff]
      %v597 = vld [vmem:[#allocation2 + $0x1a] sm:$0xff]
      %v598 = vld [vmem:[#allocation2 + $0x22] sm:$0xff]
      %v599 = vld [vmem:[#allocation2 + $0x32] sm:$0xff]
      %v600 = vld [vmem:[#allocation2 + $0x3a] sm:$0xff]
      %v601 = vld [vmem:[#allocation2 + $0x4a] sm:$0xff]
      %v602 = vld [vmem:[#allocation2 + $0x52] sm:$0xff]
      %v603 = vld [vmem:[#allocation2 + $0x62] sm:$0xff]
      %v604 = vld [vmem:[#allocation2 + $0x6a] sm:$0xff]
      %v605 = vld [vmem:[#allocation2 + $0x7a] sm:$0xff]
      %v606 = vld [vmem:[#allocation2 + $0x82] sm:$0xff]
      %v607 = vld [vmem:[#allocation2 + $0x92] sm:$0xff]
      %v608 = vld [vmem:[#allocation2 + $0x9a] sm:$0xff]
      %v609 = vld [vmem:[#allocation2 + $0xaa] sm:$0xff]
      %v610 = vld [vmem:[#allocation2 + $0xb2] sm:$0xff]
      %v611 = vld [vmem:[#allocation2 + $0xc2] sm:$0xff]
      %v612 = vld [vmem:[#allocation2 + $0xca] sm:$0xff]
      %v613 = vld [vmem:[#allocation2 + $0xda] sm:$0xff]
      %v614 = vld [vmem:[#allocation2 + $0xe2] sm:$0xff]
      %v615 = vld [vmem:[#allocation2 + $0xf2] sm:$0xff]
      %v616 = vld [vmem:[#allocation2 + $0xfa] sm:$0xff]
      %v617 = vld [vmem:[#allocation2 + $0x10a] sm:$0xff]
      %v618 = vld [vmem:[#allocation2 + $0x112] sm:$0xff]
      %v619 = vld [vmem:[#allocation2 + $0x122] sm:$0xff]
      %v620 = vld [vmem:[#allocation2 + $0x12a] sm:$0xff]
      %v621 = vld [vmem:[#allocation2 + $0x13a] sm:$0xff]
      %v622 = vld [vmem:[#allocation2 + $0x142] sm:$0xff]
      %v623 = vld [vmem:[#allocation2 + $0x152] sm:$0xff]
      %v624 = vld [vmem:[#allocation2 + $0x15a] sm:$0xff]
      %v625 = vld [vmem:[#allocation2 + $0x16a] sm:$0xff]
      %v626 = vld [vmem:[#allocation2 + $0x172] sm:$0xff]
      %v627 = vpack.c.bf16 %v596, %v595
      %v628 = vpack.c.bf16 %v598, %v597
      %v629 = vpack.c.bf16 %v600, %v599
      %v630 = vpack.c.bf16 %v602, %v601
      %v631 = vpack.c.bf16 %v604, %v603
      %v632 = vpack.c.bf16 %v606, %v605
      %v633 = vpack.c.bf16 %v608, %v607
      %v634 = vpack.c.bf16 %v610, %v609
      %v635 = vpack.c.bf16 %v612, %v611
      %v636 = vpack.c.bf16 %v614, %v613
      %v637 = vpack.c.bf16 %v616, %v615
      %v638 = vpack.c.bf16 %v618, %v617
      %v639 = vpack.c.bf16 %v620, %v619
      %v640 = vpack.c.bf16 %v622, %v621
      %v641 = vpack.c.bf16 %v624, %v623
      %v642 = vpack.c.bf16 %v626, %v625
      %v643 = vld [vmem:[%s466] sm:$0xff]
      %v644 = vld [vmem:[%s466 + $0x8] sm:$0xff]
      %v645 = vld [vmem:[%s466 + $0x18] sm:$0xff]
      %v646 = vld [vmem:[%s466 + $0x20] sm:$0xff]
      %v647 = vld [vmem:[%s466 + $0x30] sm:$0xff]
      %v648 = vld [vmem:[%s466 + $0x38] sm:$0xff]
      %v649 = vld [vmem:[%s466 + $0x48] sm:$0xff]
      %v650 = vld [vmem:[%s466 + $0x50] sm:$0xff]
      %v651 = vld [vmem:[%s466 + $0x60] sm:$0xff]
      %v652 = vld [vmem:[%s466 + $0x68] sm:$0xff]
      %v653 = vld [vmem:[%s466 + $0x78] sm:$0xff]
      %v654 = vld [vmem:[%s466 + $0x80] sm:$0xff]
      %v655 = vld [vmem:[%s466 + $0x90] sm:$0xff]
      %v656 = vld [vmem:[%s466 + $0x98] sm:$0xff]
      %v657 = vld [vmem:[%s466 + $0xa8] sm:$0xff]
      %v658 = vld [vmem:[%s466 + $0xb0] sm:$0xff]
      %v659 = vld [vmem:[%s466 + $0xc0] sm:$0xff]
      %v660 = vld [vmem:[%s466 + $0xc8] sm:$0xff]
      %v661 = vld [vmem:[%s466 + $0xd8] sm:$0xff]
      %v662 = vld [vmem:[%s466 + $0xe0] sm:$0xff]
      %v663 = vld [vmem:[%s466 + $0xf0] sm:$0xff]
      %v664 = vld [vmem:[%s466 + $0xf8] sm:$0xff]
      %v665 = vld [vmem:[%s466 + $0x108] sm:$0xff]
      %v666 = vld [vmem:[%s466 + $0x110] sm:$0xff]
      %v667 = vld [vmem:[%s466 + $0x120] sm:$0xff]
      %v668 = vld [vmem:[%s466 + $0x128] sm:$0xff]
      %v669 = vld [vmem:[%s466 + $0x138] sm:$0xff]
      %v670 = vld [vmem:[%s466 + $0x140] sm:$0xff]
      %v671 = vld [vmem:[%s466 + $0x150] sm:$0xff]
      %v672 = vld [vmem:[%s466 + $0x158] sm:$0xff]
      %v673 = vld [vmem:[%s466 + $0x168] sm:$0xff]
      %v674 = vld [vmem:[%s466 + $0x170] sm:$0xff]
      %v675 = vpack.c.bf16 %v644, %v643
      %v676 = vpack.c.bf16 %v646, %v645
      %v677 = vpack.c.bf16 %v648, %v647
      %v678 = vpack.c.bf16 %v650, %v649
      %v679 = vpack.c.bf16 %v652, %v651
      %v680 = vpack.c.bf16 %v654, %v653
      %v681 = vpack.c.bf16 %v656, %v655
      %v682 = vpack.c.bf16 %v658, %v657
      %v683 = vpack.c.bf16 %v660, %v659
      %v684 = vpack.c.bf16 %v662, %v661
      %v685 = vpack.c.bf16 %v664, %v663
      %v686 = vpack.c.bf16 %v666, %v665
      %v687 = vpack.c.bf16 %v668, %v667
      %v688 = vpack.c.bf16 %v670, %v669
      %v689 = vpack.c.bf16 %v672, %v671
      %v690 = vpack.c.bf16 %v674, %v673
      %v691 = vld [vmem:[%s466 + $0x1] sm:$0xff]
      %v692 = vld [vmem:[%s466 + $0x9] sm:$0xff]
      %v693 = vld [vmem:[%s466 + $0x19] sm:$0xff]
      %v694 = vld [vmem:[%s466 + $0x21] sm:$0xff]
      %v695 = vld [vmem:[%s466 + $0x31] sm:$0xff]
      %v696 = vld [vmem:[%s466 + $0x39] sm:$0xff]
      %v697 = vld [vmem:[%s466 + $0x49] sm:$0xff]
      %v698 = vld [vmem:[%s466 + $0x51] sm:$0xff]
      %v699 = vld [vmem:[%s466 + $0x61] sm:$0xff]
      %v700 = vld [vmem:[%s466 + $0x69] sm:$0xff]
      %v701 = vld [vmem:[%s466 + $0x79] sm:$0xff]
      %v702 = vld [vmem:[%s466 + $0x81] sm:$0xff]
      %v703 = vld [vmem:[%s466 + $0x91] sm:$0xff]
      %v704 = vld [vmem:[%s466 + $0x99] sm:$0xff]
      %v705 = vld [vmem:[%s466 + $0xa9] sm:$0xff]
      %v706 = vld [vmem:[%s466 + $0xb1] sm:$0xff]
      %v707 = vld [vmem:[%s466 + $0xc1] sm:$0xff]
      %v708 = vld [vmem:[%s466 + $0xc9] sm:$0xff]
      %v709 = vld [vmem:[%s466 + $0xd9] sm:$0xff]
      %v710 = vld [vmem:[%s466 + $0xe1] sm:$0xff]
      %v711 = vld [vmem:[%s466 + $0xf1] sm:$0xff]
      %v712 = vld [vmem:[%s466 + $0xf9] sm:$0xff]
      %v713 = vld [vmem:[%s466 + $0x109] sm:$0xff]
      %v714 = vld [vmem:[%s466 + $0x111] sm:$0xff]
      %v715 = vld [vmem:[%s466 + $0x121] sm:$0xff]
      %v716 = vld [vmem:[%s466 + $0x129] sm:$0xff]
      %v717 = vld [vmem:[%s466 + $0x139] sm:$0xff]
      %v718 = vld [vmem:[%s466 + $0x141] sm:$0xff]
      %v719 = vld [vmem:[%s466 + $0x151] sm:$0xff]
      %v720 = vld [vmem:[%s466 + $0x159] sm:$0xff]
      %v721 = vld [vmem:[%s466 + $0x169] sm:$0xff]
      %v722 = vld [vmem:[%s466 + $0x171] sm:$0xff]
      %v723 = vpack.c.bf16 %v692, %v691
      %v724 = vpack.c.bf16 %v694, %v693
      %v725 = vpack.c.bf16 %v696, %v695
      %v726 = vpack.c.bf16 %v698, %v697
      %v727 = vpack.c.bf16 %v700, %v699
      %v728 = vpack.c.bf16 %v702, %v701
      %v729 = vpack.c.bf16 %v704, %v703
      %v730 = vpack.c.bf16 %v706, %v705
      %v731 = vpack.c.bf16 %v708, %v707
      %v732 = vpack.c.bf16 %v710, %v709
      %v733 = vpack.c.bf16 %v712, %v711
      %v734 = vpack.c.bf16 %v714, %v713
      %v735 = vpack.c.bf16 %v716, %v715
      %v736 = vpack.c.bf16 %v718, %v717
      %v737 = vpack.c.bf16 %v720, %v719
      %v738 = vpack.c.bf16 %v722, %v721
      %v739 = vld [vmem:[%s466 + $0x2] sm:$0xff]
      %v740 = vld [vmem:[%s466 + $0xa] sm:$0xff]
      %v741 = vld [vmem:[%s466 + $0x1a] sm:$0xff]
      %v742 = vld [vmem:[%s466 + $0x22] sm:$0xff]
      %v743 = vld [vmem:[%s466 + $0x32] sm:$0xff]
      %v744 = vld [vmem:[%s466 + $0x3a] sm:$0xff]
      %v745 = vld [vmem:[%s466 + $0x4a] sm:$0xff]
      %v746 = vld [vmem:[%s466 + $0x52] sm:$0xff]
      %v747 = vld [vmem:[%s466 + $0x62] sm:$0xff]
      %v748 = vld [vmem:[%s466 + $0x6a] sm:$0xff]
      %v749 = vld [vmem:[%s466 + $0x7a] sm:$0xff]
      %v750 = vld [vmem:[%s466 + $0x82] sm:$0xff]
      %v751 = vld [vmem:[%s466 + $0x92] sm:$0xff]
      %v752 = vld [vmem:[%s466 + $0x9a] sm:$0xff]
      %v753 = vld [vmem:[%s466 + $0xaa] sm:$0xff]
      %v754 = vld [vmem:[%s466 + $0xb2] sm:$0xff]
      %v755 = vld [vmem:[%s466 + $0xc2] sm:$0xff]
      %v756 = vld [vmem:[%s466 + $0xca] sm:$0xff]
      %v757 = vld [vmem:[%s466 + $0xda] sm:$0xff]
      %v758 = vld [vmem:[%s466 + $0xe2] sm:$0xff]
      %v759 = vld [vmem:[%s466 + $0xf2] sm:$0xff]
      %v760 = vld [vmem:[%s466 + $0xfa] sm:$0xff]
      %v761 = vld [vmem:[%s466 + $0x10a] sm:$0xff]
      %v762 = vld [vmem:[%s466 + $0x112] sm:$0xff]
      %v763 = vld [vmem:[%s466 + $0x122] sm:$0xff]
      %v764 = vld [vmem:[%s466 + $0x12a] sm:$0xff]
      %v765 = vld [vmem:[%s466 + $0x13a] sm:$0xff]
      %v766 = vld [vmem:[%s466 + $0x142] sm:$0xff]
      %v767 = vld [vmem:[%s466 + $0x152] sm:$0xff]
      %v768 = vld [vmem:[%s466 + $0x15a] sm:$0xff]
      %v769 = vld [vmem:[%s466 + $0x16a] sm:$0xff]
      %v770 = vld [vmem:[%s466 + $0x172] sm:$0xff]
      %v771 = vpack.c.bf16 %v740, %v739
      %v772 = vpack.c.bf16 %v742, %v741
      %v773 = vpack.c.bf16 %v744, %v743
      %v774 = vpack.c.bf16 %v746, %v745
      %v775 = vpack.c.bf16 %v748, %v747
      %v776 = vpack.c.bf16 %v750, %v749
      %v777 = vpack.c.bf16 %v752, %v751
      %v778 = vpack.c.bf16 %v754, %v753
      %v779 = vpack.c.bf16 %v756, %v755
      %v780 = vpack.c.bf16 %v758, %v757
      %v781 = vpack.c.bf16 %v760, %v759
      %v782 = vpack.c.bf16 %v762, %v761
      %v783 = vpack.c.bf16 %v764, %v763
      %v784 = vpack.c.bf16 %v766, %v765
      %v785 = vpack.c.bf16 %v768, %v767
      %v786 = vpack.c.bf16 %v770, %v769
      %s787 = scalar_lea.vmem [#allocation2], 48
      %v788 = vld [vmem:[%s787] sm:$0xff]
      %v789 = vld [vmem:[%s787 + $0x8] sm:$0xff]
      %v790 = vld [vmem:[%s787 + $0x18] sm:$0xff]
      %v791 = vld [vmem:[%s787 + $0x20] sm:$0xff]
      %v792 = vld [vmem:[%s787 + $0x30] sm:$0xff]
      %v793 = vld [vmem:[%s787 + $0x38] sm:$0xff]
      %v794 = vld [vmem:[%s787 + $0x48] sm:$0xff]
      %v795 = vld [vmem:[%s787 + $0x50] sm:$0xff]
      %v796 = vld [vmem:[%s787 + $0x60] sm:$0xff]
      %v797 = vld [vmem:[%s787 + $0x68] sm:$0xff]
      %v798 = vld [vmem:[%s787 + $0x78] sm:$0xff]
      %v799 = vld [vmem:[%s787 + $0x80] sm:$0xff]
      %v800 = vld [vmem:[%s787 + $0x90] sm:$0xff]
      %v801 = vld [vmem:[%s787 + $0x98] sm:$0xff]
      %v802 = vld [vmem:[%s787 + $0xa8] sm:$0xff]
      %v803 = vld [vmem:[%s787 + $0xb0] sm:$0xff]
      %v804 = vld [vmem:[%s787 + $0xc0] sm:$0xff]
      %v805 = vld [vmem:[%s787 + $0xc8] sm:$0xff]
      %v806 = vld [vmem:[%s787 + $0xd8] sm:$0xff]
      %v807 = vld [vmem:[%s787 + $0xe0] sm:$0xff]
      %v808 = vld [vmem:[%s787 + $0xf0] sm:$0xff]
      %v809 = vld [vmem:[%s787 + $0xf8] sm:$0xff]
      %v810 = vld [vmem:[%s787 + $0x108] sm:$0xff]
      %v811 = vld [vmem:[%s787 + $0x110] sm:$0xff]
      %v812 = vld [vmem:[%s787 + $0x120] sm:$0xff]
      %v813 = vld [vmem:[%s787 + $0x128] sm:$0xff]
      %v814 = vld [vmem:[%s787 + $0x138] sm:$0xff]
      %v815 = vld [vmem:[%s787 + $0x140] sm:$0xff]
      %v816 = vld [vmem:[%s787 + $0x150] sm:$0xff]
      %v817 = vld [vmem:[%s787 + $0x158] sm:$0xff]
      %v818 = vld [vmem:[%s787 + $0x168] sm:$0xff]
      %v819 = vld [vmem:[%s787 + $0x170] sm:$0xff]
      %v820 = vpack.c.bf16 %v789, %v788
      %v821 = vpack.c.bf16 %v791, %v790
      %v822 = vpack.c.bf16 %v793, %v792
      %v823 = vpack.c.bf16 %v795, %v794
      %v824 = vpack.c.bf16 %v797, %v796
      %v825 = vpack.c.bf16 %v799, %v798
      %v826 = vpack.c.bf16 %v801, %v800
      %v827 = vpack.c.bf16 %v803, %v802
      %v828 = vpack.c.bf16 %v805, %v804
      %v829 = vpack.c.bf16 %v807, %v806
      %v830 = vpack.c.bf16 %v809, %v808
      %v831 = vpack.c.bf16 %v811, %v810
      %v832 = vpack.c.bf16 %v813, %v812
      %v833 = vpack.c.bf16 %v815, %v814
      %v834 = vpack.c.bf16 %v817, %v816
      %v835 = vpack.c.bf16 %v819, %v818
      %v836 = vld [vmem:[%s787 + $0x1] sm:$0xff]
      %v837 = vld [vmem:[%s787 + $0x9] sm:$0xff]
      %v838 = vld [vmem:[%s787 + $0x19] sm:$0xff]
      %v839 = vld [vmem:[%s787 + $0x21] sm:$0xff]
      %v840 = vld [vmem:[%s787 + $0x31] sm:$0xff]
      %v841 = vld [vmem:[%s787 + $0x39] sm:$0xff]
      %v842 = vld [vmem:[%s787 + $0x49] sm:$0xff]
      %v843 = vld [vmem:[%s787 + $0x51] sm:$0xff]
      %v844 = vld [vmem:[%s787 + $0x61] sm:$0xff]
      %v845 = vld [vmem:[%s787 + $0x69] sm:$0xff]
      %v846 = vld [vmem:[%s787 + $0x79] sm:$0xff]
      %v847 = vld [vmem:[%s787 + $0x81] sm:$0xff]
      %v848 = vld [vmem:[%s787 + $0x91] sm:$0xff]
      %v849 = vld [vmem:[%s787 + $0x99] sm:$0xff]
      %v850 = vld [vmem:[%s787 + $0xa9] sm:$0xff]
      %v851 = vld [vmem:[%s787 + $0xb1] sm:$0xff]
      %v852 = vld [vmem:[%s787 + $0xc1] sm:$0xff]
      %v853 = vld [vmem:[%s787 + $0xc9] sm:$0xff]
      %v854 = vld [vmem:[%s787 + $0xd9] sm:$0xff]
      %v855 = vld [vmem:[%s787 + $0xe1] sm:$0xff]
      %v856 = vld [vmem:[%s787 + $0xf1] sm:$0xff]
      %v857 = vld [vmem:[%s787 + $0xf9] sm:$0xff]
      %v858 = vld [vmem:[%s787 + $0x109] sm:$0xff]
      %v859 = vld [vmem:[%s787 + $0x111] sm:$0xff]
      %v860 = vld [vmem:[%s787 + $0x121] sm:$0xff]
      %v861 = vld [vmem:[%s787 + $0x129] sm:$0xff]
      %v862 = vld [vmem:[%s787 + $0x139] sm:$0xff]
      %v863 = vld [vmem:[%s787 + $0x141] sm:$0xff]
      %v864 = vld [vmem:[%s787 + $0x151] sm:$0xff]
      %v865 = vld [vmem:[%s787 + $0x159] sm:$0xff]
      %v866 = vld [vmem:[%s787 + $0x169] sm:$0xff]
      %v867 = vld [vmem:[%s787 + $0x171] sm:$0xff]
      %v868 = vpack.c.bf16 %v837, %v836
      %v869 = vpack.c.bf16 %v839, %v838
      %v870 = vpack.c.bf16 %v841, %v840
      %v871 = vpack.c.bf16 %v843, %v842
      %v872 = vpack.c.bf16 %v845, %v844
      %v873 = vpack.c.bf16 %v847, %v846
      %v874 = vpack.c.bf16 %v849, %v848
      %v875 = vpack.c.bf16 %v851, %v850
      %v876 = vpack.c.bf16 %v853, %v852
      %v877 = vpack.c.bf16 %v855, %v854
      %v878 = vpack.c.bf16 %v857, %v856
      %v879 = vpack.c.bf16 %v859, %v858
      %v880 = vpack.c.bf16 %v861, %v860
      %v881 = vpack.c.bf16 %v863, %v862
      %v882 = vpack.c.bf16 %v865, %v864
      %v883 = vpack.c.bf16 %v867, %v866
      %v884 = vld [vmem:[%s787 + $0x2] sm:$0xff]
      %v885 = vld [vmem:[%s787 + $0xa] sm:$0xff]
      %v886 = vld [vmem:[%s787 + $0x1a] sm:$0xff]
      %v887 = vld [vmem:[%s787 + $0x22] sm:$0xff]
      %v888 = vld [vmem:[%s787 + $0x32] sm:$0xff]
      %v889 = vld [vmem:[%s787 + $0x3a] sm:$0xff]
      %v890 = vld [vmem:[%s787 + $0x4a] sm:$0xff]
      %v891 = vld [vmem:[%s787 + $0x52] sm:$0xff]
      %v892 = vld [vmem:[%s787 + $0x62] sm:$0xff]
      %v893 = vld [vmem:[%s787 + $0x6a] sm:$0xff]
      %v894 = vld [vmem:[%s787 + $0x7a] sm:$0xff]
      %v895 = vld [vmem:[%s787 + $0x82] sm:$0xff]
      %v896 = vld [vmem:[%s787 + $0x92] sm:$0xff]
      %v897 = vld [vmem:[%s787 + $0x9a] sm:$0xff]
      %v898 = vld [vmem:[%s787 + $0xaa] sm:$0xff]
      %v899 = vld [vmem:[%s787 + $0xb2] sm:$0xff]
      %v900 = vld [vmem:[%s787 + $0xc2] sm:$0xff]
      %v901 = vld [vmem:[%s787 + $0xca] sm:$0xff]
      %v902 = vld [vmem:[%s787 + $0xda] sm:$0xff]
      %v903 = vld [vmem:[%s787 + $0xe2] sm:$0xff]
      %v904 = vld [vmem:[%s787 + $0xf2] sm:$0xff]
      %v905 = vld [vmem:[%s787 + $0xfa] sm:$0xff]
      %v906 = vld [vmem:[%s787 + $0x10a] sm:$0xff]
      %v907 = vld [vmem:[%s787 + $0x112] sm:$0xff]
      %v908 = vld [vmem:[%s787 + $0x122] sm:$0xff]
      %v909 = vld [vmem:[%s787 + $0x12a] sm:$0xff]
      %v910 = vld [vmem:[%s787 + $0x13a] sm:$0xff]
      %v911 = vld [vmem:[%s787 + $0x142] sm:$0xff]
      %v912 = vld [vmem:[%s787 + $0x152] sm:$0xff]
      %v913 = vld [vmem:[%s787 + $0x15a] sm:$0xff]
      %v914 = vld [vmem:[%s787 + $0x16a] sm:$0xff]
      %v915 = vld [vmem:[%s787 + $0x172] sm:$0xff]
      %v916 = vpack.c.bf16 %v885, %v884
      %v917 = vpack.c.bf16 %v887, %v886
      %v918 = vpack.c.bf16 %v889, %v888
      %v919 = vpack.c.bf16 %v891, %v890
      %v920 = vpack.c.bf16 %v893, %v892
      %v921 = vpack.c.bf16 %v895, %v894
      %v922 = vpack.c.bf16 %v897, %v896
      %v923 = vpack.c.bf16 %v899, %v898
      %v924 = vpack.c.bf16 %v901, %v900
      %v925 = vpack.c.bf16 %v903, %v902
      %v926 = vpack.c.bf16 %v905, %v904
      %v927 = vpack.c.bf16 %v907, %v906
      %v928 = vpack.c.bf16 %v909, %v908
      %v929 = vpack.c.bf16 %v911, %v910
      %v930 = vpack.c.bf16 %v913, %v912
      %v931 = vpack.c.bf16 %v915, %v914
      %948 = vrot.lane.b32.xlu0 %v579, 3
      %v949 = vpop.permute.xlu0 %948
      %950 = vrot.lane.b32.xlu0 %v580, 3
      %v951 = vpop.permute.xlu0 %950
      %952 = vrot.lane.b32.xlu0 %v581, 3
      %v953 = vpop.permute.xlu0 %952
      %954 = vrot.lane.b32.xlu0 %v582, 3
      %v955 = vpop.permute.xlu0 %954
      %956 = vrot.lane.b32.xlu0 %v583, 3
      %v957 = vpop.permute.xlu0 %956
      %958 = vrot.lane.b32.xlu0 %v584, 3
      %v959 = vpop.permute.xlu0 %958
      %960 = vrot.lane.b32.xlu0 %v585, 3
      %v961 = vpop.permute.xlu0 %960
      %962 = vrot.lane.b32.xlu0 %v586, 3
      %v963 = vpop.permute.xlu0 %962
      %964 = vrot.lane.b32.xlu0 %v587, 3
      %v965 = vpop.permute.xlu0 %964
      %966 = vrot.lane.b32.xlu0 %v588, 3
      %v967 = vpop.permute.xlu0 %966
      %968 = vrot.lane.b32.xlu0 %v589, 3
      %v969 = vpop.permute.xlu0 %968
      %970 = vrot.lane.b32.xlu0 %v590, 3
      %v971 = vpop.permute.xlu0 %970
      %972 = vrot.lane.b32.xlu0 %v591, 3
      %v973 = vpop.permute.xlu0 %972
      %974 = vrot.lane.b32.xlu0 %v592, 3
      %v975 = vpop.permute.xlu0 %974
      %976 = vrot.lane.b32.xlu0 %v593, 3
      %v977 = vpop.permute.xlu0 %976
      %978 = vrot.lane.b32.xlu0 %v594, 3
      %v979 = vpop.permute.xlu0 %978
      %996 = vrot.lane.b32.xlu0 %v627, 6
      %v997 = vpop.permute.xlu0 %996
      %998 = vrot.lane.b32.xlu0 %v628, 6
      %v999 = vpop.permute.xlu0 %998
      %1000 = vrot.lane.b32.xlu0 %v629, 6
      %v1001 = vpop.permute.xlu0 %1000
      %1002 = vrot.lane.b32.xlu0 %v630, 6
      %v1003 = vpop.permute.xlu0 %1002
      %1004 = vrot.lane.b32.xlu0 %v631, 6
      %v1005 = vpop.permute.xlu0 %1004
      %1006 = vrot.lane.b32.xlu0 %v632, 6
      %v1007 = vpop.permute.xlu0 %1006
      %1008 = vrot.lane.b32.xlu0 %v633, 6
      %v1009 = vpop.permute.xlu0 %1008
      %1010 = vrot.lane.b32.xlu0 %v634, 6
      %v1011 = vpop.permute.xlu0 %1010
      %1012 = vrot.lane.b32.xlu0 %v635, 6
      %v1013 = vpop.permute.xlu0 %1012
      %1014 = vrot.lane.b32.xlu0 %v636, 6
      %v1015 = vpop.permute.xlu0 %1014
      %1016 = vrot.lane.b32.xlu0 %v637, 6
      %v1017 = vpop.permute.xlu0 %1016
      %1018 = vrot.lane.b32.xlu0 %v638, 6
      %v1019 = vpop.permute.xlu0 %1018
      %1020 = vrot.lane.b32.xlu0 %v639, 6
      %v1021 = vpop.permute.xlu0 %1020
      %1022 = vrot.lane.b32.xlu0 %v640, 6
      %v1023 = vpop.permute.xlu0 %1022
      %1024 = vrot.lane.b32.xlu0 %v641, 6
      %v1025 = vpop.permute.xlu0 %1024
      %1026 = vrot.lane.b32.xlu0 %v642, 6
      %v1027 = vpop.permute.xlu0 %1026
      %1044 = vrot.lane.b32.xlu0 %v675, 9
      %v1045 = vpop.permute.xlu0 %1044
      %1046 = vrot.lane.b32.xlu0 %v676, 9
      %v1047 = vpop.permute.xlu0 %1046
      %1048 = vrot.lane.b32.xlu0 %v677, 9
      %v1049 = vpop.permute.xlu0 %1048
      %1050 = vrot.lane.b32.xlu0 %v678, 9
      %v1051 = vpop.permute.xlu0 %1050
      %1052 = vrot.lane.b32.xlu0 %v679, 9
      %v1053 = vpop.permute.xlu0 %1052
      %1054 = vrot.lane.b32.xlu0 %v680, 9
      %v1055 = vpop.permute.xlu0 %1054
      %1056 = vrot.lane.b32.xlu0 %v681, 9
      %v1057 = vpop.permute.xlu0 %1056
      %1058 = vrot.lane.b32.xlu0 %v682, 9
      %v1059 = vpop.permute.xlu0 %1058
      %1060 = vrot.lane.b32.xlu0 %v683, 9
      %v1061 = vpop.permute.xlu0 %1060
      %1062 = vrot.lane.b32.xlu0 %v684, 9
      %v1063 = vpop.permute.xlu0 %1062
      %1064 = vrot.lane.b32.xlu0 %v685, 9
      %v1065 = vpop.permute.xlu0 %1064
      %1066 = vrot.lane.b32.xlu0 %v686, 9
      %v1067 = vpop.permute.xlu0 %1066
      %1068 = vrot.lane.b32.xlu0 %v687, 9
      %v1069 = vpop.permute.xlu0 %1068
      %1070 = vrot.lane.b32.xlu0 %v688, 9
      %v1071 = vpop.permute.xlu0 %1070
      %1072 = vrot.lane.b32.xlu0 %v689, 9
      %v1073 = vpop.permute.xlu0 %1072
      %1074 = vrot.lane.b32.xlu0 %v690, 9
      %v1075 = vpop.permute.xlu0 %1074
      %1092 = vrot.lane.b32.xlu0 %v723, 12
      %v1093 = vpop.permute.xlu0 %1092
      %1094 = vrot.lane.b32.xlu0 %v724, 12
      %v1095 = vpop.permute.xlu0 %1094
      %1096 = vrot.lane.b32.xlu0 %v725, 12
      %v1097 = vpop.permute.xlu0 %1096
      %1098 = vrot.lane.b32.xlu0 %v726, 12
      %v1099 = vpop.permute.xlu0 %1098
      %1100 = vrot.lane.b32.xlu0 %v727, 12
      %v1101 = vpop.permute.xlu0 %1100
      %1102 = vrot.lane.b32.xlu0 %v728, 12
      %v1103 = vpop.permute.xlu0 %1102
      %1104 = vrot.lane.b32.xlu0 %v729, 12
      %v1105 = vpop.permute.xlu0 %1104
      %1106 = vrot.lane.b32.xlu0 %v730, 12
      %v1107 = vpop.permute.xlu0 %1106
      %1108 = vrot.lane.b32.xlu0 %v731, 12
      %v1109 = vpop.permute.xlu0 %1108
      %1110 = vrot.lane.b32.xlu0 %v732, 12
      %v1111 = vpop.permute.xlu0 %1110
      %1112 = vrot.lane.b32.xlu0 %v733, 12
      %v1113 = vpop.permute.xlu0 %1112
      %1114 = vrot.lane.b32.xlu0 %v734, 12
      %v1115 = vpop.permute.xlu0 %1114
      %1116 = vrot.lane.b32.xlu0 %v735, 12
      %v1117 = vpop.permute.xlu0 %1116
      %1118 = vrot.lane.b32.xlu0 %v736, 12
      %v1119 = vpop.permute.xlu0 %1118
      %1120 = vrot.lane.b32.xlu0 %v737, 12
      %v1121 = vpop.permute.xlu0 %1120
      %1122 = vrot.lane.b32.xlu0 %v738, 12
      %v1123 = vpop.permute.xlu0 %1122
      %1140 = vrot.lane.b32.xlu0 %v771, 15
      %v1141 = vpop.permute.xlu0 %1140
      %1142 = vrot.lane.b32.xlu0 %v772, 15
      %v1143 = vpop.permute.xlu0 %1142
      %1144 = vrot.lane.b32.xlu0 %v773, 15
      %v1145 = vpop.permute.xlu0 %1144
      %1146 = vrot.lane.b32.xlu0 %v774, 15
      %v1147 = vpop.permute.xlu0 %1146
      %1148 = vrot.lane.b32.xlu0 %v775, 15
      %v1149 = vpop.permute.xlu0 %1148
      %1150 = vrot.lane.b32.xlu0 %v776, 15
      %v1151 = vpop.permute.xlu0 %1150
      %1152 = vrot.lane.b32.xlu0 %v777, 15
      %v1153 = vpop.permute.xlu0 %1152
      %1154 = vrot.lane.b32.xlu0 %v778, 15
      %v1155 = vpop.permute.xlu0 %1154
      %1156 = vrot.lane.b32.xlu0 %v779, 15
      %v1157 = vpop.permute.xlu0 %1156
      %1158 = vrot.lane.b32.xlu0 %v780, 15
      %v1159 = vpop.permute.xlu0 %1158
      %1160 = vrot.lane.b32.xlu0 %v781, 15
      %v1161 = vpop.permute.xlu0 %1160
      %1162 = vrot.lane.b32.xlu0 %v782, 15
      %v1163 = vpop.permute.xlu0 %1162
      %1164 = vrot.lane.b32.xlu0 %v783, 15
      %v1165 = vpop.permute.xlu0 %1164
      %1166 = vrot.lane.b32.xlu0 %v784, 15
      %v1167 = vpop.permute.xlu0 %1166
      %1168 = vrot.lane.b32.xlu0 %v785, 15
      %v1169 = vpop.permute.xlu0 %1168
      %1170 = vrot.lane.b32.xlu0 %v786, 15
      %v1171 = vpop.permute.xlu0 %1170
      %1188 = vrot.lane.b32.xlu0 %v820, 18
      %v1189 = vpop.permute.xlu0 %1188
      %1190 = vrot.lane.b32.xlu0 %v821, 18
      %v1191 = vpop.permute.xlu0 %1190
      %1192 = vrot.lane.b32.xlu0 %v822, 18
      %v1193 = vpop.permute.xlu0 %1192
      %1194 = vrot.lane.b32.xlu0 %v823, 18
      %v1195 = vpop.permute.xlu0 %1194
      %1196 = vrot.lane.b32.xlu0 %v824, 18
      %v1197 = vpop.permute.xlu0 %1196
      %1198 = vrot.lane.b32.xlu0 %v825, 18
      %v1199 = vpop.permute.xlu0 %1198
      %1200 = vrot.lane.b32.xlu0 %v826, 18
      %v1201 = vpop.permute.xlu0 %1200
      %1202 = vrot.lane.b32.xlu0 %v827, 18
      %v1203 = vpop.permute.xlu0 %1202
      %1204 = vrot.lane.b32.xlu0 %v828, 18
      %v1205 = vpop.permute.xlu0 %1204
      %1206 = vrot.lane.b32.xlu0 %v829, 18
      %v1207 = vpop.permute.xlu0 %1206
      %1208 = vrot.lane.b32.xlu0 %v830, 18
      %v1209 = vpop.permute.xlu0 %1208
      %1210 = vrot.lane.b32.xlu0 %v831, 18
      %v1211 = vpop.permute.xlu0 %1210
      %1212 = vrot.lane.b32.xlu0 %v832, 18
      %v1213 = vpop.permute.xlu0 %1212
      %1214 = vrot.lane.b32.xlu0 %v833, 18
      %v1215 = vpop.permute.xlu0 %1214
      %1216 = vrot.lane.b32.xlu0 %v834, 18
      %v1217 = vpop.permute.xlu0 %1216
      %1218 = vrot.lane.b32.xlu0 %v835, 18
      %v1219 = vpop.permute.xlu0 %1218
      %1236 = vrot.lane.b32.xlu0 %v868, 21
      %v1237 = vpop.permute.xlu0 %1236
      %1238 = vrot.lane.b32.xlu0 %v869, 21
      %v1239 = vpop.permute.xlu0 %1238
      %1240 = vrot.lane.b32.xlu0 %v870, 21
      %v1241 = vpop.permute.xlu0 %1240
      %1242 = vrot.lane.b32.xlu0 %v871, 21
      %v1243 = vpop.permute.xlu0 %1242
      %1244 = vrot.lane.b32.xlu0 %v872, 21
      %v1245 = vpop.permute.xlu0 %1244
      %1246 = vrot.lane.b32.xlu0 %v873, 21
      %v1247 = vpop.permute.xlu0 %1246
      %1248 = vrot.lane.b32.xlu0 %v874, 21
      %v1249 = vpop.permute.xlu0 %1248
      %1250 = vrot.lane.b32.xlu0 %v875, 21
      %v1251 = vpop.permute.xlu0 %1250
      %1252 = vrot.lane.b32.xlu0 %v876, 21
      %v1253 = vpop.permute.xlu0 %1252
      %1254 = vrot.lane.b32.xlu0 %v877, 21
      %v1255 = vpop.permute.xlu0 %1254
      %1256 = vrot.lane.b32.xlu0 %v878, 21
      %v1257 = vpop.permute.xlu0 %1256
      %1258 = vrot.lane.b32.xlu0 %v879, 21
      %v1259 = vpop.permute.xlu0 %1258
      %1260 = vrot.lane.b32.xlu0 %v880, 21
      %v1261 = vpop.permute.xlu0 %1260
      %1262 = vrot.lane.b32.xlu0 %v881, 21
      %v1263 = vpop.permute.xlu0 %1262
      %1264 = vrot.lane.b32.xlu0 %v882, 21
      %v1265 = vpop.permute.xlu0 %1264
      %1266 = vrot.lane.b32.xlu0 %v883, 21
      %v1267 = vpop.permute.xlu0 %1266
      %1284 = vrot.lane.b32.xlu0 %v916, 24
      %v1285 = vpop.permute.xlu0 %1284
      %1286 = vrot.lane.b32.xlu0 %v917, 24
      %v1287 = vpop.permute.xlu0 %1286
      %1288 = vrot.lane.b32.xlu0 %v918, 24
      %v1289 = vpop.permute.xlu0 %1288
      %1290 = vrot.lane.b32.xlu0 %v919, 24
      %v1291 = vpop.permute.xlu0 %1290
      %1292 = vrot.lane.b32.xlu0 %v920, 24
      %v1293 = vpop.permute.xlu0 %1292
      %1294 = vrot.lane.b32.xlu0 %v921, 24
      %v1295 = vpop.permute.xlu0 %1294
      %1296 = vrot.lane.b32.xlu0 %v922, 24
      %v1297 = vpop.permute.xlu0 %1296
      %1298 = vrot.lane.b32.xlu0 %v923, 24
      %v1299 = vpop.permute.xlu0 %1298
      %1300 = vrot.lane.b32.xlu0 %v924, 24
      %v1301 = vpop.permute.xlu0 %1300
      %1302 = vrot.lane.b32.xlu0 %v925, 24
      %v1303 = vpop.permute.xlu0 %1302
      %1304 = vrot.lane.b32.xlu0 %v926, 24
      %v1305 = vpop.permute.xlu0 %1304
      %1306 = vrot.lane.b32.xlu0 %v927, 24
      %v1307 = vpop.permute.xlu0 %1306
      %1308 = vrot.lane.b32.xlu0 %v928, 24
      %v1309 = vpop.permute.xlu0 %1308
      %1310 = vrot.lane.b32.xlu0 %v929, 24
      %v1311 = vpop.permute.xlu0 %1310
      %1312 = vrot.lane.b32.xlu0 %v930, 24
      %v1313 = vpop.permute.xlu0 %1312
      %1314 = vrot.lane.b32.xlu0 %v931, 24
      %v1315 = vpop.permute.xlu0 %1314
      %v1318 = vsel %vm330, %v531, %v949
      %v1321 = vsel %vm330, %v532, %v951
      %v1324 = vsel %vm330, %v533, %v953
      %v1327 = vsel %vm330, %v534, %v955
      %v1330 = vsel %vm330, %v535, %v957
      %v1333 = vsel %vm330, %v536, %v959
      %v1336 = vsel %vm330, %v537, %v961
      %v1339 = vsel %vm330, %v538, %v963
      %v1342 = vsel %vm330, %v539, %v965
      %v1345 = vsel %vm330, %v540, %v967
      %v1348 = vsel %vm330, %v541, %v969
      %v1351 = vsel %vm330, %v542, %v971
      %v1354 = vsel %vm330, %v543, %v973
      %v1357 = vsel %vm330, %v544, %v975
      %v1360 = vsel %vm330, %v545, %v977
      %v1363 = vsel %vm330, %v546, %v979
      %vm1364 = vcmask 48128
      %v1366 = vsel %vm1364, %v1318, %v997
      %v1368 = vsel %vm1364, %v1321, %v999
      %v1370 = vsel %vm1364, %v1324, %v1001
      %v1372 = vsel %vm1364, %v1327, %v1003
      %v1374 = vsel %vm1364, %v1330, %v1005
      %v1376 = vsel %vm1364, %v1333, %v1007
      %v1378 = vsel %vm1364, %v1336, %v1009
      %v1380 = vsel %vm1364, %v1339, %v1011
      %v1382 = vsel %vm1364, %v1342, %v1013
      %v1384 = vsel %vm1364, %v1345, %v1015
      %v1386 = vsel %vm1364, %v1348, %v1017
      %v1388 = vsel %vm1364, %v1351, %v1019
      %v1390 = vsel %vm1364, %v1354, %v1021
      %v1392 = vsel %vm1364, %v1357, %v1023
      %v1394 = vsel %vm1364, %v1360, %v1025
      %v1396 = vsel %vm1364, %v1363, %v1027
      %vm1397 = vcmask 72704
      %v1399 = vsel %vm1397, %v1366, %v1045
      %v1401 = vsel %vm1397, %v1368, %v1047
      %v1403 = vsel %vm1397, %v1370, %v1049
      %v1405 = vsel %vm1397, %v1372, %v1051
      %v1407 = vsel %vm1397, %v1374, %v1053
      %v1409 = vsel %vm1397, %v1376, %v1055
      %v1411 = vsel %vm1397, %v1378, %v1057
      %v1413 = vsel %vm1397, %v1380, %v1059
      %v1415 = vsel %vm1397, %v1382, %v1061
      %v1417 = vsel %vm1397, %v1384, %v1063
      %v1419 = vsel %vm1397, %v1386, %v1065
      %v1421 = vsel %vm1397, %v1388, %v1067
      %v1423 = vsel %vm1397, %v1390, %v1069
      %v1425 = vsel %vm1397, %v1392, %v1071
      %v1427 = vsel %vm1397, %v1394, %v1073
      %v1429 = vsel %vm1397, %v1396, %v1075
      %vm1430 = vcmask 97280
      %v1432 = vsel %vm1430, %v1399, %v1093
      %v1434 = vsel %vm1430, %v1401, %v1095
      %v1436 = vsel %vm1430, %v1403, %v1097
      %v1438 = vsel %vm1430, %v1405, %v1099
      %v1440 = vsel %vm1430, %v1407, %v1101
      %v1442 = vsel %vm1430, %v1409, %v1103
      %v1444 = vsel %vm1430, %v1411, %v1105
      %v1446 = vsel %vm1430, %v1413, %v1107
      %v1448 = vsel %vm1430, %v1415, %v1109
      %v1450 = vsel %vm1430, %v1417, %v1111
      %v1452 = vsel %vm1430, %v1419, %v1113
      %v1454 = vsel %vm1430, %v1421, %v1115
      %v1456 = vsel %vm1430, %v1423, %v1117
      %v1458 = vsel %vm1430, %v1425, %v1119
      %v1460 = vsel %vm1430, %v1427, %v1121
      %v1462 = vsel %vm1430, %v1429, %v1123
      %vm1463 = vcmask 121856
      %v1465 = vsel %vm1463, %v1432, %v1141
      %v1467 = vsel %vm1463, %v1434, %v1143
      %v1469 = vsel %vm1463, %v1436, %v1145
      %v1471 = vsel %vm1463, %v1438, %v1147
      %v1473 = vsel %vm1463, %v1440, %v1149
      %v1475 = vsel %vm1463, %v1442, %v1151
      %v1477 = vsel %vm1463, %v1444, %v1153
      %v1479 = vsel %vm1463, %v1446, %v1155
      %v1481 = vsel %vm1463, %v1448, %v1157
      %v1483 = vsel %vm1463, %v1450, %v1159
      %v1485 = vsel %vm1463, %v1452, %v1161
      %v1487 = vsel %vm1463, %v1454, %v1163
      %v1489 = vsel %vm1463, %v1456, %v1165
      %v1491 = vsel %vm1463, %v1458, %v1167
      %v1493 = vsel %vm1463, %v1460, %v1169
      %v1495 = vsel %vm1463, %v1462, %v1171
      %vm1496 = vcmask 146432
      %v1498 = vsel %vm1496, %v1465, %v1189
      %v1500 = vsel %vm1496, %v1467, %v1191
      %v1502 = vsel %vm1496, %v1469, %v1193
      %v1504 = vsel %vm1496, %v1471, %v1195
      %v1506 = vsel %vm1496, %v1473, %v1197
      %v1508 = vsel %vm1496, %v1475, %v1199
      %v1510 = vsel %vm1496, %v1477, %v1201
      %v1512 = vsel %vm1496, %v1479, %v1203
      %v1514 = vsel %vm1496, %v1481, %v1205
      %v1516 = vsel %vm1496, %v1483, %v1207
      %v1518 = vsel %vm1496, %v1485, %v1209
      %v1520 = vsel %vm1496, %v1487, %v1211
      %v1522 = vsel %vm1496, %v1489, %v1213
      %v1524 = vsel %vm1496, %v1491, %v1215
      %v1526 = vsel %vm1496, %v1493, %v1217
      %v1528 = vsel %vm1496, %v1495, %v1219
      %vm1529 = vcmask 171008
      %v1531 = vsel %vm1529, %v1498, %v1237
      %v1533 = vsel %vm1529, %v1500, %v1239
      %v1535 = vsel %vm1529, %v1502, %v1241
      %v1537 = vsel %vm1529, %v1504, %v1243
      %v1539 = vsel %vm1529, %v1506, %v1245
      %v1541 = vsel %vm1529, %v1508, %v1247
      %v1543 = vsel %vm1529, %v1510, %v1249
      %v1545 = vsel %vm1529, %v1512, %v1251
      %v1547 = vsel %vm1529, %v1514, %v1253
      %v1549 = vsel %vm1529, %v1516, %v1255
      %v1551 = vsel %vm1529, %v1518, %v1257
      %v1553 = vsel %vm1529, %v1520, %v1259
      %v1555 = vsel %vm1529, %v1522, %v1261
      %v1557 = vsel %vm1529, %v1524, %v1263
      %v1559 = vsel %vm1529, %v1526, %v1265
      %v1561 = vsel %vm1529, %v1528, %v1267
      %vm1562 = vcmask 195584
      %v1564 = vsel %vm1562, %v1531, %v1285
      %v1566 = vsel %vm1562, %v1533, %v1287
      %v1568 = vsel %vm1562, %v1535, %v1289
      %v1570 = vsel %vm1562, %v1537, %v1291
      %v1572 = vsel %vm1562, %v1539, %v1293
      %v1574 = vsel %vm1562, %v1541, %v1295
      %v1576 = vsel %vm1562, %v1543, %v1297
      %v1578 = vsel %vm1562, %v1545, %v1299
      %v1580 = vsel %vm1562, %v1547, %v1301
      %v1582 = vsel %vm1562, %v1549, %v1303
      %v1584 = vsel %vm1562, %v1551, %v1305
      %v1586 = vsel %vm1562, %v1553, %v1307
      %v1588 = vsel %vm1562, %v1555, %v1309
      %v1590 = vsel %vm1562, %v1557, %v1311
      %v1592 = vsel %vm1562, %v1559, %v1313
      %v1594 = vsel %vm1562, %v1561, %v1315
      %v1595 = vld [vmem:[%s1] sm:$0xf]
      %v1596 = vld [vmem:[%s1 + $0x4] sm:$0xf]
      %v1597 = vld [vmem:[%s1 + $0x8] sm:$0xf]
      %v1598 = vld [vmem:[%s1 + $0xc] sm:$0x3]
      %v1599 = vld [vmem:[%s2] sm:$0x1]
      %v1601 = vlaneseq
      %v1602 = vshrl.u32 %v1601, 7
      %v1603 = vsub.s32 0, %v1602
      %v1604 = vrot.slane %v1599, %v1603
      %v1610 = vunpack.c.l.b16 %v1595
      %v1611 = vunpack.c.l.b16 %v1596
      %v1612 = vunpack.c.l.b16 %v1597
      %v1613 = vunpack.c.l.b16 %v1598
      %v1614 = vpack.c.b16 %v1611, %v1610
      %v1615 = vpack.c.b16 %v1613, %v1612
      %vm1617 = vcmask 220160
      %v1618 = vsel %vm1617, %v1564, 0
      %v1620 = vsel %vm1617, %v1566, 0
      %v1622 = vsel %vm1617, %v1568, 0
      %v1624 = vsel %vm1617, %v1570, 0
      %v1626 = vsel %vm1617, %v1572, 0
      %v1628 = vsel %vm1617, %v1574, 0
      %v1630 = vsel %vm1617, %v1576, 0
      %v1632 = vsel %vm1617, %v1578, 0
      %v1634 = vsel %vm1617, %v1580, 0
      %v1636 = vsel %vm1617, %v1582, 0
      %v1638 = vsel %vm1617, %v1584, 0
      %v1640 = vsel %vm1617, %v1586, 0
      %v1642 = vsel %vm1617, %v1588, 0
      %v1644 = vsel %vm1617, %v1590, 0
      %v1646 = vsel %vm1617, %v1592, 0
      %v1648 = vsel %vm1617, %v1594, 0
      %vm1650 = vcmask 1044480
      %vm1651 = vcmask 1045504
      %v1652 = vsel %vm1650, 4294967295, 65535
      %v1653 = vsel %vm1651, %v1652, 0
      %v1655 = vand.u32 %v1615, %v1653
      %1657 = vmatprep.subr.bf16.mxu0 0
      %1658 = vmatpush1.bf16.msra.mxu0 0
      %1659 = vmatprep.subr.bf16.mxu0 0
      %1660 = vmatpush1.bf16.msra.mxu0 0
      %1661 = vmatprep.subr.bf16.mxu0 0
      %1662 = vmatpush1.bf16.msra.mxu0 0
      %1663 = vmatprep.subr.bf16.mxu0 0
      %1664 = vmatpush1.bf16.msra.mxu0 0
      %1665 = vmatprep.subr.bf16.mxu0 0
      %1666 = vmatpush1.bf16.msra.mxu0 0
      %1667 = vmatprep.subr.bf16.mxu0 0
      %1668 = vmatpush1.bf16.msra.mxu0 0
      %1669 = vmatprep.subr.bf16.mxu0 0
      %1670 = vmatpush1.bf16.msra.mxu0 %v1655
      %1671 = vmatprep.subr.bf16.mxu0 0
      %1672 = vmatpush1.bf16.msra.mxu0 %v1614
      %1673 = vmatprep.subr.bf16.mxu0 0
      %1674 = vmatpush2.bf16.msra.mxu0 0
      %1675 = vmatprep.subr.bf16.mxu0 0
      %1676 = vmatpush2.bf16.msra.mxu0 0
      %1677 = vmatprep.subr.bf16.mxu0 0
      %1678 = vmatpush2.bf16.msra.mxu0 0
      %1679 = vmatprep.subr.bf16.mxu0 0
      %1680 = vmatpush2.bf16.msra.mxu0 0
      %1681 = vmatprep.subr.bf16.mxu0 0
      %1682 = vmatpush2.bf16.msra.mxu0 0
      %1683 = vmatprep.subr.bf16.mxu0 0
      %1684 = vmatpush2.bf16.msra.mxu0 0
      %1685 = vmatprep.subr.bf16.mxu0 0
      %1686 = vmatpush2.bf16.msra.mxu0 0
      %1687 = vmatprep.subr.bf16.mxu0 0
      %1688 = vmatpush2.bf16.msra.mxu0 0
      %1689 = vmatprep.mubr.bf16.mxu0 0
      %1690 = vmatmul.mubr.bf16.gmra.mxu0 %v1618
      %v1691 = vpop.f32.mrf.mxu0
      %v1692 = vadd.f32 %v1604, %v1691
      %v1693 = vpop.f32.mrf.mxu0
      %v1694 = vpop.f32.mrf.mxu0
      %v1695 = vadd.f32 %v1604, %v1694
      %v1696 = vpop.f32.mrf.mxu0
      %1697 = vmatprep.mubr.bf16.mxu0 0
      %1698 = vmatmul.mubr.bf16.gmra.mxu0 %v1620
      %v1699 = vpop.f32.mrf.mxu0
      %v1700 = vadd.f32 %v1604, %v1699
      %v1701 = vpop.f32.mrf.mxu0
      %v1702 = vpop.f32.mrf.mxu0
      %v1703 = vadd.f32 %v1604, %v1702
      %v1704 = vpop.f32.mrf.mxu0
      %1705 = vmatprep.mubr.bf16.mxu0 0
      %1706 = vmatmul.mubr.bf16.gmra.mxu0 %v1622
      %v1707 = vpop.f32.mrf.mxu0
      %v1708 = vadd.f32 %v1604, %v1707
      %v1709 = vpop.f32.mrf.mxu0
      %v1710 = vpop.f32.mrf.mxu0
      %v1711 = vadd.f32 %v1604, %v1710
      %v1712 = vpop.f32.mrf.mxu0
      %1713 = vmatprep.mubr.bf16.mxu0 0
      %1714 = vmatmul.mubr.bf16.gmra.mxu0 %v1624
      %v1715 = vpop.f32.mrf.mxu0
      %v1716 = vadd.f32 %v1604, %v1715
      %v1717 = vpop.f32.mrf.mxu0
      %v1718 = vpop.f32.mrf.mxu0
      %v1719 = vadd.f32 %v1604, %v1718
      %v1720 = vpop.f32.mrf.mxu0
      %1721 = vmatprep.mubr.bf16.mxu0 0
      %1722 = vmatmul.mubr.bf16.gmra.mxu0 %v1626
      %v1723 = vpop.f32.mrf.mxu0
      %v1724 = vadd.f32 %v1604, %v1723
      %v1725 = vpop.f32.mrf.mxu0
      %v1726 = vpop.f32.mrf.mxu0
      %v1727 = vadd.f32 %v1604, %v1726
      %v1728 = vpop.f32.mrf.mxu0
      %1729 = vmatprep.mubr.bf16.mxu0 0
      %1730 = vmatmul.mubr.bf16.gmra.mxu0 %v1628
      %v1731 = vpop.f32.mrf.mxu0
      %v1732 = vadd.f32 %v1604, %v1731
      %v1733 = vpop.f32.mrf.mxu0
      %v1734 = vpop.f32.mrf.mxu0
      %v1735 = vadd.f32 %v1604, %v1734
      %v1736 = vpop.f32.mrf.mxu0
      %1737 = vmatprep.mubr.bf16.mxu0 0
      %1738 = vmatmul.mubr.bf16.gmra.mxu0 %v1630
      %v1739 = vpop.f32.mrf.mxu0
      %v1740 = vadd.f32 %v1604, %v1739
      %v1741 = vpop.f32.mrf.mxu0
      %v1742 = vpop.f32.mrf.mxu0
      %v1743 = vadd.f32 %v1604, %v1742
      %v1744 = vpop.f32.mrf.mxu0
      %1745 = vmatprep.mubr.bf16.mxu0 0
      %1746 = vmatmul.mubr.bf16.gmra.mxu0 %v1632
      %v1747 = vpop.f32.mrf.mxu0
      %v1748 = vadd.f32 %v1604, %v1747
      %v1749 = vpop.f32.mrf.mxu0
      %v1750 = vpop.f32.mrf.mxu0
      %v1751 = vadd.f32 %v1604, %v1750
      %v1752 = vpop.f32.mrf.mxu0
      %1753 = vmatprep.mubr.bf16.mxu0 0
      %1754 = vmatmul.mubr.bf16.gmra.mxu0 %v1634
      %v1755 = vpop.f32.mrf.mxu0
      %v1756 = vadd.f32 %v1604, %v1755
      %v1757 = vpop.f32.mrf.mxu0
      %v1758 = vpop.f32.mrf.mxu0
      %v1759 = vadd.f32 %v1604, %v1758
      %v1760 = vpop.f32.mrf.mxu0
      %1761 = vmatprep.mubr.bf16.mxu0 0
      %1762 = vmatmul.mubr.bf16.gmra.mxu0 %v1636
      %v1763 = vpop.f32.mrf.mxu0
      %v1764 = vadd.f32 %v1604, %v1763
      %v1765 = vpop.f32.mrf.mxu0
      %v1766 = vpop.f32.mrf.mxu0
      %v1767 = vadd.f32 %v1604, %v1766
      %v1768 = vpop.f32.mrf.mxu0
      %1769 = vmatprep.mubr.bf16.mxu0 0
      %1770 = vmatmul.mubr.bf16.gmra.mxu0 %v1638
      %v1771 = vpop.f32.mrf.mxu0
      %v1772 = vadd.f32 %v1604, %v1771
      %v1773 = vpop.f32.mrf.mxu0
      %v1774 = vpop.f32.mrf.mxu0
      %v1775 = vadd.f32 %v1604, %v1774
      %v1776 = vpop.f32.mrf.mxu0
      %1777 = vmatprep.mubr.bf16.mxu0 0
      %1778 = vmatmul.mubr.bf16.gmra.mxu0 %v1640
      %v1779 = vpop.f32.mrf.mxu0
      %v1780 = vadd.f32 %v1604, %v1779
      %v1781 = vpop.f32.mrf.mxu0
      %v1782 = vpop.f32.mrf.mxu0
      %v1783 = vadd.f32 %v1604, %v1782
      %v1784 = vpop.f32.mrf.mxu0
      %1785 = vmatprep.mubr.bf16.mxu0 0
      %1786 = vmatmul.mubr.bf16.gmra.mxu0 %v1642
      %v1787 = vpop.f32.mrf.mxu0
      %v1788 = vadd.f32 %v1604, %v1787
      %v1789 = vpop.f32.mrf.mxu0
      %v1790 = vpop.f32.mrf.mxu0
      %v1791 = vadd.f32 %v1604, %v1790
      %v1792 = vpop.f32.mrf.mxu0
      %1793 = vmatprep.mubr.bf16.mxu0 0
      %1794 = vmatmul.mubr.bf16.gmra.mxu0 %v1644
      %v1795 = vpop.f32.mrf.mxu0
      %v1796 = vadd.f32 %v1604, %v1795
      %v1797 = vpop.f32.mrf.mxu0
      %v1798 = vpop.f32.mrf.mxu0
      %v1799 = vadd.f32 %v1604, %v1798
      %v1800 = vpop.f32.mrf.mxu0
      %1801 = vmatprep.mubr.bf16.mxu0 0
      %1802 = vmatmul.mubr.bf16.gmra.mxu0 %v1646
      %v1803 = vpop.f32.mrf.mxu0
      %v1804 = vadd.f32 %v1604, %v1803
      %v1805 = vpop.f32.mrf.mxu0
      %v1806 = vpop.f32.mrf.mxu0
      %v1807 = vadd.f32 %v1604, %v1806
      %v1808 = vpop.f32.mrf.mxu0
      %1809 = vmatprep.mubr.bf16.mxu0 0
      %1810 = vmatmul.mubr.bf16.gmra.mxu0 %v1648
      %v1811 = vpop.f32.mrf.mxu0
      %v1812 = vadd.f32 %v1604, %v1811
      %v1813 = vpop.f32.mrf.mxu0
      %v1814 = vpop.f32.mrf.mxu0
      %v1815 = vadd.f32 %v1604, %v1814
      %v1816 = vpop.f32.mrf.mxu0
      %1817 = vdwg.mxu0
      %v1818 = vmax.f32 %v1692, 0.0
      %v1819 = vmax.f32 %v1695, 0.0
      %v1820 = vmax.f32 %v1700, 0.0
      %v1821 = vmax.f32 %v1703, 0.0
      %v1822 = vmax.f32 %v1708, 0.0
      %v1823 = vmax.f32 %v1711, 0.0
      %v1824 = vmax.f32 %v1716, 0.0
      %v1825 = vmax.f32 %v1719, 0.0
      %v1826 = vmax.f32 %v1724, 0.0
      %v1827 = vmax.f32 %v1727, 0.0
      %v1828 = vmax.f32 %v1732, 0.0
      %v1829 = vmax.f32 %v1735, 0.0
      %v1830 = vmax.f32 %v1740, 0.0
      %v1831 = vmax.f32 %v1743, 0.0
      %v1832 = vmax.f32 %v1748, 0.0
      %v1833 = vmax.f32 %v1751, 0.0
      %v1834 = vmax.f32 %v1756, 0.0
      %v1835 = vmax.f32 %v1759, 0.0
      %v1836 = vmax.f32 %v1764, 0.0
      %v1837 = vmax.f32 %v1767, 0.0
      %v1838 = vmax.f32 %v1772, 0.0
      %v1839 = vmax.f32 %v1775, 0.0
      %v1840 = vmax.f32 %v1780, 0.0
      %v1841 = vmax.f32 %v1783, 0.0
      %v1842 = vmax.f32 %v1788, 0.0
      %v1843 = vmax.f32 %v1791, 0.0
      %v1844 = vmax.f32 %v1796, 0.0
      %v1845 = vmax.f32 %v1799, 0.0
      %v1846 = vmax.f32 %v1804, 0.0
      %v1847 = vmax.f32 %v1807, 0.0
      %v1848 = vmax.f32 %v1812, 0.0
      %v1849 = vmax.f32 %v1815, 0.0
      %v1850 = vmax.f32 %v1818, %v1820
      %v1851 = vmax.f32 %v1819, %v1821
      %v1852 = vmax.f32 %v1822, %v1824
      %v1853 = vmax.f32 %v1823, %v1825
      %v1854 = vmax.f32 %v1826, %v1828
      %v1855 = vmax.f32 %v1827, %v1829
      %v1856 = vmax.f32 %v1830, %v1832
      %v1857 = vmax.f32 %v1831, %v1833
      %v1858 = vmax.f32 %v1834, %v1836
      %v1859 = vmax.f32 %v1835, %v1837
      %v1860 = vmax.f32 %v1838, %v1840
      %v1861 = vmax.f32 %v1839, %v1841
      %v1862 = vmax.f32 %v1842, %v1844
      %v1863 = vmax.f32 %v1843, %v1845
      %v1864 = vmax.f32 %v1846, %v1848
      %v1865 = vmax.f32 %v1847, %v1849
      %v1882 = vcombine.high %v1850, %v1850
      %v1884 = vunpack.c.l.s4 1983009808
      %v1885 = vunpack.c.0.s8 %v1884
      %v1886 = vlaneseq
      %v1887 = vshrl.u32 %v1886, 7
      %v1888 = vsub.s32 %v1885, %v1887
      %v1889 = vrot.slane %v1850, %v1888
      %v1891 = vunpack.c.l.s4 1983009808
      %v1892 = vunpack.c.0.s8 %v1891
      %v1893 = vlaneseq
      %v1894 = vshrl.u32 %v1893, 7
      %v1895 = vsub.s32 %v1892, %v1894
      %v1896 = vrot.slane %v1882, %v1895
      %v1897 = vcombine.high %v1889, %v1889
      %v1898 = vcombine.high %v1896, %v1896
      %v1899 = vcombine.high %v1851, %v1851
      %v1901 = vunpack.c.l.s4 1983009808
      %v1902 = vunpack.c.0.s8 %v1901
      %v1903 = vlaneseq
      %v1904 = vshrl.u32 %v1903, 7
      %v1905 = vsub.s32 %v1902, %v1904
      %v1906 = vrot.slane %v1851, %v1905
      %v1908 = vunpack.c.l.s4 1983009808
      %v1909 = vunpack.c.0.s8 %v1908
      %v1910 = vlaneseq
      %v1911 = vshrl.u32 %v1910, 7
      %v1912 = vsub.s32 %v1909, %v1911
      %v1913 = vrot.slane %v1899, %v1912
      %v1914 = vcombine.high %v1906, %v1906
      %v1915 = vcombine.high %v1913, %v1913
      %v1916 = vcombine.high %v1852, %v1852
      %v1918 = vunpack.c.l.s4 1983009808
      %v1919 = vunpack.c.0.s8 %v1918
      %v1920 = vlaneseq
      %v1921 = vshrl.u32 %v1920, 7
      %v1922 = vsub.s32 %v1919, %v1921
      %v1923 = vrot.slane %v1852, %v1922
      %v1925 = vunpack.c.l.s4 1983009808
      %v1926 = vunpack.c.0.s8 %v1925
      %v1927 = vlaneseq
      %v1928 = vshrl.u32 %v1927, 7
      %v1929 = vsub.s32 %v1926, %v1928
      %v1930 = vrot.slane %v1916, %v1929
      %v1931 = vcombine.high %v1923, %v1923
      %v1932 = vcombine.high %v1930, %v1930
      %v1933 = vcombine.high %v1853, %v1853
      %v1935 = vunpack.c.l.s4 1983009808
      %v1936 = vunpack.c.0.s8 %v1935
      %v1937 = vlaneseq
      %v1938 = vshrl.u32 %v1937, 7
      %v1939 = vsub.s32 %v1936, %v1938
      %v1940 = vrot.slane %v1853, %v1939
      %v1942 = vunpack.c.l.s4 1983009808
      %v1943 = vunpack.c.0.s8 %v1942
      %v1944 = vlaneseq
      %v1945 = vshrl.u32 %v1944, 7
      %v1946 = vsub.s32 %v1943, %v1945
      %v1947 = vrot.slane %v1933, %v1946
      %v1948 = vcombine.high %v1940, %v1940
      %v1949 = vcombine.high %v1947, %v1947
      %v1950 = vcombine.high %v1854, %v1854
      %v1952 = vunpack.c.l.s4 1983009808
      %v1953 = vunpack.c.0.s8 %v1952
      %v1954 = vlaneseq
      %v1955 = vshrl.u32 %v1954, 7
      %v1956 = vsub.s32 %v1953, %v1955
      %v1957 = vrot.slane %v1854, %v1956
      %v1959 = vunpack.c.l.s4 1983009808
      %v1960 = vunpack.c.0.s8 %v1959
      %v1961 = vlaneseq
      %v1962 = vshrl.u32 %v1961, 7
      %v1963 = vsub.s32 %v1960, %v1962
      %v1964 = vrot.slane %v1950, %v1963
      %v1965 = vcombine.high %v1957, %v1957
      %v1966 = vcombine.high %v1964, %v1964
      %v1967 = vcombine.high %v1855, %v1855
      %v1969 = vunpack.c.l.s4 1983009808
      %v1970 = vunpack.c.0.s8 %v1969
      %v1971 = vlaneseq
      %v1972 = vshrl.u32 %v1971, 7
      %v1973 = vsub.s32 %v1970, %v1972
      %v1974 = vrot.slane %v1855, %v1973
      %v1976 = vunpack.c.l.s4 1983009808
      %v1977 = vunpack.c.0.s8 %v1976
      %v1978 = vlaneseq
      %v1979 = vshrl.u32 %v1978, 7
      %v1980 = vsub.s32 %v1977, %v1979
      %v1981 = vrot.slane %v1967, %v1980
      %v1982 = vcombine.high %v1974, %v1974
      %v1983 = vcombine.high %v1981, %v1981
      %v1984 = vcombine.high %v1856, %v1856
      %v1986 = vunpack.c.l.s4 1983009808
      %v1987 = vunpack.c.0.s8 %v1986
      %v1988 = vlaneseq
      %v1989 = vshrl.u32 %v1988, 7
      %v1990 = vsub.s32 %v1987, %v1989
      %v1991 = vrot.slane %v1856, %v1990
      %v1993 = vunpack.c.l.s4 1983009808
      %v1994 = vunpack.c.0.s8 %v1993
      %v1995 = vlaneseq
      %v1996 = vshrl.u32 %v1995, 7
      %v1997 = vsub.s32 %v1994, %v1996
      %v1998 = vrot.slane %v1984, %v1997
      %v1999 = vcombine.high %v1991, %v1991
      %v2000 = vcombine.high %v1998, %v1998
      %v2001 = vcombine.high %v1857, %v1857
      %v2003 = vunpack.c.l.s4 1983009808
      %v2004 = vunpack.c.0.s8 %v2003
      %v2005 = vlaneseq
      %v2006 = vshrl.u32 %v2005, 7
      %v2007 = vsub.s32 %v2004, %v2006
      %v2008 = vrot.slane %v1857, %v2007
      %v2010 = vunpack.c.l.s4 1983009808
      %v2011 = vunpack.c.0.s8 %v2010
      %v2012 = vlaneseq
      %v2013 = vshrl.u32 %v2012, 7
      %v2014 = vsub.s32 %v2011, %v2013
      %v2015 = vrot.slane %v2001, %v2014
      %v2016 = vcombine.high %v2008, %v2008
      %v2017 = vcombine.high %v2015, %v2015
      %v2018 = vcombine.high %v1858, %v1858
      %v2020 = vunpack.c.l.s4 1983009808
      %v2021 = vunpack.c.0.s8 %v2020
      %v2022 = vlaneseq
      %v2023 = vshrl.u32 %v2022, 7
      %v2024 = vsub.s32 %v2021, %v2023
      %v2025 = vrot.slane %v1858, %v2024
      %v2027 = vunpack.c.l.s4 1983009808
      %v2028 = vunpack.c.0.s8 %v2027
      %v2029 = vlaneseq
      %v2030 = vshrl.u32 %v2029, 7
      %v2031 = vsub.s32 %v2028, %v2030
      %v2032 = vrot.slane %v2018, %v2031
      %v2033 = vcombine.high %v2025, %v2025
      %v2034 = vcombine.high %v2032, %v2032
      %v2035 = vcombine.high %v1859, %v1859
      %v2037 = vunpack.c.l.s4 1983009808
      %v2038 = vunpack.c.0.s8 %v2037
      %v2039 = vlaneseq
      %v2040 = vshrl.u32 %v2039, 7
      %v2041 = vsub.s32 %v2038, %v2040
      %v2042 = vrot.slane %v1859, %v2041
      %v2044 = vunpack.c.l.s4 1983009808
      %v2045 = vunpack.c.0.s8 %v2044
      %v2046 = vlaneseq
      %v2047 = vshrl.u32 %v2046, 7
      %v2048 = vsub.s32 %v2045, %v2047
      %v2049 = vrot.slane %v2035, %v2048
      %v2050 = vcombine.high %v2042, %v2042
      %v2051 = vcombine.high %v2049, %v2049
      %v2052 = vcombine.high %v1860, %v1860
      %v2054 = vunpack.c.l.s4 1983009808
      %v2055 = vunpack.c.0.s8 %v2054
      %v2056 = vlaneseq
      %v2057 = vshrl.u32 %v2056, 7
      %v2058 = vsub.s32 %v2055, %v2057
      %v2059 = vrot.slane %v1860, %v2058
      %v2061 = vunpack.c.l.s4 1983009808
      %v2062 = vunpack.c.0.s8 %v2061
      %v2063 = vlaneseq
      %v2064 = vshrl.u32 %v2063, 7
      %v2065 = vsub.s32 %v2062, %v2064
      %v2066 = vrot.slane %v2052, %v2065
      %v2067 = vcombine.high %v2059, %v2059
      %v2068 = vcombine.high %v2066, %v2066
      %v2069 = vcombine.high %v1861, %v1861
      %v2071 = vunpack.c.l.s4 1983009808
      %v2072 = vunpack.c.0.s8 %v2071
      %v2073 = vlaneseq
      %v2074 = vshrl.u32 %v2073, 7
      %v2075 = vsub.s32 %v2072, %v2074
      %v2076 = vrot.slane %v1861, %v2075
      %v2078 = vunpack.c.l.s4 1983009808
      %v2079 = vunpack.c.0.s8 %v2078
      %v2080 = vlaneseq
      %v2081 = vshrl.u32 %v2080, 7
      %v2082 = vsub.s32 %v2079, %v2081
      %v2083 = vrot.slane %v2069, %v2082
      %v2084 = vcombine.high %v2076, %v2076
      %v2085 = vcombine.high %v2083, %v2083
      %v2086 = vcombine.high %v1862, %v1862
      %v2088 = vunpack.c.l.s4 1983009808
      %v2089 = vunpack.c.0.s8 %v2088
      %v2090 = vlaneseq
      %v2091 = vshrl.u32 %v2090, 7
      %v2092 = vsub.s32 %v2089, %v2091
      %v2093 = vrot.slane %v1862, %v2092
      %v2095 = vunpack.c.l.s4 1983009808
      %v2096 = vunpack.c.0.s8 %v2095
      %v2097 = vlaneseq
      %v2098 = vshrl.u32 %v2097, 7
      %v2099 = vsub.s32 %v2096, %v2098
      %v2100 = vrot.slane %v2086, %v2099
      %v2101 = vcombine.high %v2093, %v2093
      %v2102 = vcombine.high %v2100, %v2100
      %v2103 = vcombine.high %v1863, %v1863
      %v2105 = vunpack.c.l.s4 1983009808
      %v2106 = vunpack.c.0.s8 %v2105
      %v2107 = vlaneseq
      %v2108 = vshrl.u32 %v2107, 7
      %v2109 = vsub.s32 %v2106, %v2108
      %v2110 = vrot.slane %v1863, %v2109
      %v2112 = vunpack.c.l.s4 1983009808
      %v2113 = vunpack.c.0.s8 %v2112
      %v2114 = vlaneseq
      %v2115 = vshrl.u32 %v2114, 7
      %v2116 = vsub.s32 %v2113, %v2115
      %v2117 = vrot.slane %v2103, %v2116
      %v2118 = vcombine.high %v2110, %v2110
      %v2119 = vcombine.high %v2117, %v2117
      %v2120 = vcombine.high %v1864, %v1864
      %v2122 = vunpack.c.l.s4 1983009808
      %v2123 = vunpack.c.0.s8 %v2122
      %v2124 = vlaneseq
      %v2125 = vshrl.u32 %v2124, 7
      %v2126 = vsub.s32 %v2123, %v2125
      %v2127 = vrot.slane %v1864, %v2126
      %v2129 = vunpack.c.l.s4 1983009808
      %v2130 = vunpack.c.0.s8 %v2129
      %v2131 = vlaneseq
      %v2132 = vshrl.u32 %v2131, 7
      %v2133 = vsub.s32 %v2130, %v2132
      %v2134 = vrot.slane %v2120, %v2133
      %v2135 = vcombine.high %v2127, %v2127
      %v2136 = vcombine.high %v2134, %v2134
      %v2137 = vcombine.high %v1865, %v1865
      %v2139 = vunpack.c.l.s4 1983009808
      %v2140 = vunpack.c.0.s8 %v2139
      %v2141 = vlaneseq
      %v2142 = vshrl.u32 %v2141, 7
      %v2143 = vsub.s32 %v2140, %v2142
      %v2144 = vrot.slane %v1865, %v2143
      %v2146 = vunpack.c.l.s4 1983009808
      %v2147 = vunpack.c.0.s8 %v2146
      %v2148 = vlaneseq
      %v2149 = vshrl.u32 %v2148, 7
      %v2150 = vsub.s32 %v2147, %v2149
      %v2151 = vrot.slane %v2137, %v2150
      %v2152 = vcombine.high %v2144, %v2144
      %v2153 = vcombine.high %v2151, %v2151
      %v2218 = vrot.slane %v1889, 7
      %v2219 = vrot.slane %v2218, 2
      %v2220 = vrot.slane %v1897, 7
      %v2221 = vrot.slane %v2220, 2
      %v2222 = vrot.slane %v1896, 7
      %v2223 = vrot.slane %v2222, 2
      %v2224 = vrot.slane %v1898, 7
      %v2225 = vrot.slane %v2224, 2
      %v2226 = vrot.slane %v1906, 7
      %v2227 = vrot.slane %v2226, 2
      %v2228 = vrot.slane %v1914, 7
      %v2229 = vrot.slane %v2228, 2
      %v2230 = vrot.slane %v1913, 7
      %v2231 = vrot.slane %v2230, 2
      %v2232 = vrot.slane %v1915, 7
      %v2233 = vrot.slane %v2232, 2
      %v2234 = vrot.slane %v1923, 7
      %v2235 = vrot.slane %v2234, 2
      %v2236 = vrot.slane %v1931, 7
      %v2237 = vrot.slane %v2236, 2
      %v2238 = vrot.slane %v1930, 7
      %v2239 = vrot.slane %v2238, 2
      %v2240 = vrot.slane %v1932, 7
      %v2241 = vrot.slane %v2240, 2
      %v2242 = vrot.slane %v1940, 7
      %v2243 = vrot.slane %v2242, 2
      %v2244 = vrot.slane %v1948, 7
      %v2245 = vrot.slane %v2244, 2
      %v2246 = vrot.slane %v1947, 7
      %v2247 = vrot.slane %v2246, 2
      %v2248 = vrot.slane %v1949, 7
      %v2249 = vrot.slane %v2248, 2
      %v2250 = vrot.slane %v1957, 7
      %v2251 = vrot.slane %v2250, 2
      %v2252 = vrot.slane %v1965, 7
      %v2253 = vrot.slane %v2252, 2
      %v2254 = vrot.slane %v1964, 7
      %v2255 = vrot.slane %v2254, 2
      %v2256 = vrot.slane %v1966, 7
      %v2257 = vrot.slane %v2256, 2
      %v2258 = vrot.slane %v1974, 7
      %v2259 = vrot.slane %v2258, 2
      %v2260 = vrot.slane %v1982, 7
      %v2261 = vrot.slane %v2260, 2
      %v2262 = vrot.slane %v1981, 7
      %v2263 = vrot.slane %v2262, 2
      %v2264 = vrot.slane %v1983, 7
      %v2265 = vrot.slane %v2264, 2
      %v2266 = vrot.slane %v1991, 7
      %v2267 = vrot.slane %v2266, 2
      %v2268 = vrot.slane %v1999, 7
      %v2269 = vrot.slane %v2268, 2
      %v2270 = vrot.slane %v1998, 7
      %v2271 = vrot.slane %v2270, 2
      %v2272 = vrot.slane %v2000, 7
      %v2273 = vrot.slane %v2272, 2
      %v2274 = vrot.slane %v2008, 7
      %v2275 = vrot.slane %v2274, 2
      %v2276 = vrot.slane %v2016, 7
      %v2277 = vrot.slane %v2276, 2
      %v2278 = vrot.slane %v2015, 7
      %v2279 = vrot.slane %v2278, 2
      %v2280 = vrot.slane %v2017, 7
      %v2281 = vrot.slane %v2280, 2
      %v2282 = vrot.slane %v2025, 7
      %v2283 = vrot.slane %v2282, 2
      %v2284 = vrot.slane %v2033, 7
      %v2285 = vrot.slane %v2284, 2
      %v2286 = vrot.slane %v2032, 7
      %v2287 = vrot.slane %v2286, 2
      %v2288 = vrot.slane %v2034, 7
      %v2289 = vrot.slane %v2288, 2
      %v2290 = vrot.slane %v2042, 7
      %v2291 = vrot.slane %v2290, 2
      %v2292 = vrot.slane %v2050, 7
      %v2293 = vrot.slane %v2292, 2
      %v2294 = vrot.slane %v2049, 7
      %v2295 = vrot.slane %v2294, 2
      %v2296 = vrot.slane %v2051, 7
      %v2297 = vrot.slane %v2296, 2
      %v2298 = vrot.slane %v2059, 7
      %v2299 = vrot.slane %v2298, 2
      %v2300 = vrot.slane %v2067, 7
      %v2301 = vrot.slane %v2300, 2
      %v2302 = vrot.slane %v2066, 7
      %v2303 = vrot.slane %v2302, 2
      %v2304 = vrot.slane %v2068, 7
      %v2305 = vrot.slane %v2304, 2
      %v2306 = vrot.slane %v2076, 7
      %v2307 = vrot.slane %v2306, 2
      %v2308 = vrot.slane %v2084, 7
      %v2309 = vrot.slane %v2308, 2
      %v2310 = vrot.slane %v2083, 7
      %v2311 = vrot.slane %v2310, 2
      %v2312 = vrot.slane %v2085, 7
      %v2313 = vrot.slane %v2312, 2
      %v2314 = vrot.slane %v2093, 7
      %v2315 = vrot.slane %v2314, 2
      %v2316 = vrot.slane %v2101, 7
      %v2317 = vrot.slane %v2316, 2
      %v2318 = vrot.slane %v2100, 7
      %v2319 = vrot.slane %v2318, 2
      %v2320 = vrot.slane %v2102, 7
      %v2321 = vrot.slane %v2320, 2
      %v2322 = vrot.slane %v2110, 7
      %v2323 = vrot.slane %v2322, 2
      %v2324 = vrot.slane %v2118, 7
      %v2325 = vrot.slane %v2324, 2
      %v2326 = vrot.slane %v2117, 7
      %v2327 = vrot.slane %v2326, 2
      %v2328 = vrot.slane %v2119, 7
      %v2329 = vrot.slane %v2328, 2
      %v2330 = vrot.slane %v2127, 7
      %v2331 = vrot.slane %v2330, 2
      %v2332 = vrot.slane %v2135, 7
      %v2333 = vrot.slane %v2332, 2
      %v2334 = vrot.slane %v2134, 7
      %v2335 = vrot.slane %v2334, 2
      %v2336 = vrot.slane %v2136, 7
      %v2337 = vrot.slane %v2336, 2
      %v2338 = vrot.slane %v2144, 7
      %v2339 = vrot.slane %v2338, 2
      %v2340 = vrot.slane %v2152, 7
      %v2341 = vrot.slane %v2340, 2
      %v2342 = vrot.slane %v2151, 7
      %v2343 = vrot.slane %v2342, 2
      %v2344 = vrot.slane %v2153, 7
      %v2345 = vrot.slane %v2344, 2
      %v2410 = vmax.f32 %v1889, %v2219
      %v2411 = vmax.f32 %v1897, %v2221
      %v2412 = vmax.f32 %v1896, %v2223
      %v2413 = vmax.f32 %v1898, %v2225
      %v2414 = vmax.f32 %v1906, %v2227
      %v2415 = vmax.f32 %v1914, %v2229
      %v2416 = vmax.f32 %v1913, %v2231
      %v2417 = vmax.f32 %v1915, %v2233
      %v2418 = vmax.f32 %v1923, %v2235
      %v2419 = vmax.f32 %v1931, %v2237
      %v2420 = vmax.f32 %v1930, %v2239
      %v2421 = vmax.f32 %v1932, %v2241
      %v2422 = vmax.f32 %v1940, %v2243
      %v2423 = vmax.f32 %v1948, %v2245
      %v2424 = vmax.f32 %v1947, %v2247
      %v2425 = vmax.f32 %v1949, %v2249
      %v2426 = vmax.f32 %v1957, %v2251
      %v2427 = vmax.f32 %v1965, %v2253
      %v2428 = vmax.f32 %v1964, %v2255
      %v2429 = vmax.f32 %v1966, %v2257
      %v2430 = vmax.f32 %v1974, %v2259
      %v2431 = vmax.f32 %v1982, %v2261
      %v2432 = vmax.f32 %v1981, %v2263
      %v2433 = vmax.f32 %v1983, %v2265
      %v2434 = vmax.f32 %v1991, %v2267
      %v2435 = vmax.f32 %v1999, %v2269
      %v2436 = vmax.f32 %v1998, %v2271
      %v2437 = vmax.f32 %v2000, %v2273
      %v2438 = vmax.f32 %v2008, %v2275
      %v2439 = vmax.f32 %v2016, %v2277
      %v2440 = vmax.f32 %v2015, %v2279
      %v2441 = vmax.f32 %v2017, %v2281
      %v2442 = vmax.f32 %v2025, %v2283
      %v2443 = vmax.f32 %v2033, %v2285
      %v2444 = vmax.f32 %v2032, %v2287
      %v2445 = vmax.f32 %v2034, %v2289
      %v2446 = vmax.f32 %v2042, %v2291
      %v2447 = vmax.f32 %v2050, %v2293
      %v2448 = vmax.f32 %v2049, %v2295
      %v2449 = vmax.f32 %v2051, %v2297
      %v2450 = vmax.f32 %v2059, %v2299
      %v2451 = vmax.f32 %v2067, %v2301
      %v2452 = vmax.f32 %v2066, %v2303
      %v2453 = vmax.f32 %v2068, %v2305
      %v2454 = vmax.f32 %v2076, %v2307
      %v2455 = vmax.f32 %v2084, %v2309
      %v2456 = vmax.f32 %v2083, %v2311
      %v2457 = vmax.f32 %v2085, %v2313
      %v2458 = vmax.f32 %v2093, %v2315
      %v2459 = vmax.f32 %v2101, %v2317
      %v2460 = vmax.f32 %v2100, %v2319
      %v2461 = vmax.f32 %v2102, %v2321
      %v2462 = vmax.f32 %v2110, %v2323
      %v2463 = vmax.f32 %v2118, %v2325
      %v2464 = vmax.f32 %v2117, %v2327
      %v2465 = vmax.f32 %v2119, %v2329
      %v2466 = vmax.f32 %v2127, %v2331
      %v2467 = vmax.f32 %v2135, %v2333
      %v2468 = vmax.f32 %v2134, %v2335
      %v2469 = vmax.f32 %v2136, %v2337
      %v2470 = vmax.f32 %v2144, %v2339
      %v2471 = vmax.f32 %v2152, %v2341
      %v2472 = vmax.f32 %v2151, %v2343
      %v2473 = vmax.f32 %v2153, %v2345
      %v2538 = vlaneseq
      %v2539 = vshrl.u32 %v2538, 7
      %v2540 = vsub.s32 0, %v2539
      %v2541 = vrot.slane %v2410, %v2540
      %v2542 = vlaneseq
      %v2543 = vshrl.u32 %v2542, 7
      %v2544 = vsub.s32 0, %v2543
      %v2545 = vrot.slane %v2411, %v2544
      %v2546 = vlaneseq
      %v2547 = vshrl.u32 %v2546, 7
      %v2548 = vsub.s32 0, %v2547
      %v2549 = vrot.slane %v2412, %v2548
      %v2550 = vlaneseq
      %v2551 = vshrl.u32 %v2550, 7
      %v2552 = vsub.s32 0, %v2551
      %v2553 = vrot.slane %v2413, %v2552
      %v2554 = vlaneseq
      %v2555 = vshrl.u32 %v2554, 7
      %v2556 = vsub.s32 0, %v2555
      %v2557 = vrot.slane %v2414, %v2556
      %v2558 = vlaneseq
      %v2559 = vshrl.u32 %v2558, 7
      %v2560 = vsub.s32 0, %v2559
      %v2561 = vrot.slane %v2415, %v2560
      %v2562 = vlaneseq
      %v2563 = vshrl.u32 %v2562, 7
      %v2564 = vsub.s32 0, %v2563
      %v2565 = vrot.slane %v2416, %v2564
      %v2566 = vlaneseq
      %v2567 = vshrl.u32 %v2566, 7
      %v2568 = vsub.s32 0, %v2567
      %v2569 = vrot.slane %v2417, %v2568
      %v2570 = vlaneseq
      %v2571 = vshrl.u32 %v2570, 7
      %v2572 = vsub.s32 0, %v2571
      %v2573 = vrot.slane %v2418, %v2572
      %v2574 = vlaneseq
      %v2575 = vshrl.u32 %v2574, 7
      %v2576 = vsub.s32 0, %v2575
      %v2577 = vrot.slane %v2419, %v2576
      %v2578 = vlaneseq
      %v2579 = vshrl.u32 %v2578, 7
      %v2580 = vsub.s32 0, %v2579
      %v2581 = vrot.slane %v2420, %v2580
      %v2582 = vlaneseq
      %v2583 = vshrl.u32 %v2582, 7
      %v2584 = vsub.s32 0, %v2583
      %v2585 = vrot.slane %v2421, %v2584
      %v2586 = vlaneseq
      %v2587 = vshrl.u32 %v2586, 7
      %v2588 = vsub.s32 0, %v2587
      %v2589 = vrot.slane %v2422, %v2588
      %v2590 = vlaneseq
      %v2591 = vshrl.u32 %v2590, 7
      %v2592 = vsub.s32 0, %v2591
      %v2593 = vrot.slane %v2423, %v2592
      %v2594 = vlaneseq
      %v2595 = vshrl.u32 %v2594, 7
      %v2596 = vsub.s32 0, %v2595
      %v2597 = vrot.slane %v2424, %v2596
      %v2598 = vlaneseq
      %v2599 = vshrl.u32 %v2598, 7
      %v2600 = vsub.s32 0, %v2599
      %v2601 = vrot.slane %v2425, %v2600
      %v2602 = vlaneseq
      %v2603 = vshrl.u32 %v2602, 7
      %v2604 = vsub.s32 0, %v2603
      %v2605 = vrot.slane %v2426, %v2604
      %v2606 = vlaneseq
      %v2607 = vshrl.u32 %v2606, 7
      %v2608 = vsub.s32 0, %v2607
      %v2609 = vrot.slane %v2427, %v2608
      %v2610 = vlaneseq
      %v2611 = vshrl.u32 %v2610, 7
      %v2612 = vsub.s32 0, %v2611
      %v2613 = vrot.slane %v2428, %v2612
      %v2614 = vlaneseq
      %v2615 = vshrl.u32 %v2614, 7
      %v2616 = vsub.s32 0, %v2615
      %v2617 = vrot.slane %v2429, %v2616
      %v2618 = vlaneseq
      %v2619 = vshrl.u32 %v2618, 7
      %v2620 = vsub.s32 0, %v2619
      %v2621 = vrot.slane %v2430, %v2620
      %v2622 = vlaneseq
      %v2623 = vshrl.u32 %v2622, 7
      %v2624 = vsub.s32 0, %v2623
      %v2625 = vrot.slane %v2431, %v2624
      %v2626 = vlaneseq
      %v2627 = vshrl.u32 %v2626, 7
      %v2628 = vsub.s32 0, %v2627
      %v2629 = vrot.slane %v2432, %v2628
      %v2630 = vlaneseq
      %v2631 = vshrl.u32 %v2630, 7
      %v2632 = vsub.s32 0, %v2631
      %v2633 = vrot.slane %v2433, %v2632
      %v2634 = vlaneseq
      %v2635 = vshrl.u32 %v2634, 7
      %v2636 = vsub.s32 0, %v2635
      %v2637 = vrot.slane %v2434, %v2636
      %v2638 = vlaneseq
      %v2639 = vshrl.u32 %v2638, 7
      %v2640 = vsub.s32 0, %v2639
      %v2641 = vrot.slane %v2435, %v2640
      %v2642 = vlaneseq
      %v2643 = vshrl.u32 %v2642, 7
      %v2644 = vsub.s32 0, %v2643
      %v2645 = vrot.slane %v2436, %v2644
      %v2646 = vlaneseq
      %v2647 = vshrl.u32 %v2646, 7
      %v2648 = vsub.s32 0, %v2647
      %v2649 = vrot.slane %v2437, %v2648
      %v2650 = vlaneseq
      %v2651 = vshrl.u32 %v2650, 7
      %v2652 = vsub.s32 0, %v2651
      %v2653 = vrot.slane %v2438, %v2652
      %v2654 = vlaneseq
      %v2655 = vshrl.u32 %v2654, 7
      %v2656 = vsub.s32 0, %v2655
      %v2657 = vrot.slane %v2439, %v2656
      %v2658 = vlaneseq
      %v2659 = vshrl.u32 %v2658, 7
      %v2660 = vsub.s32 0, %v2659
      %v2661 = vrot.slane %v2440, %v2660
      %v2662 = vlaneseq
      %v2663 = vshrl.u32 %v2662, 7
      %v2664 = vsub.s32 0, %v2663
      %v2665 = vrot.slane %v2441, %v2664
      %v2666 = vlaneseq
      %v2667 = vshrl.u32 %v2666, 7
      %v2668 = vsub.s32 0, %v2667
      %v2669 = vrot.slane %v2442, %v2668
      %v2670 = vlaneseq
      %v2671 = vshrl.u32 %v2670, 7
      %v2672 = vsub.s32 0, %v2671
      %v2673 = vrot.slane %v2443, %v2672
      %v2674 = vlaneseq
      %v2675 = vshrl.u32 %v2674, 7
      %v2676 = vsub.s32 0, %v2675
      %v2677 = vrot.slane %v2444, %v2676
      %v2678 = vlaneseq
      %v2679 = vshrl.u32 %v2678, 7
      %v2680 = vsub.s32 0, %v2679
      %v2681 = vrot.slane %v2445, %v2680
      %v2682 = vlaneseq
      %v2683 = vshrl.u32 %v2682, 7
      %v2684 = vsub.s32 0, %v2683
      %v2685 = vrot.slane %v2446, %v2684
      %v2686 = vlaneseq
      %v2687 = vshrl.u32 %v2686, 7
      %v2688 = vsub.s32 0, %v2687
      %v2689 = vrot.slane %v2447, %v2688
      %v2690 = vlaneseq
      %v2691 = vshrl.u32 %v2690, 7
      %v2692 = vsub.s32 0, %v2691
      %v2693 = vrot.slane %v2448, %v2692
      %v2694 = vlaneseq
      %v2695 = vshrl.u32 %v2694, 7
      %v2696 = vsub.s32 0, %v2695
      %v2697 = vrot.slane %v2449, %v2696
      %v2698 = vlaneseq
      %v2699 = vshrl.u32 %v2698, 7
      %v2700 = vsub.s32 0, %v2699
      %v2701 = vrot.slane %v2450, %v2700
      %v2702 = vlaneseq
      %v2703 = vshrl.u32 %v2702, 7
      %v2704 = vsub.s32 0, %v2703
      %v2705 = vrot.slane %v2451, %v2704
      %v2706 = vlaneseq
      %v2707 = vshrl.u32 %v2706, 7
      %v2708 = vsub.s32 0, %v2707
      %v2709 = vrot.slane %v2452, %v2708
      %v2710 = vlaneseq
      %v2711 = vshrl.u32 %v2710, 7
      %v2712 = vsub.s32 0, %v2711
      %v2713 = vrot.slane %v2453, %v2712
      %v2714 = vlaneseq
      %v2715 = vshrl.u32 %v2714, 7
      %v2716 = vsub.s32 0, %v2715
      %v2717 = vrot.slane %v2454, %v2716
      %v2718 = vlaneseq
      %v2719 = vshrl.u32 %v2718, 7
      %v2720 = vsub.s32 0, %v2719
      %v2721 = vrot.slane %v2455, %v2720
      %v2722 = vlaneseq
      %v2723 = vshrl.u32 %v2722, 7
      %v2724 = vsub.s32 0, %v2723
      %v2725 = vrot.slane %v2456, %v2724
      %v2726 = vlaneseq
      %v2727 = vshrl.u32 %v2726, 7
      %v2728 = vsub.s32 0, %v2727
      %v2729 = vrot.slane %v2457, %v2728
      %v2730 = vlaneseq
      %v2731 = vshrl.u32 %v2730, 7
      %v2732 = vsub.s32 0, %v2731
      %v2733 = vrot.slane %v2458, %v2732
      %v2734 = vlaneseq
      %v2735 = vshrl.u32 %v2734, 7
      %v2736 = vsub.s32 0, %v2735
      %v2737 = vrot.slane %v2459, %v2736
      %v2738 = vlaneseq
      %v2739 = vshrl.u32 %v2738, 7
      %v2740 = vsub.s32 0, %v2739
      %v2741 = vrot.slane %v2460, %v2740
      %v2742 = vlaneseq
      %v2743 = vshrl.u32 %v2742, 7
      %v2744 = vsub.s32 0, %v2743
      %v2745 = vrot.slane %v2461, %v2744
      %v2746 = vlaneseq
      %v2747 = vshrl.u32 %v2746, 7
      %v2748 = vsub.s32 0, %v2747
      %v2749 = vrot.slane %v2462, %v2748
      %v2750 = vlaneseq
      %v2751 = vshrl.u32 %v2750, 7
      %v2752 = vsub.s32 0, %v2751
      %v2753 = vrot.slane %v2463, %v2752
      %v2754 = vlaneseq
      %v2755 = vshrl.u32 %v2754, 7
      %v2756 = vsub.s32 0, %v2755
      %v2757 = vrot.slane %v2464, %v2756
      %v2758 = vlaneseq
      %v2759 = vshrl.u32 %v2758, 7
      %v2760 = vsub.s32 0, %v2759
      %v2761 = vrot.slane %v2465, %v2760
      %v2762 = vlaneseq
      %v2763 = vshrl.u32 %v2762, 7
      %v2764 = vsub.s32 0, %v2763
      %v2765 = vrot.slane %v2466, %v2764
      %v2766 = vlaneseq
      %v2767 = vshrl.u32 %v2766, 7
      %v2768 = vsub.s32 0, %v2767
      %v2769 = vrot.slane %v2467, %v2768
      %v2770 = vlaneseq
      %v2771 = vshrl.u32 %v2770, 7
      %v2772 = vsub.s32 0, %v2771
      %v2773 = vrot.slane %v2468, %v2772
      %v2774 = vlaneseq
      %v2775 = vshrl.u32 %v2774, 7
      %v2776 = vsub.s32 0, %v2775
      %v2777 = vrot.slane %v2469, %v2776
      %v2778 = vlaneseq
      %v2779 = vshrl.u32 %v2778, 7
      %v2780 = vsub.s32 0, %v2779
      %v2781 = vrot.slane %v2470, %v2780
      %v2782 = vlaneseq
      %v2783 = vshrl.u32 %v2782, 7
      %v2784 = vsub.s32 0, %v2783
      %v2785 = vrot.slane %v2471, %v2784
      %v2786 = vlaneseq
      %v2787 = vshrl.u32 %v2786, 7
      %v2788 = vsub.s32 0, %v2787
      %v2789 = vrot.slane %v2472, %v2788
      %v2790 = vlaneseq
      %v2791 = vshrl.u32 %v2790, 7
      %v2792 = vsub.s32 0, %v2791
      %v2793 = vrot.slane %v2473, %v2792
      %vm2794 = vcmask 1041409
      %v2795 = vsel %vm2794, %v2545, %v2541
      %vm2796 = vcmask 1042434
      %v2797 = vsel %vm2796, %v2549, %v2795
      %vm2798 = vcmask 1043459
      %v2799 = vsel %vm2798, %v2553, %v2797
      %vm2800 = vcmask 1044484
      %v2801 = vsel %vm2800, %v2557, %v2799
      %vm2802 = vcmask 1045509
      %v2803 = vsel %vm2802, %v2561, %v2801
      %vm2804 = vcmask 1046534
      %v2805 = vsel %vm2804, %v2565, %v2803
      %vm2806 = vcmask 1047559
      %v2807 = vsel %vm2806, %v2569, %v2805
      %v2808 = vsel %vm2794, %v2577, %v2573
      %v2809 = vsel %vm2796, %v2581, %v2808
      %v2810 = vsel %vm2798, %v2585, %v2809
      %v2811 = vsel %vm2800, %v2589, %v2810
      %v2812 = vsel %vm2802, %v2593, %v2811
      %v2813 = vsel %vm2804, %v2597, %v2812
      %v2814 = vsel %vm2806, %v2601, %v2813
      %v2815 = vsel %vm2794, %v2609, %v2605
      %v2816 = vsel %vm2796, %v2613, %v2815
      %v2817 = vsel %vm2798, %v2617, %v2816
      %v2818 = vsel %vm2800, %v2621, %v2817
      %v2819 = vsel %vm2802, %v2625, %v2818
      %v2820 = vsel %vm2804, %v2629, %v2819
      %v2821 = vsel %vm2806, %v2633, %v2820
      %v2822 = vsel %vm2794, %v2641, %v2637
      %v2823 = vsel %vm2796, %v2645, %v2822
      %v2824 = vsel %vm2798, %v2649, %v2823
      %v2825 = vsel %vm2800, %v2653, %v2824
      %v2826 = vsel %vm2802, %v2657, %v2825
      %v2827 = vsel %vm2804, %v2661, %v2826
      %v2828 = vsel %vm2806, %v2665, %v2827
      %v2829 = vsel %vm2794, %v2673, %v2669
      %v2830 = vsel %vm2796, %v2677, %v2829
      %v2831 = vsel %vm2798, %v2681, %v2830
      %v2832 = vsel %vm2800, %v2685, %v2831
      %v2833 = vsel %vm2802, %v2689, %v2832
      %v2834 = vsel %vm2804, %v2693, %v2833
      %v2835 = vsel %vm2806, %v2697, %v2834
      %v2836 = vsel %vm2794, %v2705, %v2701
      %v2837 = vsel %vm2796, %v2709, %v2836
      %v2838 = vsel %vm2798, %v2713, %v2837
      %v2839 = vsel %vm2800, %v2717, %v2838
      %v2840 = vsel %vm2802, %v2721, %v2839
      %v2841 = vsel %vm2804, %v2725, %v2840
      %v2842 = vsel %vm2806, %v2729, %v2841
      %v2843 = vsel %vm2794, %v2737, %v2733
      %v2844 = vsel %vm2796, %v2741, %v2843
      %v2845 = vsel %vm2798, %v2745, %v2844
      %v2846 = vsel %vm2800, %v2749, %v2845
      %v2847 = vsel %vm2802, %v2753, %v2846
      %v2848 = vsel %vm2804, %v2757, %v2847
      %v2849 = vsel %vm2806, %v2761, %v2848
      %v2850 = vsel %vm2794, %v2769, %v2765
      %v2851 = vsel %vm2796, %v2773, %v2850
      %v2852 = vsel %vm2798, %v2777, %v2851
      %v2853 = vsel %vm2800, %v2781, %v2852
      %v2854 = vsel %vm2802, %v2785, %v2853
      %v2855 = vsel %vm2804, %v2789, %v2854
      %v2856 = vsel %vm2806, %v2793, %v2855
      %s2865 = scalar_lea.vmem [#allocation3], 16
      %2866 = vst.msk [vmem:[%s2865 + $0x1] sm:$0xff] %vm376, %v2807
      %2867 = vst.msk [vmem:[%s2865 + $0x11] sm:$0xff] %vm376, %v2814
      %2868 = vst.msk [vmem:[%s2865 + $0x21] sm:$0xff] %vm376, %v2821
      %2869 = vst.msk [vmem:[%s2865 + $0x31] sm:$0xff] %vm376, %v2828
      %2870 = vst.msk [vmem:[%s2865 + $0x41] sm:$0xff] %vm376, %v2835
      %2871 = vst.msk [vmem:[%s2865 + $0x51] sm:$0xff] %vm376, %v2842
      %2872 = vst.msk [vmem:[%s2865 + $0x61] sm:$0xff] %vm376, %v2849
      %2873 = vst.msk [vmem:[%s2865 + $0x71] sm:$0xff] %vm376, %v2856
      %v2874 = vld [vmem:[#allocation3] sm:$0xff]
      %v2875 = vld [vmem:[#allocation3 + $0x10] sm:$0xff]
      %v2876 = vld [vmem:[#allocation3 + $0x20] sm:$0xff]
      %v2877 = vld [vmem:[#allocation3 + $0x30] sm:$0xff]
      %v2878 = vld [vmem:[#allocation3 + $0x40] sm:$0xff]
      %v2879 = vld [vmem:[#allocation3 + $0x50] sm:$0xff]
      %v2880 = vld [vmem:[#allocation3 + $0x60] sm:$0xff]
      %v2881 = vld [vmem:[#allocation3 + $0x70] sm:$0xff]
      %v2882 = vpack.c.bf16 %v2875, %v2874
      %v2883 = vpack.c.bf16 %v2877, %v2876
      %v2884 = vpack.c.bf16 %v2879, %v2878
      %v2885 = vpack.c.bf16 %v2881, %v2880
      %v2886 = vld [vmem:[#allocation3 + $0x1] sm:$0xff]
      %v2887 = vld [vmem:[#allocation3 + $0x11] sm:$0xff]
      %v2888 = vld [vmem:[#allocation3 + $0x21] sm:$0xff]
      %v2889 = vld [vmem:[#allocation3 + $0x31] sm:$0xff]
      %v2890 = vld [vmem:[#allocation3 + $0x41] sm:$0xff]
      %v2891 = vld [vmem:[#allocation3 + $0x51] sm:$0xff]
      %v2892 = vld [vmem:[#allocation3 + $0x61] sm:$0xff]
      %v2893 = vld [vmem:[#allocation3 + $0x71] sm:$0xff]
      %v2894 = vpack.c.bf16 %v2887, %v2886
      %v2895 = vpack.c.bf16 %v2889, %v2888
      %v2896 = vpack.c.bf16 %v2891, %v2890
      %v2897 = vpack.c.bf16 %v2893, %v2892
      %v2898 = vld [vmem:[#allocation3 + $0x2] sm:$0xff]
      %v2899 = vld [vmem:[#allocation3 + $0x12] sm:$0xff]
      %v2900 = vld [vmem:[#allocation3 + $0x22] sm:$0xff]
      %v2901 = vld [vmem:[#allocation3 + $0x32] sm:$0xff]
      %v2902 = vld [vmem:[#allocation3 + $0x42] sm:$0xff]
      %v2903 = vld [vmem:[#allocation3 + $0x52] sm:$0xff]
      %v2904 = vld [vmem:[#allocation3 + $0x62] sm:$0xff]
      %v2905 = vld [vmem:[#allocation3 + $0x72] sm:$0xff]
      %v2906 = vpack.c.bf16 %v2899, %v2898
      %v2907 = vpack.c.bf16 %v2901, %v2900
      %v2908 = vpack.c.bf16 %v2903, %v2902
      %v2909 = vpack.c.bf16 %v2905, %v2904
      %v2910 = vld [vmem:[%s2865] sm:$0xff]
      %v2911 = vld [vmem:[%s2865 + $0x10] sm:$0xff]
      %v2912 = vld [vmem:[%s2865 + $0x20] sm:$0xff]
      %v2913 = vld [vmem:[%s2865 + $0x30] sm:$0xff]
      %v2914 = vld [vmem:[%s2865 + $0x40] sm:$0xff]
      %v2915 = vld [vmem:[%s2865 + $0x50] sm:$0xff]
      %v2916 = vld [vmem:[%s2865 + $0x60] sm:$0xff]
      %v2917 = vld [vmem:[%s2865 + $0x70] sm:$0xff]
      %v2918 = vpack.c.bf16 %v2911, %v2910
      %v2919 = vpack.c.bf16 %v2913, %v2912
      %v2920 = vpack.c.bf16 %v2915, %v2914
      %v2921 = vpack.c.bf16 %v2917, %v2916
      %v2922 = vld [vmem:[%s2865 + $0x1] sm:$0xff]
      %v2923 = vld [vmem:[%s2865 + $0x11] sm:$0xff]
      %v2924 = vld [vmem:[%s2865 + $0x21] sm:$0xff]
      %v2925 = vld [vmem:[%s2865 + $0x31] sm:$0xff]
      %v2926 = vld [vmem:[%s2865 + $0x41] sm:$0xff]
      %v2927 = vld [vmem:[%s2865 + $0x51] sm:$0xff]
      %v2928 = vld [vmem:[%s2865 + $0x61] sm:$0xff]
      %v2929 = vld [vmem:[%s2865 + $0x71] sm:$0xff]
      %v2930 = vpack.c.bf16 %v2923, %v2922
      %v2931 = vpack.c.bf16 %v2925, %v2924
      %v2932 = vpack.c.bf16 %v2927, %v2926
      %v2933 = vpack.c.bf16 %v2929, %v2928
      %v2934 = vld [vmem:[%s2865 + $0x2] sm:$0xff]
      %v2935 = vld [vmem:[%s2865 + $0x12] sm:$0xff]
      %v2936 = vld [vmem:[%s2865 + $0x22] sm:$0xff]
      %v2937 = vld [vmem:[%s2865 + $0x32] sm:$0xff]
      %v2938 = vld [vmem:[%s2865 + $0x42] sm:$0xff]
      %v2939 = vld [vmem:[%s2865 + $0x52] sm:$0xff]
      %v2940 = vld [vmem:[%s2865 + $0x62] sm:$0xff]
      %v2941 = vld [vmem:[%s2865 + $0x72] sm:$0xff]
      %v2942 = vpack.c.bf16 %v2935, %v2934
      %v2943 = vpack.c.bf16 %v2937, %v2936
      %v2944 = vpack.c.bf16 %v2939, %v2938
      %v2945 = vpack.c.bf16 %v2941, %v2940
      %s2946 = scalar_lea.vmem [#allocation3], 32
      %v2947 = vld [vmem:[%s2946] sm:$0xff]
      %v2948 = vld [vmem:[%s2946 + $0x10] sm:$0xff]
      %v2949 = vld [vmem:[%s2946 + $0x20] sm:$0xff]
      %v2950 = vld [vmem:[%s2946 + $0x30] sm:$0xff]
      %v2951 = vld [vmem:[%s2946 + $0x40] sm:$0xff]
      %v2952 = vld [vmem:[%s2946 + $0x50] sm:$0xff]
      %v2953 = vld [vmem:[%s2946 + $0x60] sm:$0xff]
      %v2954 = vld [vmem:[%s2946 + $0x70] sm:$0xff]
      %v2955 = vpack.c.bf16 %v2948, %v2947
      %v2956 = vpack.c.bf16 %v2950, %v2949
      %v2957 = vpack.c.bf16 %v2952, %v2951
      %v2958 = vpack.c.bf16 %v2954, %v2953
      %v2959 = vld [vmem:[%s2946 + $0x1] sm:$0xff]
      %v2960 = vld [vmem:[%s2946 + $0x11] sm:$0xff]
      %v2961 = vld [vmem:[%s2946 + $0x21] sm:$0xff]
      %v2962 = vld [vmem:[%s2946 + $0x31] sm:$0xff]
      %v2963 = vld [vmem:[%s2946 + $0x41] sm:$0xff]
      %v2964 = vld [vmem:[%s2946 + $0x51] sm:$0xff]
      %v2965 = vld [vmem:[%s2946 + $0x61] sm:$0xff]
      %v2966 = vld [vmem:[%s2946 + $0x71] sm:$0xff]
      %v2967 = vpack.c.bf16 %v2960, %v2959
      %v2968 = vpack.c.bf16 %v2962, %v2961
      %v2969 = vpack.c.bf16 %v2964, %v2963
      %v2970 = vpack.c.bf16 %v2966, %v2965
      %v2971 = vld [vmem:[%s2946 + $0x2] sm:$0xff]
      %v2972 = vld [vmem:[%s2946 + $0x12] sm:$0xff]
      %v2973 = vld [vmem:[%s2946 + $0x22] sm:$0xff]
      %v2974 = vld [vmem:[%s2946 + $0x32] sm:$0xff]
      %v2975 = vld [vmem:[%s2946 + $0x42] sm:$0xff]
      %v2976 = vld [vmem:[%s2946 + $0x52] sm:$0xff]
      %v2977 = vld [vmem:[%s2946 + $0x62] sm:$0xff]
      %v2978 = vld [vmem:[%s2946 + $0x72] sm:$0xff]
      %v2979 = vpack.c.bf16 %v2972, %v2971
      %v2980 = vpack.c.bf16 %v2974, %v2973
      %v2981 = vpack.c.bf16 %v2976, %v2975
      %v2982 = vpack.c.bf16 %v2978, %v2977
      %2987 = vrot.lane.b32.xlu0 %v2894, 16
      %v2988 = vpop.permute.xlu0 %2987
      %2989 = vrot.lane.b32.xlu0 %v2895, 16
      %v2990 = vpop.permute.xlu0 %2989
      %2991 = vrot.lane.b32.xlu0 %v2896, 16
      %v2992 = vpop.permute.xlu0 %2991
      %2993 = vrot.lane.b32.xlu0 %v2897, 16
      %v2994 = vpop.permute.xlu0 %2993
      %2999 = vrot.lane.b32.xlu0 %v2906, 32
      %v3000 = vpop.permute.xlu0 %2999
      %3001 = vrot.lane.b32.xlu0 %v2907, 32
      %v3002 = vpop.permute.xlu0 %3001
      %3003 = vrot.lane.b32.xlu0 %v2908, 32
      %v3004 = vpop.permute.xlu0 %3003
      %3005 = vrot.lane.b32.xlu0 %v2909, 32
      %v3006 = vpop.permute.xlu0 %3005
      %3011 = vrot.lane.b32.xlu0 %v2918, 48
      %v3012 = vpop.permute.xlu0 %3011
      %3013 = vrot.lane.b32.xlu0 %v2919, 48
      %v3014 = vpop.permute.xlu0 %3013
      %3015 = vrot.lane.b32.xlu0 %v2920, 48
      %v3016 = vpop.permute.xlu0 %3015
      %3017 = vrot.lane.b32.xlu0 %v2921, 48
      %v3018 = vpop.permute.xlu0 %3017
      %3023 = vrot.lane.b32.xlu0 %v2930, 64
      %v3024 = vpop.permute.xlu0 %3023
      %3025 = vrot.lane.b32.xlu0 %v2931, 64
      %v3026 = vpop.permute.xlu0 %3025
      %3027 = vrot.lane.b32.xlu0 %v2932, 64
      %v3028 = vpop.permute.xlu0 %3027
      %3029 = vrot.lane.b32.xlu0 %v2933, 64
      %v3030 = vpop.permute.xlu0 %3029
      %3035 = vrot.lane.b32.xlu0 %v2942, 80
      %v3036 = vpop.permute.xlu0 %3035
      %3037 = vrot.lane.b32.xlu0 %v2943, 80
      %v3038 = vpop.permute.xlu0 %3037
      %3039 = vrot.lane.b32.xlu0 %v2944, 80
      %v3040 = vpop.permute.xlu0 %3039
      %3041 = vrot.lane.b32.xlu0 %v2945, 80
      %v3042 = vpop.permute.xlu0 %3041
      %3047 = vrot.lane.b32.xlu0 %v2955, 96
      %v3048 = vpop.permute.xlu0 %3047
      %3049 = vrot.lane.b32.xlu0 %v2956, 96
      %v3050 = vpop.permute.xlu0 %3049
      %3051 = vrot.lane.b32.xlu0 %v2957, 96
      %v3052 = vpop.permute.xlu0 %3051
      %3053 = vrot.lane.b32.xlu0 %v2958, 96
      %v3054 = vpop.permute.xlu0 %3053
      %3059 = vrot.lane.b32.xlu0 %v2967, 112
      %v3060 = vpop.permute.xlu0 %3059
      %3061 = vrot.lane.b32.xlu0 %v2968, 112
      %v3062 = vpop.permute.xlu0 %3061
      %3063 = vrot.lane.b32.xlu0 %v2969, 112
      %v3064 = vpop.permute.xlu0 %3063
      %3065 = vrot.lane.b32.xlu0 %v2970, 112
      %v3066 = vpop.permute.xlu0 %3065
      %v3069 = vsel %vm376, %v2882, %v2988
      %v3072 = vsel %vm376, %v2883, %v2990
      %v3075 = vsel %vm376, %v2884, %v2992
      %v3078 = vsel %vm376, %v2885, %v2994
      %vm3079 = vcmask 261120
      %v3081 = vsel %vm3079, %v3069, %v3000
      %v3083 = vsel %vm3079, %v3072, %v3002
      %v3085 = vsel %vm3079, %v3075, %v3004
      %v3087 = vsel %vm3079, %v3078, %v3006
      %vm3088 = vcmask 392192
      %v3090 = vsel %vm3088, %v3081, %v3012
      %v3092 = vsel %vm3088, %v3083, %v3014
      %v3094 = vsel %vm3088, %v3085, %v3016
      %v3096 = vsel %vm3088, %v3087, %v3018
      %vm3097 = vcmask 523264
      %v3099 = vsel %vm3097, %v3090, %v3024
      %v3101 = vsel %vm3097, %v3092, %v3026
      %v3103 = vsel %vm3097, %v3094, %v3028
      %v3105 = vsel %vm3097, %v3096, %v3030
      %vm3106 = vcmask 654336
      %v3108 = vsel %vm3106, %v3099, %v3036
      %v3110 = vsel %vm3106, %v3101, %v3038
      %v3112 = vsel %vm3106, %v3103, %v3040
      %v3114 = vsel %vm3106, %v3105, %v3042
      %vm3115 = vcmask 785408
      %v3117 = vsel %vm3115, %v3108, %v3048
      %v3119 = vsel %vm3115, %v3110, %v3050
      %v3121 = vsel %vm3115, %v3112, %v3052
      %v3123 = vsel %vm3115, %v3114, %v3054
      %vm3124 = vcmask 916480
      %v3126 = vsel %vm3124, %v3117, %v3060
      %v3129 = vsel %vm3124, %v3119, %v3062
      %v3132 = vsel %vm3124, %v3121, %v3064
      %v3135 = vsel %vm3124, %v3123, %v3066
      %v3137 = vld [vmem:[%s3] sm:$0xf]
      %v3138 = vld [vmem:[%s3 + $0x4] sm:$0xf]
      %v3139 = vld [vmem:[%s3 + $0x8] sm:$0xf]
      %v3140 = vld [vmem:[%s3 + $0xc] sm:$0xf]
      %v3141 = vld [vmem:[%s3 + $0x10] sm:$0xf]
      %v3142 = vld [vmem:[%s3 + $0x14] sm:$0xf]
      %v3143 = vld [vmem:[%s3 + $0x18] sm:$0xf]
      %v3144 = vld [vmem:[%s3 + $0x1c] sm:$0xf]
      %v3145 = vld [vmem:[%s3 + $0x20] sm:$0xf]
      %v3146 = vld [vmem:[%s3 + $0x24] sm:$0xf]
      %v3147 = vld [vmem:[%s3 + $0x28] sm:$0xf]
      %v3148 = vld [vmem:[%s3 + $0x2c] sm:$0xf]
      %v3149 = vld [vmem:[%s3 + $0x30] sm:$0xf]
      %v3150 = vld [vmem:[%s3 + $0x34] sm:$0xf]
      %v3151 = vld [vmem:[%s3 + $0x38] sm:$0xf]
      %v3152 = vld [vmem:[%s3 + $0x3c] sm:$0xf]
      %v3153 = vld [vmem:[%s3 + $0x40] sm:$0xf]
      %v3154 = vld [vmem:[%s3 + $0x44] sm:$0xf]
      %v3155 = vld [vmem:[%s4] sm:$0x1]
      %v3157 = vlaneseq
      %v3158 = vshrl.u32 %v3157, 7
      %v3159 = vsub.s32 0, %v3158
      %v3160 = vrot.slane %v3155, %v3159
      %v3180 = vunpack.c.l.b16 %v3137
      %v3181 = vunpack.c.l.b16 %v3138
      %v3182 = vunpack.c.l.b16 %v3139
      %v3183 = vunpack.c.l.b16 %v3140
      %v3184 = vunpack.c.l.b16 %v3141
      %v3185 = vunpack.c.l.b16 %v3142
      %v3186 = vunpack.c.l.b16 %v3143
      %v3187 = vunpack.c.l.b16 %v3144
      %v3188 = vunpack.c.l.b16 %v3145
      %v3189 = vunpack.c.l.b16 %v3146
      %v3190 = vunpack.c.l.b16 %v3147
      %v3191 = vunpack.c.l.b16 %v3148
      %v3192 = vunpack.c.l.b16 %v3149
      %v3193 = vunpack.c.l.b16 %v3150
      %v3194 = vunpack.c.l.b16 %v3151
      %v3195 = vunpack.c.l.b16 %v3152
      %v3196 = vunpack.c.l.b16 %v3153
      %v3197 = vunpack.c.l.b16 %v3154
      %v3198 = vpack.c.b16 %v3181, %v3180
      %v3199 = vpack.c.b16 %v3183, %v3182
      %v3200 = vpack.c.b16 %v3185, %v3184
      %v3201 = vpack.c.b16 %v3187, %v3186
      %v3202 = vpack.c.b16 %v3189, %v3188
      %v3203 = vpack.c.b16 %v3191, %v3190
      %v3204 = vpack.c.b16 %v3193, %v3192
      %v3205 = vpack.c.b16 %v3195, %v3194
      %v3206 = vpack.c.b16 %v3197, %v3196
      %v3217 = vsel %vm376, %v2979, 0
      %v3220 = vsel %vm376, %v2980, 0
      %v3223 = vsel %vm376, %v2981, 0
      %v3226 = vsel %vm376, %v2982, 0
      %3228 = vmatprep.subr.bf16.mxu0 0
      %3229 = vmatpush1.bf16.msra.mxu0 %v3205
      %3230 = vmatprep.subr.bf16.mxu0 0
      %3231 = vmatpush1.bf16.msra.mxu0 %v3204
      %3232 = vmatprep.subr.bf16.mxu0 0
      %3233 = vmatpush1.bf16.msra.mxu0 %v3203
      %3234 = vmatprep.subr.bf16.mxu0 0
      %3235 = vmatpush1.bf16.msra.mxu0 %v3202
      %3236 = vmatprep.subr.bf16.mxu0 0
      %3237 = vmatpush1.bf16.msra.mxu0 %v3201
      %3238 = vmatprep.subr.bf16.mxu0 0
      %3239 = vmatpush1.bf16.msra.mxu0 %v3200
      %3240 = vmatprep.subr.bf16.mxu0 0
      %3241 = vmatpush1.bf16.msra.mxu0 %v3199
      %3242 = vmatprep.subr.bf16.mxu0 0
      %3243 = vmatpush1.bf16.msra.mxu0 %v3198
      %3244 = vmatprep.subr.bf16.mxu0 0
      %3245 = vmatpush2.bf16.msra.mxu0 0
      %3246 = vmatprep.subr.bf16.mxu0 0
      %3247 = vmatpush2.bf16.msra.mxu0 0
      %3248 = vmatprep.subr.bf16.mxu0 0
      %3249 = vmatpush2.bf16.msra.mxu0 0
      %3250 = vmatprep.subr.bf16.mxu0 0
      %3251 = vmatpush2.bf16.msra.mxu0 0
      %3252 = vmatprep.subr.bf16.mxu0 0
      %3253 = vmatpush2.bf16.msra.mxu0 0
      %3254 = vmatprep.subr.bf16.mxu0 0
      %3255 = vmatpush2.bf16.msra.mxu0 0
      %3256 = vmatprep.subr.bf16.mxu0 0
      %3257 = vmatpush2.bf16.msra.mxu0 0
      %3258 = vmatprep.subr.bf16.mxu0 0
      %3259 = vmatpush2.bf16.msra.mxu0 %v3206
      %3260 = vmatprep.mubr.bf16.mxu0 %v3217
      %3261 = vmatmul.mubr.bf16.gmra.mxu0 %v3126
      %v3262 = vpop.f32.mrf.mxu0
      %v3263 = vadd.f32 %v3160, %v3262
      %v3264 = vpop.f32.mrf.mxu0
      %v3265 = vpop.f32.mrf.mxu0
      %v3266 = vadd.f32 %v3160, %v3265
      %v3267 = vpop.f32.mrf.mxu0
      %3268 = vmatprep.mubr.bf16.mxu0 %v3220
      %3269 = vmatmul.mubr.bf16.gmra.mxu0 %v3129
      %v3270 = vpop.f32.mrf.mxu0
      %v3271 = vadd.f32 %v3160, %v3270
      %v3272 = vpop.f32.mrf.mxu0
      %v3273 = vpop.f32.mrf.mxu0
      %v3274 = vadd.f32 %v3160, %v3273
      %v3275 = vpop.f32.mrf.mxu0
      %3276 = vmatprep.mubr.bf16.mxu0 %v3223
      %3277 = vmatmul.mubr.bf16.gmra.mxu0 %v3132
      %v3278 = vpop.f32.mrf.mxu0
      %v3279 = vadd.f32 %v3160, %v3278
      %v3280 = vpop.f32.mrf.mxu0
      %v3281 = vpop.f32.mrf.mxu0
      %v3282 = vadd.f32 %v3160, %v3281
      %v3283 = vpop.f32.mrf.mxu0
      %3284 = vmatprep.mubr.bf16.mxu0 %v3226
      %3285 = vmatmul.mubr.bf16.gmra.mxu0 %v3135
      %v3286 = vpop.f32.mrf.mxu0
      %v3287 = vadd.f32 %v3160, %v3286
      %v3288 = vpop.f32.mrf.mxu0
      %v3289 = vpop.f32.mrf.mxu0
      %v3290 = vadd.f32 %v3160, %v3289
      %v3291 = vpop.f32.mrf.mxu0
      %3292 = vdwg.mxu0
      %v3293 = vmax.f32 %v3263, 0.0
      %v3294 = vmax.f32 %v3266, 0.0
      %v3295 = vmax.f32 %v3271, 0.0
      %v3296 = vmax.f32 %v3274, 0.0
      %v3297 = vmax.f32 %v3279, 0.0
      %v3298 = vmax.f32 %v3282, 0.0
      %v3299 = vmax.f32 %v3287, 0.0
      %v3300 = vmax.f32 %v3290, 0.0
      %v3301 = vmax.f32 %v3293, %v3294
      %v3302 = vmax.f32 %v3295, %v3296
      %v3303 = vmax.f32 %v3297, %v3298
      %v3304 = vmax.f32 %v3299, %v3300
      %v3309 = vcombine.high %v3301, %v3301
      %v3311 = vunpack.c.l.s4 1983009808
      %v3312 = vunpack.c.0.s8 %v3311
      %v3313 = vlaneseq
      %v3314 = vshrl.u32 %v3313, 7
      %v3315 = vsub.s32 %v3312, %v3314
      %v3316 = vrot.slane %v3301, %v3315
      %v3318 = vunpack.c.l.s4 1983009808
      %v3319 = vunpack.c.0.s8 %v3318
      %v3320 = vlaneseq
      %v3321 = vshrl.u32 %v3320, 7
      %v3322 = vsub.s32 %v3319, %v3321
      %v3323 = vrot.slane %v3309, %v3322
      %v3324 = vcombine.high %v3316, %v3316
      %v3325 = vcombine.high %v3323, %v3323
      %v3326 = vcombine.high %v3302, %v3302
      %v3328 = vunpack.c.l.s4 1983009808
      %v3329 = vunpack.c.0.s8 %v3328
      %v3330 = vlaneseq
      %v3331 = vshrl.u32 %v3330, 7
      %v3332 = vsub.s32 %v3329, %v3331
      %v3333 = vrot.slane %v3302, %v3332
      %v3335 = vunpack.c.l.s4 1983009808
      %v3336 = vunpack.c.0.s8 %v3335
      %v3337 = vlaneseq
      %v3338 = vshrl.u32 %v3337, 7
      %v3339 = vsub.s32 %v3336, %v3338
      %v3340 = vrot.slane %v3326, %v3339
      %v3341 = vcombine.high %v3333, %v3333
      %v3342 = vcombine.high %v3340, %v3340
      %v3343 = vcombine.high %v3303, %v3303
      %v3345 = vunpack.c.l.s4 1983009808
      %v3346 = vunpack.c.0.s8 %v3345
      %v3347 = vlaneseq
      %v3348 = vshrl.u32 %v3347, 7
      %v3349 = vsub.s32 %v3346, %v3348
      %v3350 = vrot.slane %v3303, %v3349
      %v3352 = vunpack.c.l.s4 1983009808
      %v3353 = vunpack.c.0.s8 %v3352
      %v3354 = vlaneseq
      %v3355 = vshrl.u32 %v3354, 7
      %v3356 = vsub.s32 %v3353, %v3355
      %v3357 = vrot.slane %v3343, %v3356
      %v3358 = vcombine.high %v3350, %v3350
      %v3359 = vcombine.high %v3357, %v3357
      %v3360 = vcombine.high %v3304, %v3304
      %v3362 = vunpack.c.l.s4 1983009808
      %v3363 = vunpack.c.0.s8 %v3362
      %v3364 = vlaneseq
      %v3365 = vshrl.u32 %v3364, 7
      %v3366 = vsub.s32 %v3363, %v3365
      %v3367 = vrot.slane %v3304, %v3366
      %v3369 = vunpack.c.l.s4 1983009808
      %v3370 = vunpack.c.0.s8 %v3369
      %v3371 = vlaneseq
      %v3372 = vshrl.u32 %v3371, 7
      %v3373 = vsub.s32 %v3370, %v3372
      %v3374 = vrot.slane %v3360, %v3373
      %v3375 = vcombine.high %v3367, %v3367
      %v3376 = vcombine.high %v3374, %v3374
      %v3393 = vrot.slane %v3316, 7
      %v3394 = vrot.slane %v3393, 2
      %v3395 = vrot.slane %v3324, 7
      %v3396 = vrot.slane %v3395, 2
      %v3397 = vrot.slane %v3323, 7
      %v3398 = vrot.slane %v3397, 2
      %v3399 = vrot.slane %v3325, 7
      %v3400 = vrot.slane %v3399, 2
      %v3401 = vrot.slane %v3333, 7
      %v3402 = vrot.slane %v3401, 2
      %v3403 = vrot.slane %v3341, 7
      %v3404 = vrot.slane %v3403, 2
      %v3405 = vrot.slane %v3340, 7
      %v3406 = vrot.slane %v3405, 2
      %v3407 = vrot.slane %v3342, 7
      %v3408 = vrot.slane %v3407, 2
      %v3409 = vrot.slane %v3350, 7
      %v3410 = vrot.slane %v3409, 2
      %v3411 = vrot.slane %v3358, 7
      %v3412 = vrot.slane %v3411, 2
      %v3413 = vrot.slane %v3357, 7
      %v3414 = vrot.slane %v3413, 2
      %v3415 = vrot.slane %v3359, 7
      %v3416 = vrot.slane %v3415, 2
      %v3417 = vrot.slane %v3367, 7
      %v3418 = vrot.slane %v3417, 2
      %v3419 = vrot.slane %v3375, 7
      %v3420 = vrot.slane %v3419, 2
      %v3421 = vrot.slane %v3374, 7
      %v3422 = vrot.slane %v3421, 2
      %v3423 = vrot.slane %v3376, 7
      %v3424 = vrot.slane %v3423, 2
      %v3441 = vmax.f32 %v3316, %v3394
      %v3442 = vmax.f32 %v3324, %v3396
      %v3443 = vmax.f32 %v3323, %v3398
      %v3444 = vmax.f32 %v3325, %v3400
      %v3445 = vmax.f32 %v3333, %v3402
      %v3446 = vmax.f32 %v3341, %v3404
      %v3447 = vmax.f32 %v3340, %v3406
      %v3448 = vmax.f32 %v3342, %v3408
      %v3449 = vmax.f32 %v3350, %v3410
      %v3450 = vmax.f32 %v3358, %v3412
      %v3451 = vmax.f32 %v3357, %v3414
      %v3452 = vmax.f32 %v3359, %v3416
      %v3453 = vmax.f32 %v3367, %v3418
      %v3454 = vmax.f32 %v3375, %v3420
      %v3455 = vmax.f32 %v3374, %v3422
      %v3456 = vmax.f32 %v3376, %v3424
      %v3473 = vlaneseq
      %v3474 = vshrl.u32 %v3473, 7
      %v3475 = vsub.s32 0, %v3474
      %v3476 = vrot.slane %v3441, %v3475
      %v3477 = vlaneseq
      %v3478 = vshrl.u32 %v3477, 7
      %v3479 = vsub.s32 0, %v3478
      %v3480 = vrot.slane %v3442, %v3479
      %v3481 = vlaneseq
      %v3482 = vshrl.u32 %v3481, 7
      %v3483 = vsub.s32 0, %v3482
      %v3484 = vrot.slane %v3443, %v3483
      %v3485 = vlaneseq
      %v3486 = vshrl.u32 %v3485, 7
      %v3487 = vsub.s32 0, %v3486
      %v3488 = vrot.slane %v3444, %v3487
      %v3489 = vlaneseq
      %v3490 = vshrl.u32 %v3489, 7
      %v3491 = vsub.s32 0, %v3490
      %v3492 = vrot.slane %v3445, %v3491
      %v3493 = vlaneseq
      %v3494 = vshrl.u32 %v3493, 7
      %v3495 = vsub.s32 0, %v3494
      %v3496 = vrot.slane %v3446, %v3495
      %v3497 = vlaneseq
      %v3498 = vshrl.u32 %v3497, 7
      %v3499 = vsub.s32 0, %v3498
      %v3500 = vrot.slane %v3447, %v3499
      %v3501 = vlaneseq
      %v3502 = vshrl.u32 %v3501, 7
      %v3503 = vsub.s32 0, %v3502
      %v3504 = vrot.slane %v3448, %v3503
      %v3505 = vlaneseq
      %v3506 = vshrl.u32 %v3505, 7
      %v3507 = vsub.s32 0, %v3506
      %v3508 = vrot.slane %v3449, %v3507
      %v3509 = vlaneseq
      %v3510 = vshrl.u32 %v3509, 7
      %v3511 = vsub.s32 0, %v3510
      %v3512 = vrot.slane %v3450, %v3511
      %v3513 = vlaneseq
      %v3514 = vshrl.u32 %v3513, 7
      %v3515 = vsub.s32 0, %v3514
      %v3516 = vrot.slane %v3451, %v3515
      %v3517 = vlaneseq
      %v3518 = vshrl.u32 %v3517, 7
      %v3519 = vsub.s32 0, %v3518
      %v3520 = vrot.slane %v3452, %v3519
      %v3521 = vlaneseq
      %v3522 = vshrl.u32 %v3521, 7
      %v3523 = vsub.s32 0, %v3522
      %v3524 = vrot.slane %v3453, %v3523
      %v3525 = vlaneseq
      %v3526 = vshrl.u32 %v3525, 7
      %v3527 = vsub.s32 0, %v3526
      %v3528 = vrot.slane %v3454, %v3527
      %v3529 = vlaneseq
      %v3530 = vshrl.u32 %v3529, 7
      %v3531 = vsub.s32 0, %v3530
      %v3532 = vrot.slane %v3455, %v3531
      %v3533 = vlaneseq
      %v3534 = vshrl.u32 %v3533, 7
      %v3535 = vsub.s32 0, %v3534
      %v3536 = vrot.slane %v3456, %v3535
      %v3537 = vsel %vm2794, %v3480, %v3476
      %v3538 = vsel %vm2796, %v3484, %v3537
      %v3539 = vsel %vm2798, %v3488, %v3538
      %v3540 = vsel %vm2794, %v3496, %v3492
      %v3541 = vsel %vm2796, %v3500, %v3540
      %v3542 = vsel %vm2798, %v3504, %v3541
      %v3543 = vsel %vm2794, %v3512, %v3508
      %v3544 = vsel %vm2796, %v3516, %v3543
      %v3545 = vsel %vm2798, %v3520, %v3544
      %v3546 = vsel %vm2794, %v3528, %v3524
      %v3547 = vsel %vm2796, %v3532, %v3546
      %v3548 = vsel %vm2798, %v3536, %v3547
      %s3553 = scalar_lea.vmem [#allocation4], 8
      %vm3554 = vcmask 257024
      %3555 = vst.msk [vmem:[%s3553 + $0x1] sm:$0xf] %vm3554, %v3539
      %3556 = vst.msk [vmem:[%s3553 + $0x9] sm:$0xf] %vm3554, %v3542
      %3557 = vst.msk [vmem:[%s3553 + $0x11] sm:$0xf] %vm3554, %v3545
      %3558 = vst.msk [vmem:[%s3553 + $0x19] sm:$0xf] %vm3554, %v3548
      %v3559 = vld [vmem:[#allocation4] sm:$0xf]
      %v3560 = vld [vmem:[#allocation4 + $0x8] sm:$0xf]
      %v3561 = vld [vmem:[#allocation4 + $0x10] sm:$0xf]
      %v3562 = vld [vmem:[#allocation4 + $0x18] sm:$0xf]
      %v3567 = vcombine.low %v3559, %v3560
      %v3568 = vcombine.low %v3561, %v3562
      %v3571 = vpack.c.bf16 %v3568, %v3567
      %v3572 = vld [vmem:[#allocation4 + $0x1] sm:$0xf]
      %v3573 = vld [vmem:[#allocation4 + $0x9] sm:$0xf]
      %v3574 = vld [vmem:[#allocation4 + $0x11] sm:$0xf]
      %v3575 = vld [vmem:[#allocation4 + $0x19] sm:$0xf]
      %v3580 = vcombine.low %v3572, %v3573
      %v3581 = vcombine.low %v3574, %v3575
      %v3584 = vpack.c.bf16 %v3581, %v3580
      %v3585 = vld [vmem:[#allocation4 + $0x2] sm:$0xf]
      %v3586 = vld [vmem:[#allocation4 + $0xa] sm:$0xf]
      %v3587 = vld [vmem:[#allocation4 + $0x12] sm:$0xf]
      %v3588 = vld [vmem:[#allocation4 + $0x1a] sm:$0xf]
      %v3593 = vcombine.low %v3585, %v3586
      %v3594 = vcombine.low %v3587, %v3588
      %v3597 = vpack.c.bf16 %v3594, %v3593
      %v3598 = vld [vmem:[%s3553] sm:$0xf]
      %v3599 = vld [vmem:[%s3553 + $0x8] sm:$0xf]
      %v3600 = vld [vmem:[%s3553 + $0x10] sm:$0xf]
      %v3601 = vld [vmem:[%s3553 + $0x18] sm:$0xf]
      %v3606 = vcombine.low %v3598, %v3599
      %v3607 = vcombine.low %v3600, %v3601
      %v3610 = vpack.c.bf16 %v3607, %v3606
      %v3611 = vld [vmem:[%s3553 + $0x1] sm:$0xf]
      %v3612 = vld [vmem:[%s3553 + $0x9] sm:$0xf]
      %v3613 = vld [vmem:[%s3553 + $0x11] sm:$0xf]
      %v3614 = vld [vmem:[%s3553 + $0x19] sm:$0xf]
      %v3619 = vcombine.low %v3611, %v3612
      %v3620 = vcombine.low %v3613, %v3614
      %v3623 = vpack.c.bf16 %v3620, %v3619
      %v3624 = vld [vmem:[%s3553 + $0x2] sm:$0xf]
      %v3625 = vld [vmem:[%s3553 + $0xa] sm:$0xf]
      %v3626 = vld [vmem:[%s3553 + $0x12] sm:$0xf]
      %v3627 = vld [vmem:[%s3553 + $0x1a] sm:$0xf]
      %v3632 = vcombine.low %v3624, %v3625
      %v3633 = vcombine.low %v3626, %v3627
      %v3636 = vpack.c.bf16 %v3633, %v3632
      %s3637 = scalar_lea.vmem [#allocation4], 16
      %v3638 = vld [vmem:[%s3637] sm:$0xf]
      %v3639 = vld [vmem:[%s3637 + $0x8] sm:$0xf]
      %v3640 = vld [vmem:[%s3637 + $0x10] sm:$0xf]
      %v3641 = vld [vmem:[%s3637 + $0x18] sm:$0xf]
      %v3646 = vcombine.low %v3638, %v3639
      %v3647 = vcombine.low %v3640, %v3641
      %v3650 = vpack.c.bf16 %v3647, %v3646
      %v3651 = vld [vmem:[%s3637 + $0x1] sm:$0xf]
      %v3652 = vld [vmem:[%s3637 + $0x9] sm:$0xf]
      %v3653 = vld [vmem:[%s3637 + $0x11] sm:$0xf]
      %v3654 = vld [vmem:[%s3637 + $0x19] sm:$0xf]
      %v3659 = vcombine.low %v3651, %v3652
      %v3660 = vcombine.low %v3653, %v3654
      %v3663 = vpack.c.bf16 %v3660, %v3659
      %v3664 = vld [vmem:[%s3637 + $0x2] sm:$0xf]
      %v3665 = vld [vmem:[%s3637 + $0xa] sm:$0xf]
      %v3666 = vld [vmem:[%s3637 + $0x12] sm:$0xf]
      %v3667 = vld [vmem:[%s3637 + $0x1a] sm:$0xf]
      %v3672 = vcombine.low %v3664, %v3665
      %v3673 = vcombine.low %v3666, %v3667
      %v3676 = vpack.c.bf16 %v3673, %v3672
      %3678 = vrot.lane.b32.xlu0 %v3584, 32
      %v3679 = vpop.permute.xlu0 %3678
      %3681 = vrot.lane.b32.xlu0 %v3597, 64
      %v3682 = vpop.permute.xlu0 %3681
      %3684 = vrot.lane.b32.xlu0 %v3610, 96
      %v3685 = vpop.permute.xlu0 %3684
      %3687 = vrot.lane.b32.xlu0 %v3636, 32
      %v3688 = vpop.permute.xlu0 %3687
      %3690 = vrot.lane.b32.xlu0 %v3650, 64
      %v3691 = vpop.permute.xlu0 %3690
      %3693 = vrot.lane.b32.xlu0 %v3663, 96
      %v3694 = vpop.permute.xlu0 %3693
      %v3697 = vsel %vm3079, %v3571, %v3679
      %v3699 = vsel %vm3097, %v3697, %v3682
      %v3701 = vsel %vm3115, %v3699, %v3685
      %v3705 = vsel %vm3079, %v3623, %v3688
      %v3707 = vsel %vm3097, %v3705, %v3691
      %v3709 = vsel %vm3115, %v3707, %v3694
      %v3711 = vld [vmem:[%s5] sm:$0xf]
      %v3712 = vld [vmem:[%s5 + $0x4] sm:$0xf]
      %v3713 = vld [vmem:[%s5 + $0x8] sm:$0xf]
      %v3714 = vld [vmem:[%s5 + $0xc] sm:$0xf]
      %v3715 = vld [vmem:[%s5 + $0x10] sm:$0xf]
      %v3716 = vld [vmem:[%s5 + $0x14] sm:$0xf]
      %v3717 = vld [vmem:[%s5 + $0x18] sm:$0xf]
      %v3718 = vld [vmem:[%s5 + $0x1c] sm:$0xf]
      %v3719 = vld [vmem:[%s5 + $0x20] sm:$0xf]
      %v3720 = vld [vmem:[%s5 + $0x24] sm:$0xf]
      %v3721 = vld [vmem:[%s5 + $0x28] sm:$0xf]
      %v3722 = vld [vmem:[%s5 + $0x2c] sm:$0xf]
      %v3723 = vld [vmem:[%s5 + $0x30] sm:$0xf]
      %v3724 = vld [vmem:[%s5 + $0x34] sm:$0xf]
      %v3725 = vld [vmem:[%s5 + $0x38] sm:$0xf]
      %v3726 = vld [vmem:[%s5 + $0x3c] sm:$0xf]
      %v3727 = vld [vmem:[%s5 + $0x40] sm:$0xf]
      %v3728 = vld [vmem:[%s5 + $0x44] sm:$0xf]
      %v3729 = vld [vmem:[%s5 + $0x48] sm:$0xf]
      %v3730 = vld [vmem:[%s5 + $0x4c] sm:$0xf]
      %v3731 = vld [vmem:[%s5 + $0x50] sm:$0xf]
      %v3732 = vld [vmem:[%s5 + $0x54] sm:$0xf]
      %v3733 = vld [vmem:[%s5 + $0x58] sm:$0xf]
      %v3734 = vld [vmem:[%s5 + $0x5c] sm:$0xf]
      %v3735 = vld [vmem:[%s5 + $0x60] sm:$0xf]
      %v3736 = vld [vmem:[%s5 + $0x64] sm:$0xf]
      %v3737 = vld [vmem:[%s5 + $0x68] sm:$0xf]
      %v3738 = vld [vmem:[%s5 + $0x6c] sm:$0xf]
      %v3739 = vld [vmem:[%s5 + $0x70] sm:$0xf]
      %v3740 = vld [vmem:[%s5 + $0x74] sm:$0xf]
      %v3741 = vld [vmem:[%s5 + $0x78] sm:$0xf]
      %v3742 = vld [vmem:[%s5 + $0x7c] sm:$0xf]
      %v3743 = vld [vmem:[%s5 + $0x80] sm:$0xf]
      %v3744 = vld [vmem:[%s5 + $0x84] sm:$0xf]
      %v3745 = vld [vmem:[%s5 + $0x88] sm:$0xf]
      %v3746 = vld [vmem:[%s5 + $0x8c] sm:$0xf]
      %v3747 = vld [vmem:[%s6] sm:$0x1]
      %v3749 = vlaneseq
      %v3750 = vshrl.u32 %v3749, 7
      %v3751 = vsub.s32 0, %v3750
      %v3752 = vrot.slane %v3747, %v3751
      %v3790 = vunpack.c.l.b16 %v3711
      %v3791 = vunpack.c.l.b16 %v3712
      %v3792 = vunpack.c.l.b16 %v3713
      %v3793 = vunpack.c.l.b16 %v3714
      %v3794 = vunpack.c.l.b16 %v3715
      %v3795 = vunpack.c.l.b16 %v3716
      %v3796 = vunpack.c.l.b16 %v3717
      %v3797 = vunpack.c.l.b16 %v3718
      %v3798 = vunpack.c.l.b16 %v3719
      %v3799 = vunpack.c.l.b16 %v3720
      %v3800 = vunpack.c.l.b16 %v3721
      %v3801 = vunpack.c.l.b16 %v3722
      %v3802 = vunpack.c.l.b16 %v3723
      %v3803 = vunpack.c.l.b16 %v3724
      %v3804 = vunpack.c.l.b16 %v3725
      %v3805 = vunpack.c.l.b16 %v3726
      %v3806 = vunpack.c.l.b16 %v3727
      %v3807 = vunpack.c.l.b16 %v3728
      %v3808 = vunpack.c.l.b16 %v3729
      %v3809 = vunpack.c.l.b16 %v3730
      %v3810 = vunpack.c.l.b16 %v3731
      %v3811 = vunpack.c.l.b16 %v3732
      %v3812 = vunpack.c.l.b16 %v3733
      %v3813 = vunpack.c.l.b16 %v3734
      %v3814 = vunpack.c.l.b16 %v3735
      %v3815 = vunpack.c.l.b16 %v3736
      %v3816 = vunpack.c.l.b16 %v3737
      %v3817 = vunpack.c.l.b16 %v3738
      %v3818 = vunpack.c.l.b16 %v3739
      %v3819 = vunpack.c.l.b16 %v3740
      %v3820 = vunpack.c.l.b16 %v3741
      %v3821 = vunpack.c.l.b16 %v3742
      %v3822 = vunpack.c.l.b16 %v3743
      %v3823 = vunpack.c.l.b16 %v3744
      %v3824 = vunpack.c.l.b16 %v3745
      %v3825 = vunpack.c.l.b16 %v3746
      %v3826 = vpack.c.b16 %v3791, %v3790
      %v3827 = vpack.c.b16 %v3793, %v3792
      %v3828 = vpack.c.b16 %v3795, %v3794
      %v3829 = vpack.c.b16 %v3797, %v3796
      %v3830 = vpack.c.b16 %v3799, %v3798
      %v3831 = vpack.c.b16 %v3801, %v3800
      %v3832 = vpack.c.b16 %v3803, %v3802
      %v3833 = vpack.c.b16 %v3805, %v3804
      %v3834 = vpack.c.b16 %v3807, %v3806
      %v3835 = vpack.c.b16 %v3809, %v3808
      %v3836 = vpack.c.b16 %v3811, %v3810
      %v3837 = vpack.c.b16 %v3813, %v3812
      %v3838 = vpack.c.b16 %v3815, %v3814
      %v3839 = vpack.c.b16 %v3817, %v3816
      %v3840 = vpack.c.b16 %v3819, %v3818
      %v3841 = vpack.c.b16 %v3821, %v3820
      %v3842 = vpack.c.b16 %v3823, %v3822
      %v3843 = vpack.c.b16 %v3825, %v3824
      %v3863 = vsel %vm3079, %v3676, 0
      %3865 = vmatprep.subr.bf16.mxu0 0
      %3866 = vmatpush1.bf16.msra.mxu0 %v3833
      %3867 = vmatprep.subr.bf16.mxu0 0
      %3868 = vmatpush1.bf16.msra.mxu0 %v3832
      %3869 = vmatprep.subr.bf16.mxu0 0
      %3870 = vmatpush1.bf16.msra.mxu0 %v3831
      %3871 = vmatprep.subr.bf16.mxu0 0
      %3872 = vmatpush1.bf16.msra.mxu0 %v3830
      %3873 = vmatprep.subr.bf16.mxu0 0
      %3874 = vmatpush1.bf16.msra.mxu0 %v3829
      %3875 = vmatprep.subr.bf16.mxu0 0
      %3876 = vmatpush1.bf16.msra.mxu0 %v3828
      %3877 = vmatprep.subr.bf16.mxu0 0
      %3878 = vmatpush1.bf16.msra.mxu0 %v3827
      %3879 = vmatprep.subr.bf16.mxu0 0
      %3880 = vmatpush1.bf16.msra.mxu0 %v3826
      %3881 = vmatprep.subr.bf16.mxu0 0
      %3882 = vmatpush2.bf16.msra.mxu0 %v3841
      %3883 = vmatprep.subr.bf16.mxu0 0
      %3884 = vmatpush2.bf16.msra.mxu0 %v3840
      %3885 = vmatprep.subr.bf16.mxu0 0
      %3886 = vmatpush2.bf16.msra.mxu0 %v3839
      %3887 = vmatprep.subr.bf16.mxu0 0
      %3888 = vmatpush2.bf16.msra.mxu0 %v3838
      %3889 = vmatprep.subr.bf16.mxu0 0
      %3890 = vmatpush2.bf16.msra.mxu0 %v3837
      %3891 = vmatprep.subr.bf16.mxu0 0
      %3892 = vmatpush2.bf16.msra.mxu0 %v3836
      %3893 = vmatprep.subr.bf16.mxu0 0
      %3894 = vmatpush2.bf16.msra.mxu0 %v3835
      %3895 = vmatprep.subr.bf16.mxu0 0
      %3896 = vmatpush2.bf16.msra.mxu0 %v3834
      %3897 = vmatprep.mubr.bf16.mxu0 %v3709
      %3898 = vmatmul.mubr.bf16.gmra.mxu0 %v3701
      %v3899 = vpop.f32.mrf.mxu0
      %v3900 = vadd.f32 %v3752, %v3899
      %v3901 = vpop.f32.mrf.mxu0
      %v3902 = vpop.f32.mrf.mxu0
      %v3903 = vadd.f32 %v3752, %v3902
      %v3904 = vpop.f32.mrf.mxu0
      %3905 = vdwg.mxu0
      %3906 = vmatprep.subr.bf16.mxu0 0
      %3907 = vmatpush1.bf16.msra.mxu0 0
      %3908 = vmatprep.subr.bf16.mxu0 0
      %3909 = vmatpush1.bf16.msra.mxu0 0
      %3910 = vmatprep.subr.bf16.mxu0 0
      %3911 = vmatpush1.bf16.msra.mxu0 0
      %3912 = vmatprep.subr.bf16.mxu0 0
      %3913 = vmatpush1.bf16.msra.mxu0 0
      %3914 = vmatprep.subr.bf16.mxu0 0
      %3915 = vmatpush1.bf16.msra.mxu0 0
      %3916 = vmatprep.subr.bf16.mxu0 0
      %3917 = vmatpush1.bf16.msra.mxu0 0
      %3918 = vmatprep.subr.bf16.mxu0 0
      %3919 = vmatpush1.bf16.msra.mxu0 %v3843
      %3920 = vmatprep.subr.bf16.mxu0 0
      %3921 = vmatpush1.bf16.msra.mxu0 %v3842
      %3922 = vmatprep.subr.bf16.mxu0 0
      %3923 = vmatpush2.bf16.msra.mxu0 0
      %3924 = vmatprep.subr.bf16.mxu0 0
      %3925 = vmatpush2.bf16.msra.mxu0 0
      %3926 = vmatprep.subr.bf16.mxu0 0
      %3927 = vmatpush2.bf16.msra.mxu0 0
      %3928 = vmatprep.subr.bf16.mxu0 0
      %3929 = vmatpush2.bf16.msra.mxu0 0
      %3930 = vmatprep.subr.bf16.mxu0 0
      %3931 = vmatpush2.bf16.msra.mxu0 0
      %3932 = vmatprep.subr.bf16.mxu0 0
      %3933 = vmatpush2.bf16.msra.mxu0 0
      %3934 = vmatprep.subr.bf16.mxu0 0
      %3935 = vmatpush2.bf16.msra.mxu0 0
      %3936 = vmatprep.subr.bf16.mxu0 0
      %3937 = vmatpush2.bf16.msra.mxu0 0
      %3938 = vmatprep.mubr.bf16.mxu0 0
      %3939 = vmatmul.mubr.bf16.gmra.mxu0 %v3863
      %v3940 = vpop.f32.mrf.mxu0
      %v3941 = vadd.f32 %v3900, %v3940
      %v3942 = vpop.f32.mrf.mxu0
      %v3943 = vpop.f32.mrf.mxu0
      %v3944 = vadd.f32 %v3903, %v3943
      %v3945 = vpop.f32.mrf.mxu0
      %3946 = vdwg.mxu0
      %v3947 = vmax.f32 %v3941, 0.0
      %v3948 = vmax.f32 %v3944, 0.0
      %v3951 = vcombine.high %v3947, %v3947
      %v3952 = vcombine.high %v3948, %v3948
      %v3955 = vmax.f32 %v3947, %v3951
      %v3956 = vmax.f32 %v3948, %v3952
      %v3960 = vunpack.c.l.s4 1983009808
      %v3961 = vunpack.c.0.s8 %v3960
      %v3962 = vlaneseq
      %v3963 = vshrl.u32 %v3962, 7
      %v3964 = vsub.s32 %v3961, %v3963
      %v3965 = vrot.slane %v3955, %v3964
      %v3966 = vcombine.high %v3965, %v3965
      %v3968 = vunpack.c.l.s4 1983009808
      %v3969 = vunpack.c.0.s8 %v3968
      %v3970 = vlaneseq
      %v3971 = vshrl.u32 %v3970, 7
      %v3972 = vsub.s32 %v3969, %v3971
      %v3973 = vrot.slane %v3956, %v3972
      %v3974 = vcombine.high %v3973, %v3973
      %v3979 = vrot.slane %v3965, 7
      %v3980 = vrot.slane %v3979, 2
      %v3981 = vrot.slane %v3966, 7
      %v3982 = vrot.slane %v3981, 2
      %v3983 = vrot.slane %v3973, 7
      %v3984 = vrot.slane %v3983, 2
      %v3985 = vrot.slane %v3974, 7
      %v3986 = vrot.slane %v3985, 2
      %v3991 = vmax.f32 %v3965, %v3980
      %v3992 = vmax.f32 %v3966, %v3982
      %v3993 = vmax.f32 %v3973, %v3984
      %v3994 = vmax.f32 %v3974, %v3986
      %v3999 = vlaneseq
      %v4000 = vshrl.u32 %v3999, 7
      %v4001 = vsub.s32 0, %v4000
      %v4002 = vrot.slane %v3991, %v4001
      %v4003 = vlaneseq
      %v4004 = vshrl.u32 %v4003, 7
      %v4005 = vsub.s32 0, %v4004
      %v4006 = vrot.slane %v3992, %v4005
      %v4007 = vlaneseq
      %v4008 = vshrl.u32 %v4007, 7
      %v4009 = vsub.s32 0, %v4008
      %v4010 = vrot.slane %v3993, %v4009
      %v4011 = vlaneseq
      %v4012 = vshrl.u32 %v4011, 7
      %v4013 = vsub.s32 0, %v4012
      %v4014 = vrot.slane %v3994, %v4013
      %v4015 = vsel %vm2794, %v4006, %v4002
      %v4016 = vsel %vm2794, %v4014, %v4010
      %s4019 = scalar_lea.vmem [#allocation5], 4
      %vm4020 = vcmask 517120
      %4021 = vst.msk [vmem:[%s4019 + $0x1] sm:$0x3] %vm4020, %v4015
      %4022 = vst.msk [vmem:[%s4019 + $0x5] sm:$0x3] %vm4020, %v4016
      %v4023 = vld [vmem:[#allocation5] sm:$0x3]
      %v4024 = vld [vmem:[#allocation5 + $0x4] sm:$0x3]
      %v4027 = vcombine.low %v4023, %v4024
      %v4029 = vunpack.c.l.s4 1983009808
      %v4030 = vunpack.c.0.s8 %v4029
      %v4031 = vlaneseq
      %v4032 = vshrl.u32 %v4031, 7
      %v4033 = vsub.s32 %v4030, %v4032
      %v4034 = vrot.slane %v4027, %v4033
      %v4036 = vpack.c.bf16 %v4034, %v4034
      %v4037 = vld [vmem:[#allocation5 + $0x1] sm:$0x3]
      %v4038 = vld [vmem:[#allocation5 + $0x5] sm:$0x3]
      %v4041 = vcombine.low %v4037, %v4038
      %v4043 = vunpack.c.l.s4 1983009808
      %v4044 = vunpack.c.0.s8 %v4043
      %v4045 = vlaneseq
      %v4046 = vshrl.u32 %v4045, 7
      %v4047 = vsub.s32 %v4044, %v4046
      %v4048 = vrot.slane %v4041, %v4047
      %v4050 = vpack.c.bf16 %v4048, %v4048
      %v4051 = vld [vmem:[#allocation5 + $0x2] sm:$0x3]
      %v4052 = vld [vmem:[#allocation5 + $0x6] sm:$0x3]
      %v4055 = vcombine.low %v4051, %v4052
      %v4057 = vunpack.c.l.s4 1983009808
      %v4058 = vunpack.c.0.s8 %v4057
      %v4059 = vlaneseq
      %v4060 = vshrl.u32 %v4059, 7
      %v4061 = vsub.s32 %v4058, %v4060
      %v4062 = vrot.slane %v4055, %v4061
      %v4064 = vpack.c.bf16 %v4062, %v4062
      %v4065 = vld [vmem:[%s4019] sm:$0x3]
      %v4066 = vld [vmem:[%s4019 + $0x4] sm:$0x3]
      %v4069 = vcombine.low %v4065, %v4066
      %v4071 = vunpack.c.l.s4 1983009808
      %v4072 = vunpack.c.0.s8 %v4071
      %v4073 = vlaneseq
      %v4074 = vshrl.u32 %v4073, 7
      %v4075 = vsub.s32 %v4072, %v4074
      %v4076 = vrot.slane %v4069, %v4075
      %v4078 = vpack.c.bf16 %v4076, %v4076
      %v4079 = vld [vmem:[%s4019 + $0x1] sm:$0x3]
      %v4080 = vld [vmem:[%s4019 + $0x5] sm:$0x3]
      %v4083 = vcombine.low %v4079, %v4080
      %v4085 = vunpack.c.l.s4 1983009808
      %v4086 = vunpack.c.0.s8 %v4085
      %v4087 = vlaneseq
      %v4088 = vshrl.u32 %v4087, 7
      %v4089 = vsub.s32 %v4086, %v4088
      %v4090 = vrot.slane %v4083, %v4089
      %v4092 = vpack.c.bf16 %v4090, %v4090
      %v4093 = vld [vmem:[%s4019 + $0x2] sm:$0x3]
      %v4094 = vld [vmem:[%s4019 + $0x6] sm:$0x3]
      %v4097 = vcombine.low %v4093, %v4094
      %v4099 = vunpack.c.l.s4 1983009808
      %v4100 = vunpack.c.0.s8 %v4099
      %v4101 = vlaneseq
      %v4102 = vshrl.u32 %v4101, 7
      %v4103 = vsub.s32 %v4100, %v4102
      %v4104 = vrot.slane %v4097, %v4103
      %v4106 = vpack.c.bf16 %v4104, %v4104
      %s4107 = scalar_lea.vmem [#allocation5], 8
      %v4108 = vld [vmem:[%s4107] sm:$0x3]
      %v4109 = vld [vmem:[%s4107 + $0x4] sm:$0x3]
      %v4112 = vcombine.low %v4108, %v4109
      %v4114 = vunpack.c.l.s4 1983009808
      %v4115 = vunpack.c.0.s8 %v4114
      %v4116 = vlaneseq
      %v4117 = vshrl.u32 %v4116, 7
      %v4118 = vsub.s32 %v4115, %v4117
      %v4119 = vrot.slane %v4112, %v4118
      %v4121 = vpack.c.bf16 %v4119, %v4119
      %v4122 = vld [vmem:[%s4107 + $0x1] sm:$0x3]
      %v4123 = vld [vmem:[%s4107 + $0x5] sm:$0x3]
      %v4126 = vcombine.low %v4122, %v4123
      %v4128 = vunpack.c.l.s4 1983009808
      %v4129 = vunpack.c.0.s8 %v4128
      %v4130 = vlaneseq
      %v4131 = vshrl.u32 %v4130, 7
      %v4132 = vsub.s32 %v4129, %v4131
      %v4133 = vrot.slane %v4126, %v4132
      %v4135 = vpack.c.bf16 %v4133, %v4133
      %v4136 = vld [vmem:[%s4107 + $0x2] sm:$0x3]
      %v4137 = vld [vmem:[%s4107 + $0x6] sm:$0x3]
      %v4140 = vcombine.low %v4136, %v4137
      %v4142 = vunpack.c.l.s4 1983009808
      %v4143 = vunpack.c.0.s8 %v4142
      %v4144 = vlaneseq
      %v4145 = vshrl.u32 %v4144, 7
      %v4146 = vsub.s32 %v4143, %v4145
      %v4147 = vrot.slane %v4140, %v4146
      %v4149 = vpack.c.bf16 %v4147, %v4147
      %4151 = vrot.lane.b32.xlu0 %v4050, 64
      %v4152 = vpop.permute.xlu0 %4151
      %4154 = vrot.lane.b32.xlu0 %v4078, 64
      %v4155 = vpop.permute.xlu0 %4154
      %4157 = vrot.lane.b32.xlu0 %v4106, 64
      %v4158 = vpop.permute.xlu0 %4157
      %4160 = vrot.lane.b32.xlu0 %v4135, 64
      %v4161 = vpop.permute.xlu0 %4160
      %v4164 = vsel %vm3097, %v4036, %v4152
      %v4168 = vsel %vm3097, %v4064, %v4155
      %v4172 = vsel %vm3097, %v4092, %v4158
      %v4176 = vsel %vm3097, %v4121, %v4161
      %v4178 = vld [vmem:[%s7] sm:$0xf]
      %v4179 = vld [vmem:[%s7 + $0x4] sm:$0xf]
      %v4180 = vld [vmem:[%s7 + $0x8] sm:$0xf]
      %v4181 = vld [vmem:[%s7 + $0xc] sm:$0xf]
      %v4182 = vld [vmem:[%s7 + $0x10] sm:$0xf]
      %v4183 = vld [vmem:[%s7 + $0x14] sm:$0xf]
      %v4184 = vld [vmem:[%s7 + $0x18] sm:$0xf]
      %v4185 = vld [vmem:[%s7 + $0x1c] sm:$0xf]
      %v4186 = vld [vmem:[%s7 + $0x20] sm:$0xf]
      %v4187 = vld [vmem:[%s7 + $0x24] sm:$0xf]
      %v4188 = vld [vmem:[%s7 + $0x28] sm:$0xf]
      %v4189 = vld [vmem:[%s7 + $0x2c] sm:$0xf]
      %v4190 = vld [vmem:[%s7 + $0x30] sm:$0xf]
      %v4191 = vld [vmem:[%s7 + $0x34] sm:$0xf]
      %v4192 = vld [vmem:[%s7 + $0x38] sm:$0xf]
      %v4193 = vld [vmem:[%s7 + $0x3c] sm:$0xf]
      %v4194 = vld [vmem:[%s7 + $0x40] sm:$0xf]
      %v4195 = vld [vmem:[%s7 + $0x44] sm:$0xf]
      %v4196 = vld [vmem:[%s7 + $0x48] sm:$0xf]
      %v4197 = vld [vmem:[%s7 + $0x4c] sm:$0xf]
      %v4198 = vld [vmem:[%s7 + $0x50] sm:$0xf]
      %v4199 = vld [vmem:[%s7 + $0x54] sm:$0xf]
      %v4200 = vld [vmem:[%s7 + $0x58] sm:$0xf]
      %v4201 = vld [vmem:[%s7 + $0x5c] sm:$0xf]
      %v4202 = vld [vmem:[%s7 + $0x60] sm:$0xf]
      %v4203 = vld [vmem:[%s7 + $0x64] sm:$0xf]
      %v4204 = vld [vmem:[%s7 + $0x68] sm:$0xf]
      %v4205 = vld [vmem:[%s7 + $0x6c] sm:$0xf]
      %v4206 = vld [vmem:[%s7 + $0x70] sm:$0xf]
      %v4207 = vld [vmem:[%s7 + $0x74] sm:$0xf]
      %v4208 = vld [vmem:[%s7 + $0x78] sm:$0xf]
      %v4209 = vld [vmem:[%s7 + $0x7c] sm:$0xf]
      %v4210 = vld [vmem:[%s7 + $0x80] sm:$0xf]
      %v4211 = vld [vmem:[%s7 + $0x84] sm:$0xf]
      %v4212 = vld [vmem:[%s7 + $0x88] sm:$0xf]
      %v4213 = vld [vmem:[%s7 + $0x8c] sm:$0xf]
      %v4214 = vld [vmem:[%s7 + $0x90] sm:$0xf]
      %v4215 = vld [vmem:[%s7 + $0x94] sm:$0xf]
      %v4216 = vld [vmem:[%s7 + $0x98] sm:$0xf]
      %v4217 = vld [vmem:[%s7 + $0x9c] sm:$0xf]
      %v4218 = vld [vmem:[%s7 + $0xa0] sm:$0xf]
      %v4219 = vld [vmem:[%s7 + $0xa4] sm:$0xf]
      %v4220 = vld [vmem:[%s7 + $0xa8] sm:$0xf]
      %v4221 = vld [vmem:[%s7 + $0xac] sm:$0xf]
      %v4222 = vld [vmem:[%s7 + $0xb0] sm:$0xf]
      %v4223 = vld [vmem:[%s7 + $0xb4] sm:$0xf]
      %v4224 = vld [vmem:[%s7 + $0xb8] sm:$0xf]
      %v4225 = vld [vmem:[%s7 + $0xbc] sm:$0xf]
      %v4226 = vld [vmem:[%s7 + $0xc0] sm:$0xf]
      %v4227 = vld [vmem:[%s7 + $0xc4] sm:$0xf]
      %v4228 = vld [vmem:[%s7 + $0xc8] sm:$0xf]
      %v4229 = vld [vmem:[%s7 + $0xcc] sm:$0xf]
      %v4230 = vld [vmem:[%s7 + $0xd0] sm:$0xf]
      %v4231 = vld [vmem:[%s7 + $0xd4] sm:$0xf]
      %v4232 = vld [vmem:[%s7 + $0xd8] sm:$0xf]
      %v4233 = vld [vmem:[%s7 + $0xdc] sm:$0xf]
      %v4234 = vld [vmem:[%s7 + $0xe0] sm:$0xf]
      %v4235 = vld [vmem:[%s7 + $0xe4] sm:$0xf]
      %v4236 = vld [vmem:[%s7 + $0xe8] sm:$0xf]
      %v4237 = vld [vmem:[%s7 + $0xec] sm:$0xf]
      %v4238 = vld [vmem:[%s7 + $0xf0] sm:$0xf]
      %v4239 = vld [vmem:[%s7 + $0xf4] sm:$0xf]
      %v4240 = vld [vmem:[%s7 + $0xf8] sm:$0xf]
      %v4241 = vld [vmem:[%s7 + $0xfc] sm:$0xf]
      %v4242 = vld [vmem:[%s7 + $0x100] sm:$0xf]
      %v4243 = vld [vmem:[%s7 + $0x104] sm:$0xf]
      %v4244 = vld [vmem:[%s7 + $0x108] sm:$0xf]
      %v4245 = vld [vmem:[%s7 + $0x10c] sm:$0xf]
      %v4246 = vld [vmem:[%s7 + $0x110] sm:$0xf]
      %v4247 = vld [vmem:[%s7 + $0x114] sm:$0xf]
      %v4248 = vld [vmem:[%s7 + $0x118] sm:$0xf]
      %v4249 = vld [vmem:[%s7 + $0x11c] sm:$0xf]
      %v4250 = vld [vmem:[%s8] sm:$0x1]
      %v4252 = vlaneseq
      %v4253 = vshrl.u32 %v4252, 7
      %v4254 = vsub.s32 0, %v4253
      %v4255 = vrot.slane %v4250, %v4254
      %v4329 = vunpack.c.l.b16 %v4178
      %v4330 = vunpack.c.l.b16 %v4179
      %v4331 = vunpack.c.l.b16 %v4180
      %v4332 = vunpack.c.l.b16 %v4181
      %v4333 = vunpack.c.l.b16 %v4182
      %v4334 = vunpack.c.l.b16 %v4183
      %v4335 = vunpack.c.l.b16 %v4184
      %v4336 = vunpack.c.l.b16 %v4185
      %v4337 = vunpack.c.l.b16 %v4186
      %v4338 = vunpack.c.l.b16 %v4187
      %v4339 = vunpack.c.l.b16 %v4188
      %v4340 = vunpack.c.l.b16 %v4189
      %v4341 = vunpack.c.l.b16 %v4190
      %v4342 = vunpack.c.l.b16 %v4191
      %v4343 = vunpack.c.l.b16 %v4192
      %v4344 = vunpack.c.l.b16 %v4193
      %v4345 = vunpack.c.l.b16 %v4194
      %v4346 = vunpack.c.l.b16 %v4195
      %v4347 = vunpack.c.l.b16 %v4196
      %v4348 = vunpack.c.l.b16 %v4197
      %v4349 = vunpack.c.l.b16 %v4198
      %v4350 = vunpack.c.l.b16 %v4199
      %v4351 = vunpack.c.l.b16 %v4200
      %v4352 = vunpack.c.l.b16 %v4201
      %v4353 = vunpack.c.l.b16 %v4202
      %v4354 = vunpack.c.l.b16 %v4203
      %v4355 = vunpack.c.l.b16 %v4204
      %v4356 = vunpack.c.l.b16 %v4205
      %v4357 = vunpack.c.l.b16 %v4206
      %v4358 = vunpack.c.l.b16 %v4207
      %v4359 = vunpack.c.l.b16 %v4208
      %v4360 = vunpack.c.l.b16 %v4209
      %v4361 = vunpack.c.l.b16 %v4210
      %v4362 = vunpack.c.l.b16 %v4211
      %v4363 = vunpack.c.l.b16 %v4212
      %v4364 = vunpack.c.l.b16 %v4213
      %v4365 = vunpack.c.l.b16 %v4214
      %v4366 = vunpack.c.l.b16 %v4215
      %v4367 = vunpack.c.l.b16 %v4216
      %v4368 = vunpack.c.l.b16 %v4217
      %v4369 = vunpack.c.l.b16 %v4218
      %v4370 = vunpack.c.l.b16 %v4219
      %v4371 = vunpack.c.l.b16 %v4220
      %v4372 = vunpack.c.l.b16 %v4221
      %v4373 = vunpack.c.l.b16 %v4222
      %v4374 = vunpack.c.l.b16 %v4223
      %v4375 = vunpack.c.l.b16 %v4224
      %v4376 = vunpack.c.l.b16 %v4225
      %v4377 = vunpack.c.l.b16 %v4226
      %v4378 = vunpack.c.l.b16 %v4227
      %v4379 = vunpack.c.l.b16 %v4228
      %v4380 = vunpack.c.l.b16 %v4229
      %v4381 = vunpack.c.l.b16 %v4230
      %v4382 = vunpack.c.l.b16 %v4231
      %v4383 = vunpack.c.l.b16 %v4232
      %v4384 = vunpack.c.l.b16 %v4233
      %v4385 = vunpack.c.l.b16 %v4234
      %v4386 = vunpack.c.l.b16 %v4235
      %v4387 = vunpack.c.l.b16 %v4236
      %v4388 = vunpack.c.l.b16 %v4237
      %v4389 = vunpack.c.l.b16 %v4238
      %v4390 = vunpack.c.l.b16 %v4239
      %v4391 = vunpack.c.l.b16 %v4240
      %v4392 = vunpack.c.l.b16 %v4241
      %v4393 = vunpack.c.l.b16 %v4242
      %v4394 = vunpack.c.l.b16 %v4243
      %v4395 = vunpack.c.l.b16 %v4244
      %v4396 = vunpack.c.l.b16 %v4245
      %v4397 = vunpack.c.l.b16 %v4246
      %v4398 = vunpack.c.l.b16 %v4247
      %v4399 = vunpack.c.l.b16 %v4248
      %v4400 = vunpack.c.l.b16 %v4249
      %v4401 = vpack.c.b16 %v4330, %v4329
      %v4402 = vpack.c.b16 %v4332, %v4331
      %v4403 = vpack.c.b16 %v4334, %v4333
      %v4404 = vpack.c.b16 %v4336, %v4335
      %v4405 = vpack.c.b16 %v4338, %v4337
      %v4406 = vpack.c.b16 %v4340, %v4339
      %v4407 = vpack.c.b16 %v4342, %v4341
      %v4408 = vpack.c.b16 %v4344, %v4343
      %v4409 = vpack.c.b16 %v4346, %v4345
      %v4410 = vpack.c.b16 %v4348, %v4347
      %v4411 = vpack.c.b16 %v4350, %v4349
      %v4412 = vpack.c.b16 %v4352, %v4351
      %v4413 = vpack.c.b16 %v4354, %v4353
      %v4414 = vpack.c.b16 %v4356, %v4355
      %v4415 = vpack.c.b16 %v4358, %v4357
      %v4416 = vpack.c.b16 %v4360, %v4359
      %v4417 = vpack.c.b16 %v4362, %v4361
      %v4418 = vpack.c.b16 %v4364, %v4363
      %v4419 = vpack.c.b16 %v4366, %v4365
      %v4420 = vpack.c.b16 %v4368, %v4367
      %v4421 = vpack.c.b16 %v4370, %v4369
      %v4422 = vpack.c.b16 %v4372, %v4371
      %v4423 = vpack.c.b16 %v4374, %v4373
      %v4424 = vpack.c.b16 %v4376, %v4375
      %v4425 = vpack.c.b16 %v4378, %v4377
      %v4426 = vpack.c.b16 %v4380, %v4379
      %v4427 = vpack.c.b16 %v4382, %v4381
      %v4428 = vpack.c.b16 %v4384, %v4383
      %v4429 = vpack.c.b16 %v4386, %v4385
      %v4430 = vpack.c.b16 %v4388, %v4387
      %v4431 = vpack.c.b16 %v4390, %v4389
      %v4432 = vpack.c.b16 %v4392, %v4391
      %v4433 = vpack.c.b16 %v4394, %v4393
      %v4434 = vpack.c.b16 %v4396, %v4395
      %v4435 = vpack.c.b16 %v4398, %v4397
      %v4436 = vpack.c.b16 %v4400, %v4399
      %v4474 = vsel %vm3097, %v4149, 0
      %4476 = vmatprep.subr.bf16.mxu0 0
      %4477 = vmatpush1.bf16.msra.mxu0 %v4408
      %4478 = vmatprep.subr.bf16.mxu0 0
      %4479 = vmatpush1.bf16.msra.mxu0 %v4407
      %4480 = vmatprep.subr.bf16.mxu0 0
      %4481 = vmatpush1.bf16.msra.mxu0 %v4406
      %4482 = vmatprep.subr.bf16.mxu0 0
      %4483 = vmatpush1.bf16.msra.mxu0 %v4405
      %4484 = vmatprep.subr.bf16.mxu0 0
      %4485 = vmatpush1.bf16.msra.mxu0 %v4404
      %4486 = vmatprep.subr.bf16.mxu0 0
      %4487 = vmatpush1.bf16.msra.mxu0 %v4403
      %4488 = vmatprep.subr.bf16.mxu0 0
      %4489 = vmatpush1.bf16.msra.mxu0 %v4402
      %4490 = vmatprep.subr.bf16.mxu0 0
      %4491 = vmatpush1.bf16.msra.mxu0 %v4401
      %4492 = vmatprep.subr.bf16.mxu0 0
      %4493 = vmatpush2.bf16.msra.mxu0 %v4416
      %4494 = vmatprep.subr.bf16.mxu0 0
      %4495 = vmatpush2.bf16.msra.mxu0 %v4415
      %4496 = vmatprep.subr.bf16.mxu0 0
      %4497 = vmatpush2.bf16.msra.mxu0 %v4414
      %4498 = vmatprep.subr.bf16.mxu0 0
      %4499 = vmatpush2.bf16.msra.mxu0 %v4413
      %4500 = vmatprep.subr.bf16.mxu0 0
      %4501 = vmatpush2.bf16.msra.mxu0 %v4412
      %4502 = vmatprep.subr.bf16.mxu0 0
      %4503 = vmatpush2.bf16.msra.mxu0 %v4411
      %4504 = vmatprep.subr.bf16.mxu0 0
      %4505 = vmatpush2.bf16.msra.mxu0 %v4410
      %4506 = vmatprep.subr.bf16.mxu0 0
      %4507 = vmatpush2.bf16.msra.mxu0 %v4409
      %4508 = vmatprep.mubr.bf16.mxu0 %v4168
      %4509 = vmatmul.mubr.bf16.gmra.mxu0 %v4164
      %v4510 = vpop.f32.mrf.mxu0
      %v4511 = vadd.f32 %v4255, %v4510
      %v4512 = vpop.f32.mrf.mxu0
      %v4513 = vpop.f32.mrf.mxu0
      %v4514 = vpop.f32.mrf.mxu0
      %4515 = vdwg.mxu0
      %4516 = vmatprep.subr.bf16.mxu0 0
      %4517 = vmatpush1.bf16.msra.mxu0 %v4424
      %4518 = vmatprep.subr.bf16.mxu0 0
      %4519 = vmatpush1.bf16.msra.mxu0 %v4423
      %4520 = vmatprep.subr.bf16.mxu0 0
      %4521 = vmatpush1.bf16.msra.mxu0 %v4422
      %4522 = vmatprep.subr.bf16.mxu0 0
      %4523 = vmatpush1.bf16.msra.mxu0 %v4421
      %4524 = vmatprep.subr.bf16.mxu0 0
      %4525 = vmatpush1.bf16.msra.mxu0 %v4420
      %4526 = vmatprep.subr.bf16.mxu0 0
      %4527 = vmatpush1.bf16.msra.mxu0 %v4419
      %4528 = vmatprep.subr.bf16.mxu0 0
      %4529 = vmatpush1.bf16.msra.mxu0 %v4418
      %4530 = vmatprep.subr.bf16.mxu0 0
      %4531 = vmatpush1.bf16.msra.mxu0 %v4417
      %4532 = vmatprep.subr.bf16.mxu0 0
      %4533 = vmatpush2.bf16.msra.mxu0 %v4432
      %4534 = vmatprep.subr.bf16.mxu0 0
      %4535 = vmatpush2.bf16.msra.mxu0 %v4431
      %4536 = vmatprep.subr.bf16.mxu0 0
      %4537 = vmatpush2.bf16.msra.mxu0 %v4430
      %4538 = vmatprep.subr.bf16.mxu0 0
      %4539 = vmatpush2.bf16.msra.mxu0 %v4429
      %4540 = vmatprep.subr.bf16.mxu0 0
      %4541 = vmatpush2.bf16.msra.mxu0 %v4428
      %4542 = vmatprep.subr.bf16.mxu0 0
      %4543 = vmatpush2.bf16.msra.mxu0 %v4427
      %4544 = vmatprep.subr.bf16.mxu0 0
      %4545 = vmatpush2.bf16.msra.mxu0 %v4426
      %4546 = vmatprep.subr.bf16.mxu0 0
      %4547 = vmatpush2.bf16.msra.mxu0 %v4425
      %4548 = vmatprep.mubr.bf16.mxu0 %v4176
      %4549 = vmatmul.mubr.bf16.gmra.mxu0 %v4172
      %v4550 = vpop.f32.mrf.mxu0
      %v4551 = vadd.f32 %v4511, %v4550
      %v4552 = vpop.f32.mrf.mxu0
      %v4553 = vpop.f32.mrf.mxu0
      %v4554 = vpop.f32.mrf.mxu0
      %4555 = vdwg.mxu0
      %4556 = vmatprep.subr.bf16.mxu0 0
      %4557 = vmatpush1.bf16.msra.mxu0 0
      %4558 = vmatprep.subr.bf16.mxu0 0
      %4559 = vmatpush1.bf16.msra.mxu0 0
      %4560 = vmatprep.subr.bf16.mxu0 0
      %4561 = vmatpush1.bf16.msra.mxu0 0
      %4562 = vmatprep.subr.bf16.mxu0 0
      %4563 = vmatpush1.bf16.msra.mxu0 0
      %4564 = vmatprep.subr.bf16.mxu0 0
      %4565 = vmatpush1.bf16.msra.mxu0 %v4436
      %4566 = vmatprep.subr.bf16.mxu0 0
      %4567 = vmatpush1.bf16.msra.mxu0 %v4435
      %4568 = vmatprep.subr.bf16.mxu0 0
      %4569 = vmatpush1.bf16.msra.mxu0 %v4434
      %4570 = vmatprep.subr.bf16.mxu0 0
      %4571 = vmatpush1.bf16.msra.mxu0 %v4433
      %4572 = vmatprep.subr.bf16.mxu0 0
      %4573 = vmatpush2.bf16.msra.mxu0 0
      %4574 = vmatprep.subr.bf16.mxu0 0
      %4575 = vmatpush2.bf16.msra.mxu0 0
      %4576 = vmatprep.subr.bf16.mxu0 0
      %4577 = vmatpush2.bf16.msra.mxu0 0
      %4578 = vmatprep.subr.bf16.mxu0 0
      %4579 = vmatpush2.bf16.msra.mxu0 0
      %4580 = vmatprep.subr.bf16.mxu0 0
      %4581 = vmatpush2.bf16.msra.mxu0 0
      %4582 = vmatprep.subr.bf16.mxu0 0
      %4583 = vmatpush2.bf16.msra.mxu0 0
      %4584 = vmatprep.subr.bf16.mxu0 0
      %4585 = vmatpush2.bf16.msra.mxu0 0
      %4586 = vmatprep.subr.bf16.mxu0 0
      %4587 = vmatpush2.bf16.msra.mxu0 0
      %4588 = vmatprep.mubr.bf16.mxu0 0
      %4589 = vmatmul.mubr.bf16.gmra.mxu0 %v4474
      %v4590 = vpop.f32.mrf.mxu0
      %v4591 = vadd.f32 %v4551, %v4590
      %v4592 = vpop.f32.mrf.mxu0
      %v4593 = vpop.f32.mrf.mxu0
      %v4594 = vpop.f32.mrf.mxu0
      %4595 = vdwg.mxu0
      %v4596 = vmax.f32 %v4591, 0.0
      %vm4597 = vcmask 1043456
      %v4598 = vsel %vm4597, %v4596, 0.0
      %v4599 = vrot.slane %v4598, 4
      %v4600 = vadd.f32 %v4598, %v4599
      %v4601 = vrot.slane %v4600, 2
      %v4602 = vadd.f32 %v4600, %v4601
      %v4603 = vrot.slane %v4602, 1
      %v4604 = vadd.f32 %v4602, %v4603
      %v4605 = vmul.f32 %v4604, 0.25
      %4606 = vst [vmem:[%s328] sm:$0x1] %v4605
      %p4607 = scmp.lt.s32.totalorder %s20, 1
      %s4608 = scalar_select %p4607, %s20, 1
      %s4609 = scalar_lea.vmem %s9, %s4608
      // Predicated region
      $region57: #{street_aid_cnn_forward.1} parent=55 // pred_check
        %p4610 = pneg %p232
      $region58: #{street_aid_cnn_forward.1} parent=55 // pred_check_branch
        %4612 = sbr.rel (%p4610) target = $region60
      $region59: #{street_aid_cnn_forward.1} parent=55 // pred_region
        _
      $region60: #{street_aid_cnn_forward.1} parent=55 // pred_fallthru
        _
    $region56: #{street_aid_cnn_forward.1} parent=5 // pred_fallthru
      _
    %p4613 = scmp.le.s32.totalorder 2, %s15
    // Predicated region
    $region61: #{street_aid_cnn_forward.1} parent=5 // pred_check
      %p4614 = pneg %p4613
    $region62: #{street_aid_cnn_forward.1} parent=5 // pred_check_branch
      %4616 = sbr.rel (%p4614) target = $region64
    $region63: #{street_aid_cnn_forward.1} parent=5 // pred_region
      %s4617 = ssub.s32 %s15, 2
      // Predicated region
      $region65: #{street_aid_cnn_forward.1} parent=63 // pred_check
        %p4618 = pneg %p238
      $region66: #{street_aid_cnn_forward.1} parent=63 // pred_check_branch
        %4620 = sbr.rel (%p4618) target = $region68
      $region67: #{street_aid_cnn_forward.1} parent=63 // pred_region
        %p4621 = scmp.lt.s32.totalorder %s21, 1
        %s4622 = scalar_select %p4621, %s21, 1
        %s4623 = scalar_lea.vmem %s9, %s4622
      $region68: #{street_aid_cnn_forward.1} parent=63 // pred_fallthru
        _
    $region64: #{street_aid_cnn_forward.1} parent=5 // pred_fallthru
      _
  $region6: #{street_aid_cnn_forward.1} parent=0 // loop_footer
    %s19 = sadd.s32 1, %s15
  $region7: #{street_aid_cnn_forward.1} parent=0 // loop_footer_branch
    %14 = sbr.rel target = $region3
  $region8: #{street_aid_cnn_forward.1} parent=0 // loop_exit
    _

</llo_original>
